<compile_context>
chip_gen: v7x
topology: tpu7x:2x2x1
jax: 0.10.0
libtpu: 0.0.40
codegen_flags: <defaults>
</compile_context>

<pallas_src>
import functools

import jax
import jax.numpy as jnp
from jax.experimental import pallas as pl
from jax.experimental.pallas import tpu as pltpu

_LANE = 128


def _gru_chunk_kernel(gates_ref, lens_ref, w_h_ref, b_hn_ref,
                      out_ref, hid_ref, h_scratch, *, tc, hp):
    """Runs `tc` GRU timesteps per (batch-block, time-chunk) grid point."""
    c = pl.program_id(1)                      # time-chunk index (inner, "arbitrary")

    @pl.when(c == 0)
    def _():                                  # new batch block -> reset carried state
        h_scratch[...] = jnp.zeros_like(h_scratch)

    bb = h_scratch.shape[0]
    lens = lens_ref[...]                                      # (BB, 1) int32 lengths
    w_h = w_h_ref[...]                                        # (Hp, 3Hp) bf16, resident
    b_hn = jnp.broadcast_to(b_hn_ref[...], (bb, hp))          # hoisted broadcast
    h = h_scratch[...]                                        # (BB, Hp) f32 carried state

    # Statically unrolled time loop over this chunk (straight-line code for LLO).
    for i in range(tc):
        gx = gates_ref[:, i, :].astype(jnp.float32)           # (BB, 3Hp) x-proj + folded biases
        hh = jnp.dot(h.astype(jnp.bfloat16), w_h,             # one bf16 MXU push, f32 acc
                     preferred_element_type=jnp.float32)

        # Lane-aligned gate slices (hp is a multiple of 128).
        r = jax.nn.sigmoid(gx[:, :hp] + hh[:, :hp])
        z = jax.nn.sigmoid(gx[:, hp:2 * hp] + hh[:, hp:2 * hp])
        n = jnp.tanh(gx[:, 2 * hp:] + r * (hh[:, 2 * hp:] + b_hn))
        h_new = (1.0 - z) * n + z * h

        # pack/unpack semantics: integer compare + select (no float mask math).
        valid = (c * tc + i) < lens                           # (BB, 1) bool

        # Lane-dense, 128-aligned store into the batch-first (BB, TC*Hp) block.
        out_ref[:, i * hp:(i + 1) * hp] = jnp.where(valid, h_new, 0.0).astype(out_ref.dtype)

        # Padded steps do not advance the state (hidden freezes at t >= len[b]).
        h = jnp.where(valid, h_new, h)

    h_scratch[...] = h

    @pl.when(c == pl.num_programs(1) - 1)
    def _():
        hid_ref[...] = h.astype(hid_ref.dtype)                # single final-hidden write


def kb_encoder_forward(params, input_seq, seq_length, *, time_chunk=16):
    """input_seq: [B, T] int32 token ids; seq_length: [B] int32.

    Returns (output [B, T, H], hidden [1, B, H]) in original batch order.
    """
    B, T = input_seq.shape
    H = params["w_hr"].shape[0]
    Hp = ((H + _LANE - 1) // _LANE) * _LANE                    # lane-padded hidden size

    def pad_cols(w):                                           # (..., H) -> (..., Hp)
        return jnp.pad(w, ((0, 0), (0, Hp - H)))

    def pad_square(w):                                         # (H, H) -> (Hp, Hp)
        return jnp.pad(w, ((0, Hp - H), (0, Hp - H)))

    # Fused / lane-padded parameters.  W_h is carried in bf16 (f32 accumulation
    # happens on the MXU); the zero padding stays exactly zero in bf16.
    w_i = jnp.concatenate([pad_cols(params["w_ir"]),
                           pad_cols(params["w_iz"]),
                           pad_cols(params["w_in"])], axis=1)                  # (E, 3Hp)
    w_h = jnp.concatenate([pad_square(params["w_hr"]),
                           pad_square(params["w_hz"]),
                           pad_square(params["w_hn"])], axis=1).astype(jnp.bfloat16)  # (Hp, 3Hp)
    b_x = jnp.concatenate([pad_cols(params["b_r"]),            # b_ir+b_hr folded
                           pad_cols(params["b_z"]),            # b_iz+b_hz folded
                           pad_cols(params["b_in"])], axis=1)                  # (1, 3Hp)
    b_hn = pad_cols(params["b_hn"])                                            # (1, Hp)

    # Time chunking; TC kept a multiple of 8 so every block stays (8,128)-tileable.
    TC = max(1, min(time_chunk, T))
    TC = ((TC + 7) // 8) * 8
    n_chunks = pl.cdiv(T, TC)
    T_pad = n_chunks * TC

    # v7x: shard batch blocks across the two TensorCores via a leading "parallel"
    # grid axis (each block must keep >= 8 sublanes).  Single block otherwise.
    n_bblocks = 2 if (B % 16 == 0) else 1
    BB = B // n_bblocks

    # Glue: embedding gather + hoisted input projection as ONE big bf16 GEMM
    # (f32 accumulation), produced batch-major ('btg') so no transpose is
    # materialized before the kernel.  Folded biases are added in f32, then the
    # slab is stored in bf16 (the dominant HBM stream).
    emb = jnp.take(params["embedding"], input_seq, axis=0).astype(jnp.bfloat16)   # [B,T,E]
    gates_x = (jnp.einsum("bte,eg->btg", emb, w_i.astype(jnp.bfloat16),
                          preferred_element_type=jnp.float32)
               + b_x[None]).astype(jnp.bfloat16)                                   # [B,T,3Hp]
    if T_pad != T:
        gates_x = jnp.pad(gates_x, ((0, 0), (0, T_pad - T), (0, 0)))

    lens = seq_length.astype(jnp.int32).reshape(B, 1)

    # VMEM budget: streamed slabs double-buffered, resident weights single-buffered.
    # Floor 32 MiB (overrides v5e's 16 MiB scoped default), cap 64 MiB (v7x physical).
    est = (2 * BB * TC * 3 * Hp * 2        # gate slab (bf16, Buffered(2))
           + 2 * BB * TC * Hp * 4          # output slab (f32, Buffered(2))
           + Hp * 3 * Hp * 2               # fused W_h (bf16, Buffered(1))
           + 2 * BB * 4                    # lengths
           + 3 * BB * Hp * 4)              # h scratch + final-hidden output
    vmem_limit = int(min(64 * 1024 * 1024, max(32 * 1024 * 1024, 2 * est + (8 << 20))))

    kernel = functools.partial(_gru_chunk_kernel, tc=TC, hp=Hp)

    out_flat, hid = pl.pallas_call(
        kernel,
        out_shape=[
            jax.ShapeDtypeStruct((B, T_pad * Hp), jnp.float32),      # lane-dense output slab
            jax.ShapeDtypeStruct((B, Hp), jnp.float32),              # final hidden
        ],
        grid_spec=pltpu.PrefetchScalarGridSpec(
            num_scalar_prefetch=0,
            grid=(n_bblocks, n_chunks),
            in_specs=[
                pl.BlockSpec((BB, TC, 3 * Hp), lambda b, c: (b, c, 0)),   # streamed gate chunk
                pl.BlockSpec((BB, 1), lambda b, c: (b, 0)),               # seq lengths (tiny)
                pl.BlockSpec((Hp, 3 * Hp), lambda b, c: (0, 0),           # fused W_h, resident,
                             pipeline_mode=pl.Buffered(1)),               #   single-buffered
                pl.BlockSpec((1, Hp), lambda b, c: (0, 0),                # b_hn, resident,
                             pipeline_mode=pl.Buffered(1)),               #   single-buffered
            ],
            out_specs=[
                pl.BlockSpec((BB, TC * Hp), lambda b, c: (b, c)),         # batch-first out chunk
                pl.BlockSpec((BB, Hp), lambda b, c: (b, 0)),              # final hidden
            ],
            scratch_shapes=[pltpu.VMEM((BB, Hp), jnp.float32)],           # carried hidden state
        ),
        compiler_params=pltpu.CompilerParams(
            dimension_semantics=("parallel", "arbitrary"),
            vmem_limit_bytes=vmem_limit),
    )(gates_x, lens, w_h, b_hn)

    # Free row-major reshape (no transpose), then trim the time & lane padding.
    output = out_flat.reshape(B, T_pad, Hp)[:, :T, :H]         # [B, T, H] batch_first
    hidden = hid[:, :H][None]                                  # [1, B, H]
    return output, hidden


def _reference_forward(params, input_seq, seq_length, *, bf16_operands=False):
    """Pure-JAX reference (lax.scan) with the same masking semantics.

    bf16_operands=True mirrors the kernel's operand precision (bf16 gate slab,
    bf16 W_h / h with f32 accumulation) for a tight numerical comparison;
    False is the exact f32 math of the PyTorch module.
    """
    f32 = jnp.float32
    rnd = (lambda a: a.astype(jnp.bfloat16).astype(f32)) if bf16_operands else (lambda a: a)

    emb = jnp.take(params["embedding"], input_seq, axis=0).astype(f32)      # [B,T,E]
    B, T, _ = emb.shape
    H = params["w_hr"].shape[0]

    w_i = jnp.concatenate([params["w_ir"], params["w_iz"], params["w_in"]], axis=1)
    w_h = rnd(jnp.concatenate([params["w_hr"], params["w_hz"], params["w_hn"]], axis=1))
    b_x = jnp.concatenate([params["b_r"], params["b_z"], params["b_in"]], axis=1)
    b_hn = params["b_hn"]

    gates = rnd(jnp.einsum("bte,eg->btg", rnd(emb), rnd(w_i),
                           preferred_element_type=f32) + b_x[None])         # [B,T,3H]
    gates_t = jnp.transpose(gates, (1, 0, 2))                               # [T,B,3H]
    mask_t = jnp.arange(T)[:, None] < seq_length[None, :]                   # [T,B] bool

    def step(h, inp):
        gx, m = inp
        hh = jnp.dot(rnd(h), w_h, preferred_element_type=f32)
        r = jax.nn.sigmoid(gx[:, :H] + hh[:, :H])
        z = jax.nn.sigmoid(gx[:, H:2 * H] + hh[:, H:2 * H])
        n = jnp.tanh(gx[:, 2 * H:] + r * (hh[:, 2 * H:] + b_hn))
        h_new = (1.0 - z) * n + z * h
        m = m[:, None]
        return jnp.where(m, h_new, h), jnp.where(m, h_new, 0.0)

    h0 = jnp.zeros((B, H), f32)
    h_fin, outs = jax.lax.scan(step, h0, (gates_t, mask_t))
    return jnp.transpose(outs, (1, 0, 2)), h_fin[None]


def init_params(key, vocab_size, emb_size, hidden_size):
    ks = jax.random.split(key, 11)
    s = 1.0 / jnp.sqrt(jnp.float32(hidden_size))
    u = lambda k, shape: jax.random.uniform(k, shape, jnp.float32, -s, s)
    return {
        "embedding": jax.random.normal(ks[0], (vocab_size, emb_size), jnp.float32),
        "w_ir": u(ks[1], (emb_size, hidden_size)),
        "w_iz": u(ks[2], (emb_size, hidden_size)),
        "w_in": u(ks[3], (emb_size, hidden_size)),
        "w_hr": u(ks[4], (hidden_size, hidden_size)),
        "w_hz": u(ks[5], (hidden_size, hidden_size)),
        "w_hn": u(ks[6], (hidden_size, hidden_size)),
        "b_r": u(ks[7], (1, hidden_size)),    # b_ir + b_hr folded together
        "b_z": u(ks[8], (1, hidden_size)),    # b_iz + b_hz folded together
        "b_in": u(ks[9], (1, hidden_size)),
        "b_hn": u(ks[10], (1, hidden_size)),
    }


if __name__ == "__main__":
    vocab_size, emb_size, hidden_size = 50, 32, 32
    B, T = 8, 8

    key = jax.random.PRNGKey(0)
    pkey, ikey = jax.random.split(key)
    params = init_params(pkey, vocab_size, emb_size, hidden_size)

    input_seq = jax.random.randint(ikey, (B, T), 0, vocab_size, dtype=jnp.int32)
    seq_length = jnp.array([8, 5, 3, 8, 1, 6, 7, 2], dtype=jnp.int32)

    fwd = jax.jit(kb_encoder_forward)
    output, hidden = fwd(params, input_seq, seq_length)
    jax.block_until_ready((output, hidden))

    # pad_packed_sequence trims the time axis to max(seq_length).
    t_max = int(jnp.max(seq_length))
    output = output[:, :t_max]

    ref_out_bf, ref_hid_bf = _reference_forward(params, input_seq, seq_length, bf16_operands=True)
    ref_out_f32, ref_hid_f32 = _reference_forward(params, input_seq, seq_length)
    ref_out_bf, ref_out_f32 = ref_out_bf[:, :t_max], ref_out_f32[:, :t_max]

    assert output.shape == (B, t_max, hidden_size)
    assert hidden.shape == (1, B, hidden_size)

    # Exact pack/pad semantics: outputs past seq_length are identically zero, and
    # the returned hidden state equals the last valid output of every row.
    pad_mask = jnp.arange(t_max)[None, :] >= seq_length[:, None]
    assert bool(jnp.all(jnp.where(pad_mask[:, :, None], output == 0.0, True)))
    last_valid = output[jnp.arange(B), jnp.clip(seq_length - 1, 0, t_max - 1)]
    assert jnp.allclose(hidden[0], last_valid)

    # Numerics: tight vs. the precision-matched (bf16-operand) reference; looser
    # vs. the pure-f32 PyTorch math (bound on the bf16 operand quantization).
    assert jnp.allclose(output, ref_out_bf, atol=5e-3, rtol=5e-3)
    assert jnp.allclose(hidden, ref_hid_bf, atol=5e-3, rtol=5e-3)
    assert jnp.allclose(output, ref_out_f32, atol=5e-2, rtol=5e-2)
    assert jnp.allclose(hidden, ref_hid_f32, atol=5e-2, rtol=5e-2)

    print("KERNEL_OK")
</pallas_src>

<mosaic_0001>
module attributes {stable_mosaic.version = 11 : i64} {
  func.func @_gru_chunk_kernel(%arg0: i32, %arg1: i32, %arg2: memref<8x8x384xbf16, #tpu.memory_space<vmem>>, %arg3: memref<8x1xi32, #tpu.memory_space<vmem>>, %arg4: memref<128x384xbf16, #tpu.memory_space<vmem>>, %arg5: memref<1x128xf32, #tpu.memory_space<vmem>>, %arg6: memref<8x1024xf32, #tpu.memory_space<vmem>>, %arg7: memref<8x128xf32, #tpu.memory_space<vmem>>, %arg8: memref<8x128xf32, #tpu.memory_space<vmem>>) attributes {dimension_semantics = [#tpu.dimension_semantics<parallel>, #tpu.dimension_semantics<arbitrary>], iteration_bounds = array<i64: 1, 1>, scalar_prefetch = 0 : i64, scratch_operands = 1 : i64, tpu.core_type = #tpu.core_type<tc>, window_params = [{transform_indices = @transform_0, window_bounds = array<i64: 8, 8, 384>}, {transform_indices = @transform_1, window_bounds = array<i64: 8, 1>}, {pipeline_mode = #tpu.pipeline_mode<synchronous>, transform_indices = @transform_2, window_bounds = array<i64: 128, 384>}, {pipeline_mode = #tpu.pipeline_mode<synchronous>, transform_indices = @transform_3, window_bounds = array<i64: 1, 128>}, {transform_indices = @transform_4, window_bounds = array<i64: 8, 1024>}, {transform_indices = @transform_5, window_bounds = array<i64: 8, 128>}]} {
    %c0_i32 = arith.constant 0 : i32
    %0 = arith.cmpi eq, %arg1, %c0_i32 : i32
    %1 = arith.extui %0 : i1 to i32
    %c0_i32_0 = arith.constant 0 : i32
    %2 = arith.cmpi ne, %1, %c0_i32_0 : i32
    scf.if %2 {
      %cst_85 = arith.constant 0.000000e+00 : f32
      %365 = vector.broadcast %cst_85 : f32 to vector<8x128xf32>
      %c0_86 = arith.constant 0 : index
      %c0_87 = arith.constant 0 : index
      %366 = vector.load %arg8[%c0_86, %c0_87] : memref<8x128xf32, #tpu.memory_space<vmem>>, vector<8x128xf32>
      tpu.vector_store %arg8[%c0_86, %c0_87], %365 {strides = array<i32>} : memref<8x128xf32, #tpu.memory_space<vmem>>, vector<8x128xf32>,
    } else {
    }
    %c0 = arith.constant 0 : index
    %c0_1 = arith.constant 0 : index
    %3 = vector.load %arg3[%c0, %c0_1] : memref<8x1xi32, #tpu.memory_space<vmem>>, vector<8x1xi32>
    %c0_2 = arith.constant 0 : index
    %c0_3 = arith.constant 0 : index
    %4 = vector.load %arg4[%c0_2, %c0_3] : memref<128x384xbf16, #tpu.memory_space<vmem>>, vector<128x384xbf16>
    %c0_4 = arith.constant 0 : index
    %c0_5 = arith.constant 0 : index
    %5 = vector.load %arg5[%c0_4, %c0_5] : memref<1x128xf32, #tpu.memory_space<vmem>>, vector<1x128xf32>
    %6 = vector.shape_cast %5 : vector<1x128xf32> to vector<1x128xf32>
    %7 = vector.broadcast %6 : vector<1x128xf32> to vector<8x128xf32>
    %c0_6 = arith.constant 0 : index
    %c0_7 = arith.constant 0 : index
    %8 = vector.load %arg8[%c0_6, %c0_7] : memref<8x128xf32, #tpu.memory_space<vmem>>, vector<8x128xf32>
    %c0_8 = arith.constant 0 : index
    %c0_9 = arith.constant 0 : index
    %c0_10 = arith.constant 0 : index
    %9 = vector.load %arg2[%c0_8, %c0_9, %c0_10] : memref<8x8x384xbf16, #tpu.memory_space<vmem>>, vector<8x1x384xbf16>
    %10 = vector.shape_cast %9 : vector<8x1x384xbf16> to vector<8x384xbf16>
    %11 = arith.extf %10 : vector<8x384xbf16> to vector<8x384xf32>
    %12 = arith.truncf %8 : vector<8x128xf32> to vector<8x128xbf16>
    %cst = arith.constant dense<0.000000e+00> : vector<8x384xf32>
    %13 = tpu.matmul %12, %4, %cst {dimension_numbers = #tpu.dot_dimension_numbers<[1], [0], [0], [1], [0, 0, 1, 1], [], []>} : vector<8x128xbf16>, vector<128x384xbf16>, vector<8x384xf32> -> vector<8x384xf32>
    %14 = vector.extract_strided_slice %11 {offsets = [0, 0], sizes = [8, 128], strides = [1, 1]} : vector<8x384xf32> to vector<8x128xf32>
    %15 = vector.extract_strided_slice %13 {offsets = [0, 0], sizes = [8, 128], strides = [1, 1]} : vector<8x384xf32> to vector<8x128xf32>
    %16 = arith.addf %14, %15 : vector<8x128xf32>
    %17 = arith.negf %16 : vector<8x128xf32>
    %18 = math.exp %17 : vector<8x128xf32>
    %cst_11 = arith.constant 1.000000e+00 : f32
    %19 = vector.broadcast %cst_11 : f32 to vector<8x128xf32>
    %20 = arith.addf %19, %18 : vector<8x128xf32>
    %21 = arith.divf %19, %20 : vector<8x128xf32>
    %22 = vector.extract_strided_slice %11 {offsets = [0, 128], sizes = [8, 128], strides = [1, 1]} : vector<8x384xf32> to vector<8x128xf32>
    %23 = vector.extract_strided_slice %13 {offsets = [0, 128], sizes = [8, 128], strides = [1, 1]} : vector<8x384xf32> to vector<8x128xf32>
    %24 = arith.addf %22, %23 : vector<8x128xf32>
    %25 = arith.negf %24 : vector<8x128xf32>
    %26 = math.exp %25 : vector<8x128xf32>
    %cst_12 = arith.constant 1.000000e+00 : f32
    %27 = vector.broadcast %cst_12 : f32 to vector<8x128xf32>
    %28 = arith.addf %27, %26 : vector<8x128xf32>
    %29 = arith.divf %27, %28 : vector<8x128xf32>
    %30 = vector.extract_strided_slice %11 {offsets = [0, 256], sizes = [8, 128], strides = [1, 1]} : vector<8x384xf32> to vector<8x128xf32>
    %31 = vector.extract_strided_slice %13 {offsets = [0, 256], sizes = [8, 128], strides = [1, 1]} : vector<8x384xf32> to vector<8x128xf32>
    %32 = arith.addf %31, %7 : vector<8x128xf32>
    %33 = arith.mulf %21, %32 : vector<8x128xf32>
    %34 = arith.addf %30, %33 : vector<8x128xf32>
    %35 = math.tanh %34 : vector<8x128xf32>
    %cst_13 = arith.constant 1.000000e+00 : f32
    %36 = vector.broadcast %cst_13 : f32 to vector<8x128xf32>
    %37 = arith.subf %36, %29 : vector<8x128xf32>
    %38 = arith.mulf %37, %35 : vector<8x128xf32>
    %39 = arith.mulf %29, %8 : vector<8x128xf32>
    %40 = arith.addf %38, %39 : vector<8x128xf32>
    %c8_i32 = arith.constant 8 : i32
    %41 = arith.muli %arg1, %c8_i32 : i32
    %c0_i32_14 = arith.constant 0 : i32
    %42 = arith.addi %41, %c0_i32_14 : i32
    %43 = vector.broadcast %42 : i32 to vector<8x1xi32>
    %44 = arith.cmpi slt, %43, %3 : vector<8x1xi32>
    %cst_15 = arith.constant 0.000000e+00 : f32
    %45 = vector.shape_cast %44 : vector<8x1xi1> to vector<8x1xi1>
    %46 = vector.broadcast %45 : vector<8x1xi1> to vector<8x128xi1>
    %47 = vector.broadcast %cst_15 : f32 to vector<8x128xf32>
    %48 = arith.select %46, %40, %47 : vector<8x128xi1>, vector<8x128xf32>
    %c0_16 = arith.constant 0 : index
    %c0_17 = arith.constant 0 : index
    %49 = vector.load %arg6[%c0_16, %c0_17] : memref<8x1024xf32, #tpu.memory_space<vmem>>, vector<8x128xf32>
    tpu.vector_store %arg6[%c0_16, %c0_17], %48 {strides = array<i32>} : memref<8x1024xf32, #tpu.memory_space<vmem>>, vector<8x128xf32>,
    %50 = vector.shape_cast %44 : vector<8x1xi1> to vector<8x1xi1>
    %51 = vector.broadcast %50 : vector<8x1xi1> to vector<8x128xi1>
    %52 = arith.select %51, %40, %8 : vector<8x128xi1>, vector<8x128xf32>
    %c0_18 = arith.constant 0 : index
    %c1 = arith.constant 1 : index
    %c0_19 = arith.constant 0 : index
    %53 = vector.load %arg2[%c0_18, %c1, %c0_19] : memref<8x8x384xbf16, #tpu.memory_space<vmem>>, vector<8x1x384xbf16>
    %54 = vector.shape_cast %53 : vector<8x1x384xbf16> to vector<8x384xbf16>
    %55 = arith.extf %54 : vector<8x384xbf16> to vector<8x384xf32>
    %56 = arith.truncf %52 : vector<8x128xf32> to vector<8x128xbf16>
    %cst_20 = arith.constant dense<0.000000e+00> : vector<8x384xf32>
    %57 = tpu.matmul %56, %4, %cst_20 {dimension_numbers = #tpu.dot_dimension_numbers<[1], [0], [0], [1], [0, 0, 1, 1], [], []>} : vector<8x128xbf16>, vector<128x384xbf16>, vector<8x384xf32> -> vector<8x384xf32>
    %58 = vector.extract_strided_slice %55 {offsets = [0, 0], sizes = [8, 128], strides = [1, 1]} : vector<8x384xf32> to vector<8x128xf32>
    %59 = vector.extract_strided_slice %57 {offsets = [0, 0], sizes = [8, 128], strides = [1, 1]} : vector<8x384xf32> to vector<8x128xf32>
    %60 = arith.addf %58, %59 : vector<8x128xf32>
    %61 = arith.negf %60 : vector<8x128xf32>
    %62 = math.exp %61 : vector<8x128xf32>
    %cst_21 = arith.constant 1.000000e+00 : f32
    %63 = vector.broadcast %cst_21 : f32 to vector<8x128xf32>
    %64 = arith.addf %63, %62 : vector<8x128xf32>
    %65 = arith.divf %63, %64 : vector<8x128xf32>
    %66 = vector.extract_strided_slice %55 {offsets = [0, 128], sizes = [8, 128], strides = [1, 1]} : vector<8x384xf32> to vector<8x128xf32>
    %67 = vector.extract_strided_slice %57 {offsets = [0, 128], sizes = [8, 128], strides = [1, 1]} : vector<8x384xf32> to vector<8x128xf32>
    %68 = arith.addf %66, %67 : vector<8x128xf32>
    %69 = arith.negf %68 : vector<8x128xf32>
    %70 = math.exp %69 : vector<8x128xf32>
    %cst_22 = arith.constant 1.000000e+00 : f32
    %71 = vector.broadcast %cst_22 : f32 to vector<8x128xf32>
    %72 = arith.addf %71, %70 : vector<8x128xf32>
    %73 = arith.divf %71, %72 : vector<8x128xf32>
    %74 = vector.extract_strided_slice %55 {offsets = [0, 256], sizes = [8, 128], strides = [1, 1]} : vector<8x384xf32> to vector<8x128xf32>
    %75 = vector.extract_strided_slice %57 {offsets = [0, 256], sizes = [8, 128], strides = [1, 1]} : vector<8x384xf32> to vector<8x128xf32>
    %76 = arith.addf %75, %7 : vector<8x128xf32>
    %77 = arith.mulf %65, %76 : vector<8x128xf32>
    %78 = arith.addf %74, %77 : vector<8x128xf32>
    %79 = math.tanh %78 : vector<8x128xf32>
    %cst_23 = arith.constant 1.000000e+00 : f32
    %80 = vector.broadcast %cst_23 : f32 to vector<8x128xf32>
    %81 = arith.subf %80, %73 : vector<8x128xf32>
    %82 = arith.mulf %81, %79 : vector<8x128xf32>
    %83 = arith.mulf %73, %52 : vector<8x128xf32>
    %84 = arith.addf %82, %83 : vector<8x128xf32>
    %c8_i32_24 = arith.constant 8 : i32
    %85 = arith.muli %arg1, %c8_i32_24 : i32
    %c1_i32 = arith.constant 1 : i32
    %86 = arith.addi %85, %c1_i32 : i32
    %87 = vector.broadcast %86 : i32 to vector<8x1xi32>
    %88 = arith.cmpi slt, %87, %3 : vector<8x1xi32>
    %cst_25 = arith.constant 0.000000e+00 : f32
    %89 = vector.shape_cast %88 : vector<8x1xi1> to vector<8x1xi1>
    %90 = vector.broadcast %89 : vector<8x1xi1> to vector<8x128xi1>
    %91 = vector.broadcast %cst_25 : f32 to vector<8x128xf32>
    %92 = arith.select %90, %84, %91 : vector<8x128xi1>, vector<8x128xf32>
    %c0_26 = arith.constant 0 : index
    %c128 = arith.constant 128 : index
    %93 = vector.load %arg6[%c0_26, %c128] : memref<8x1024xf32, #tpu.memory_space<vmem>>, vector<8x128xf32>
    tpu.vector_store %arg6[%c0_26, %c128], %92 {strides = array<i32>} : memref<8x1024xf32, #tpu.memory_space<vmem>>, vector<8x128xf32>,
    %94 = vector.shape_cast %88 : vector<8x1xi1> to vector<8x1xi1>
    %95 = vector.broadcast %94 : vector<8x1xi1> to vector<8x128xi1>
    %96 = arith.select %95, %84, %52 : vector<8x128xi1>, vector<8x128xf32>
    %c0_27 = arith.constant 0 : index
    %c2 = arith.constant 2 : index
    %c0_28 = arith.constant 0 : index
    %97 = vector.load %arg2[%c0_27, %c2, %c0_28] : memref<8x8x384xbf16, #tpu.memory_space<vmem>>, vector<8x1x384xbf16>
    %98 = vector.shape_cast %97 : vector<8x1x384xbf16> to vector<8x384xbf16>
    %99 = arith.extf %98 : vector<8x384xbf16> to vector<8x384xf32>
    %100 = arith.truncf %96 : vector<8x128xf32> to vector<8x128xbf16>
    %cst_29 = arith.constant dense<0.000000e+00> : vector<8x384xf32>
    %101 = tpu.matmul %100, %4, %cst_29 {dimension_numbers = #tpu.dot_dimension_numbers<[1], [0], [0], [1], [0, 0, 1, 1], [], []>} : vector<8x128xbf16>, vector<128x384xbf16>, vector<8x384xf32> -> vector<8x384xf32>
    %102 = vector.extract_strided_slice %99 {offsets = [0, 0], sizes = [8, 128], strides = [1, 1]} : vector<8x384xf32> to vector<8x128xf32>
    %103 = vector.extract_strided_slice %101 {offsets = [0, 0], sizes = [8, 128], strides = [1, 1]} : vector<8x384xf32> to vector<8x128xf32>
    %104 = arith.addf %102, %103 : vector<8x128xf32>
    %105 = arith.negf %104 : vector<8x128xf32>
    %106 = math.exp %105 : vector<8x128xf32>
    %cst_30 = arith.constant 1.000000e+00 : f32
    %107 = vector.broadcast %cst_30 : f32 to vector<8x128xf32>
    %108 = arith.addf %107, %106 : vector<8x128xf32>
    %109 = arith.divf %107, %108 : vector<8x128xf32>
    %110 = vector.extract_strided_slice %99 {offsets = [0, 128], sizes = [8, 128], strides = [1, 1]} : vector<8x384xf32> to vector<8x128xf32>
    %111 = vector.extract_strided_slice %101 {offsets = [0, 128], sizes = [8, 128], strides = [1, 1]} : vector<8x384xf32> to vector<8x128xf32>
    %112 = arith.addf %110, %111 : vector<8x128xf32>
    %113 = arith.negf %112 : vector<8x128xf32>
    %114 = math.exp %113 : vector<8x128xf32>
    %cst_31 = arith.constant 1.000000e+00 : f32
    %115 = vector.broadcast %cst_31 : f32 to vector<8x128xf32>
    %116 = arith.addf %115, %114 : vector<8x128xf32>
    %117 = arith.divf %115, %116 : vector<8x128xf32>
    %118 = vector.extract_strided_slice %99 {offsets = [0, 256], sizes = [8, 128], strides = [1, 1]} : vector<8x384xf32> to vector<8x128xf32>
    %119 = vector.extract_strided_slice %101 {offsets = [0, 256], sizes = [8, 128], strides = [1, 1]} : vector<8x384xf32> to vector<8x128xf32>
    %120 = arith.addf %119, %7 : vector<8x128xf32>
    %121 = arith.mulf %109, %120 : vector<8x128xf32>
    %122 = arith.addf %118, %121 : vector<8x128xf32>
    %123 = math.tanh %122 : vector<8x128xf32>
    %cst_32 = arith.constant 1.000000e+00 : f32
    %124 = vector.broadcast %cst_32 : f32 to vector<8x128xf32>
    %125 = arith.subf %124, %117 : vector<8x128xf32>
    %126 = arith.mulf %125, %123 : vector<8x128xf32>
    %127 = arith.mulf %117, %96 : vector<8x128xf32>
    %128 = arith.addf %126, %127 : vector<8x128xf32>
    %c8_i32_33 = arith.constant 8 : i32
    %129 = arith.muli %arg1, %c8_i32_33 : i32
    %c2_i32 = arith.constant 2 : i32
    %130 = arith.addi %129, %c2_i32 : i32
    %131 = vector.broadcast %130 : i32 to vector<8x1xi32>
    %132 = arith.cmpi slt, %131, %3 : vector<8x1xi32>
    %cst_34 = arith.constant 0.000000e+00 : f32
    %133 = vector.shape_cast %132 : vector<8x1xi1> to vector<8x1xi1>
    %134 = vector.broadcast %133 : vector<8x1xi1> to vector<8x128xi1>
    %135 = vector.broadcast %cst_34 : f32 to vector<8x128xf32>
    %136 = arith.select %134, %128, %135 : vector<8x128xi1>, vector<8x128xf32>
    %c0_35 = arith.constant 0 : index
    %c256 = arith.constant 256 : index
    %137 = vector.load %arg6[%c0_35, %c256] : memref<8x1024xf32, #tpu.memory_space<vmem>>, vector<8x128xf32>
    tpu.vector_store %arg6[%c0_35, %c256], %136 {strides = array<i32>} : memref<8x1024xf32, #tpu.memory_space<vmem>>, vector<8x128xf32>,
    %138 = vector.shape_cast %132 : vector<8x1xi1> to vector<8x1xi1>
    %139 = vector.broadcast %138 : vector<8x1xi1> to vector<8x128xi1>
    %140 = arith.select %139, %128, %96 : vector<8x128xi1>, vector<8x128xf32>
    %c0_36 = arith.constant 0 : index
    %c3 = arith.constant 3 : index
    %c0_37 = arith.constant 0 : index
    %141 = vector.load %arg2[%c0_36, %c3, %c0_37] : memref<8x8x384xbf16, #tpu.memory_space<vmem>>, vector<8x1x384xbf16>
    %142 = vector.shape_cast %141 : vector<8x1x384xbf16> to vector<8x384xbf16>
    %143 = arith.extf %142 : vector<8x384xbf16> to vector<8x384xf32>
    %144 = arith.truncf %140 : vector<8x128xf32> to vector<8x128xbf16>
    %cst_38 = arith.constant dense<0.000000e+00> : vector<8x384xf32>
    %145 = tpu.matmul %144, %4, %cst_38 {dimension_numbers = #tpu.dot_dimension_numbers<[1], [0], [0], [1], [0, 0, 1, 1], [], []>} : vector<8x128xbf16>, vector<128x384xbf16>, vector<8x384xf32> -> vector<8x384xf32>
    %146 = vector.extract_strided_slice %143 {offsets = [0, 0], sizes = [8, 128], strides = [1, 1]} : vector<8x384xf32> to vector<8x128xf32>
    %147 = vector.extract_strided_slice %145 {offsets = [0, 0], sizes = [8, 128], strides = [1, 1]} : vector<8x384xf32> to vector<8x128xf32>
    %148 = arith.addf %146, %147 : vector<8x128xf32>
    %149 = arith.negf %148 : vector<8x128xf32>
    %150 = math.exp %149 : vector<8x128xf32>
    %cst_39 = arith.constant 1.000000e+00 : f32
    %151 = vector.broadcast %cst_39 : f32 to vector<8x128xf32>
    %152 = arith.addf %151, %150 : vector<8x128xf32>
    %153 = arith.divf %151, %152 : vector<8x128xf32>
    %154 = vector.extract_strided_slice %143 {offsets = [0, 128], sizes = [8, 128], strides = [1, 1]} : vector<8x384xf32> to vector<8x128xf32>
    %155 = vector.extract_strided_slice %145 {offsets = [0, 128], sizes = [8, 128], strides = [1, 1]} : vector<8x384xf32> to vector<8x128xf32>
    %156 = arith.addf %154, %155 : vector<8x128xf32>
    %157 = arith.negf %156 : vector<8x128xf32>
    %158 = math.exp %157 : vector<8x128xf32>
    %cst_40 = arith.constant 1.000000e+00 : f32
    %159 = vector.broadcast %cst_40 : f32 to vector<8x128xf32>
    %160 = arith.addf %159, %158 : vector<8x128xf32>
    %161 = arith.divf %159, %160 : vector<8x128xf32>
    %162 = vector.extract_strided_slice %143 {offsets = [0, 256], sizes = [8, 128], strides = [1, 1]} : vector<8x384xf32> to vector<8x128xf32>
    %163 = vector.extract_strided_slice %145 {offsets = [0, 256], sizes = [8, 128], strides = [1, 1]} : vector<8x384xf32> to vector<8x128xf32>
    %164 = arith.addf %163, %7 : vector<8x128xf32>
    %165 = arith.mulf %153, %164 : vector<8x128xf32>
    %166 = arith.addf %162, %165 : vector<8x128xf32>
    %167 = math.tanh %166 : vector<8x128xf32>
    %cst_41 = arith.constant 1.000000e+00 : f32
    %168 = vector.broadcast %cst_41 : f32 to vector<8x128xf32>
    %169 = arith.subf %168, %161 : vector<8x128xf32>
    %170 = arith.mulf %169, %167 : vector<8x128xf32>
    %171 = arith.mulf %161, %140 : vector<8x128xf32>
    %172 = arith.addf %170, %171 : vector<8x128xf32>
    %c8_i32_42 = arith.constant 8 : i32
    %173 = arith.muli %arg1, %c8_i32_42 : i32
    %c3_i32 = arith.constant 3 : i32
    %174 = arith.addi %173, %c3_i32 : i32
    %175 = vector.broadcast %174 : i32 to vector<8x1xi32>
    %176 = arith.cmpi slt, %175, %3 : vector<8x1xi32>
    %cst_43 = arith.constant 0.000000e+00 : f32
    %177 = vector.shape_cast %176 : vector<8x1xi1> to vector<8x1xi1>
    %178 = vector.broadcast %177 : vector<8x1xi1> to vector<8x128xi1>
    %179 = vector.broadcast %cst_43 : f32 to vector<8x128xf32>
    %180 = arith.select %178, %172, %179 : vector<8x128xi1>, vector<8x128xf32>
    %c0_44 = arith.constant 0 : index
    %c384 = arith.constant 384 : index
    %181 = vector.load %arg6[%c0_44, %c384] : memref<8x1024xf32, #tpu.memory_space<vmem>>, vector<8x128xf32>
    tpu.vector_store %arg6[%c0_44, %c384], %180 {strides = array<i32>} : memref<8x1024xf32, #tpu.memory_space<vmem>>, vector<8x128xf32>,
    %182 = vector.shape_cast %176 : vector<8x1xi1> to vector<8x1xi1>
    %183 = vector.broadcast %182 : vector<8x1xi1> to vector<8x128xi1>
    %184 = arith.select %183, %172, %140 : vector<8x128xi1>, vector<8x128xf32>
    %c0_45 = arith.constant 0 : index
    %c4 = arith.constant 4 : index
    %c0_46 = arith.constant 0 : index
    %185 = vector.load %arg2[%c0_45, %c4, %c0_46] : memref<8x8x384xbf16, #tpu.memory_space<vmem>>, vector<8x1x384xbf16>
    %186 = vector.shape_cast %185 : vector<8x1x384xbf16> to vector<8x384xbf16>
    %187 = arith.extf %186 : vector<8x384xbf16> to vector<8x384xf32>
    %188 = arith.truncf %184 : vector<8x128xf32> to vector<8x128xbf16>
    %cst_47 = arith.constant dense<0.000000e+00> : vector<8x384xf32>
    %189 = tpu.matmul %188, %4, %cst_47 {dimension_numbers = #tpu.dot_dimension_numbers<[1], [0], [0], [1], [0, 0, 1, 1], [], []>} : vector<8x128xbf16>, vector<128x384xbf16>, vector<8x384xf32> -> vector<8x384xf32>
    %190 = vector.extract_strided_slice %187 {offsets = [0, 0], sizes = [8, 128], strides = [1, 1]} : vector<8x384xf32> to vector<8x128xf32>
    %191 = vector.extract_strided_slice %189 {offsets = [0, 0], sizes = [8, 128], strides = [1, 1]} : vector<8x384xf32> to vector<8x128xf32>
    %192 = arith.addf %190, %191 : vector<8x128xf32>
    %193 = arith.negf %192 : vector<8x128xf32>
    %194 = math.exp %193 : vector<8x128xf32>
    %cst_48 = arith.constant 1.000000e+00 : f32
    %195 = vector.broadcast %cst_48 : f32 to vector<8x128xf32>
    %196 = arith.addf %195, %194 : vector<8x128xf32>
    %197 = arith.divf %195, %196 : vector<8x128xf32>
    %198 = vector.extract_strided_slice %187 {offsets = [0, 128], sizes = [8, 128], strides = [1, 1]} : vector<8x384xf32> to vector<8x128xf32>
    %199 = vector.extract_strided_slice %189 {offsets = [0, 128], sizes = [8, 128], strides = [1, 1]} : vector<8x384xf32> to vector<8x128xf32>
    %200 = arith.addf %198, %199 : vector<8x128xf32>
    %201 = arith.negf %200 : vector<8x128xf32>
    %202 = math.exp %201 : vector<8x128xf32>
    %cst_49 = arith.constant 1.000000e+00 : f32
    %203 = vector.broadcast %cst_49 : f32 to vector<8x128xf32>
    %204 = arith.addf %203, %202 : vector<8x128xf32>
    %205 = arith.divf %203, %204 : vector<8x128xf32>
    %206 = vector.extract_strided_slice %187 {offsets = [0, 256], sizes = [8, 128], strides = [1, 1]} : vector<8x384xf32> to vector<8x128xf32>
    %207 = vector.extract_strided_slice %189 {offsets = [0, 256], sizes = [8, 128], strides = [1, 1]} : vector<8x384xf32> to vector<8x128xf32>
    %208 = arith.addf %207, %7 : vector<8x128xf32>
    %209 = arith.mulf %197, %208 : vector<8x128xf32>
    %210 = arith.addf %206, %209 : vector<8x128xf32>
    %211 = math.tanh %210 : vector<8x128xf32>
    %cst_50 = arith.constant 1.000000e+00 : f32
    %212 = vector.broadcast %cst_50 : f32 to vector<8x128xf32>
    %213 = arith.subf %212, %205 : vector<8x128xf32>
    %214 = arith.mulf %213, %211 : vector<8x128xf32>
    %215 = arith.mulf %205, %184 : vector<8x128xf32>
    %216 = arith.addf %214, %215 : vector<8x128xf32>
    %c8_i32_51 = arith.constant 8 : i32
    %217 = arith.muli %arg1, %c8_i32_51 : i32
    %c4_i32 = arith.constant 4 : i32
    %218 = arith.addi %217, %c4_i32 : i32
    %219 = vector.broadcast %218 : i32 to vector<8x1xi32>
    %220 = arith.cmpi slt, %219, %3 : vector<8x1xi32>
    %cst_52 = arith.constant 0.000000e+00 : f32
    %221 = vector.shape_cast %220 : vector<8x1xi1> to vector<8x1xi1>
    %222 = vector.broadcast %221 : vector<8x1xi1> to vector<8x128xi1>
    %223 = vector.broadcast %cst_52 : f32 to vector<8x128xf32>
    %224 = arith.select %222, %216, %223 : vector<8x128xi1>, vector<8x128xf32>
    %c0_53 = arith.constant 0 : index
    %c512 = arith.constant 512 : index
    %225 = vector.load %arg6[%c0_53, %c512] : memref<8x1024xf32, #tpu.memory_space<vmem>>, vector<8x128xf32>
    tpu.vector_store %arg6[%c0_53, %c512], %224 {strides = array<i32>} : memref<8x1024xf32, #tpu.memory_space<vmem>>, vector<8x128xf32>,
    %226 = vector.shape_cast %220 : vector<8x1xi1> to vector<8x1xi1>
    %227 = vector.broadcast %226 : vector<8x1xi1> to vector<8x128xi1>
    %228 = arith.select %227, %216, %184 : vector<8x128xi1>, vector<8x128xf32>
    %c0_54 = arith.constant 0 : index
    %c5 = arith.constant 5 : index
    %c0_55 = arith.constant 0 : index
    %229 = vector.load %arg2[%c0_54, %c5, %c0_55] : memref<8x8x384xbf16, #tpu.memory_space<vmem>>, vector<8x1x384xbf16>
    %230 = vector.shape_cast %229 : vector<8x1x384xbf16> to vector<8x384xbf16>
    %231 = arith.extf %230 : vector<8x384xbf16> to vector<8x384xf32>
    %232 = arith.truncf %228 : vector<8x128xf32> to vector<8x128xbf16>
    %cst_56 = arith.constant dense<0.000000e+00> : vector<8x384xf32>
    %233 = tpu.matmul %232, %4, %cst_56 {dimension_numbers = #tpu.dot_dimension_numbers<[1], [0], [0], [1], [0, 0, 1, 1], [], []>} : vector<8x128xbf16>, vector<128x384xbf16>, vector<8x384xf32> -> vector<8x384xf32>
    %234 = vector.extract_strided_slice %231 {offsets = [0, 0], sizes = [8, 128], strides = [1, 1]} : vector<8x384xf32> to vector<8x128xf32>
    %235 = vector.extract_strided_slice %233 {offsets = [0, 0], sizes = [8, 128], strides = [1, 1]} : vector<8x384xf32> to vector<8x128xf32>
    %236 = arith.addf %234, %235 : vector<8x128xf32>
    %237 = arith.negf %236 : vector<8x128xf32>
    %238 = math.exp %237 : vector<8x128xf32>
    %cst_57 = arith.constant 1.000000e+00 : f32
    %239 = vector.broadcast %cst_57 : f32 to vector<8x128xf32>
    %240 = arith.addf %239, %238 : vector<8x128xf32>
    %241 = arith.divf %239, %240 : vector<8x128xf32>
    %242 = vector.extract_strided_slice %231 {offsets = [0, 128], sizes = [8, 128], strides = [1, 1]} : vector<8x384xf32> to vector<8x128xf32>
    %243 = vector.extract_strided_slice %233 {offsets = [0, 128], sizes = [8, 128], strides = [1, 1]} : vector<8x384xf32> to vector<8x128xf32>
    %244 = arith.addf %242, %243 : vector<8x128xf32>
    %245 = arith.negf %244 : vector<8x128xf32>
    %246 = math.exp %245 : vector<8x128xf32>
    %cst_58 = arith.constant 1.000000e+00 : f32
    %247 = vector.broadcast %cst_58 : f32 to vector<8x128xf32>
    %248 = arith.addf %247, %246 : vector<8x128xf32>
    %249 = arith.divf %247, %248 : vector<8x128xf32>
    %250 = vector.extract_strided_slice %231 {offsets = [0, 256], sizes = [8, 128], strides = [1, 1]} : vector<8x384xf32> to vector<8x128xf32>
    %251 = vector.extract_strided_slice %233 {offsets = [0, 256], sizes = [8, 128], strides = [1, 1]} : vector<8x384xf32> to vector<8x128xf32>
    %252 = arith.addf %251, %7 : vector<8x128xf32>
    %253 = arith.mulf %241, %252 : vector<8x128xf32>
    %254 = arith.addf %250, %253 : vector<8x128xf32>
    %255 = math.tanh %254 : vector<8x128xf32>
    %cst_59 = arith.constant 1.000000e+00 : f32
    %256 = vector.broadcast %cst_59 : f32 to vector<8x128xf32>
    %257 = arith.subf %256, %249 : vector<8x128xf32>
    %258 = arith.mulf %257, %255 : vector<8x128xf32>
    %259 = arith.mulf %249, %228 : vector<8x128xf32>
    %260 = arith.addf %258, %259 : vector<8x128xf32>
    %c8_i32_60 = arith.constant 8 : i32
    %261 = arith.muli %arg1, %c8_i32_60 : i32
    %c5_i32 = arith.constant 5 : i32
    %262 = arith.addi %261, %c5_i32 : i32
    %263 = vector.broadcast %262 : i32 to vector<8x1xi32>
    %264 = arith.cmpi slt, %263, %3 : vector<8x1xi32>
    %cst_61 = arith.constant 0.000000e+00 : f32
    %265 = vector.shape_cast %264 : vector<8x1xi1> to vector<8x1xi1>
    %266 = vector.broadcast %265 : vector<8x1xi1> to vector<8x128xi1>
    %267 = vector.broadcast %cst_61 : f32 to vector<8x128xf32>
    %268 = arith.select %266, %260, %267 : vector<8x128xi1>, vector<8x128xf32>
    %c0_62 = arith.constant 0 : index
    %c640 = arith.constant 640 : index
    %269 = vector.load %arg6[%c0_62, %c640] : memref<8x1024xf32, #tpu.memory_space<vmem>>, vector<8x128xf32>
    tpu.vector_store %arg6[%c0_62, %c640], %268 {strides = array<i32>} : memref<8x1024xf32, #tpu.memory_space<vmem>>, vector<8x128xf32>,
    %270 = vector.shape_cast %264 : vector<8x1xi1> to vector<8x1xi1>
    %271 = vector.broadcast %270 : vector<8x1xi1> to vector<8x128xi1>
    %272 = arith.select %271, %260, %228 : vector<8x128xi1>, vector<8x128xf32>
    %c0_63 = arith.constant 0 : index
    %c6 = arith.constant 6 : index
    %c0_64 = arith.constant 0 : index
    %273 = vector.load %arg2[%c0_63, %c6, %c0_64] : memref<8x8x384xbf16, #tpu.memory_space<vmem>>, vector<8x1x384xbf16>
    %274 = vector.shape_cast %273 : vector<8x1x384xbf16> to vector<8x384xbf16>
    %275 = arith.extf %274 : vector<8x384xbf16> to vector<8x384xf32>
    %276 = arith.truncf %272 : vector<8x128xf32> to vector<8x128xbf16>
    %cst_65 = arith.constant dense<0.000000e+00> : vector<8x384xf32>
    %277 = tpu.matmul %276, %4, %cst_65 {dimension_numbers = #tpu.dot_dimension_numbers<[1], [0], [0], [1], [0, 0, 1, 1], [], []>} : vector<8x128xbf16>, vector<128x384xbf16>, vector<8x384xf32> -> vector<8x384xf32>
    %278 = vector.extract_strided_slice %275 {offsets = [0, 0], sizes = [8, 128], strides = [1, 1]} : vector<8x384xf32> to vector<8x128xf32>
    %279 = vector.extract_strided_slice %277 {offsets = [0, 0], sizes = [8, 128], strides = [1, 1]} : vector<8x384xf32> to vector<8x128xf32>
    %280 = arith.addf %278, %279 : vector<8x128xf32>
    %281 = arith.negf %280 : vector<8x128xf32>
    %282 = math.exp %281 : vector<8x128xf32>
    %cst_66 = arith.constant 1.000000e+00 : f32
    %283 = vector.broadcast %cst_66 : f32 to vector<8x128xf32>
    %284 = arith.addf %283, %282 : vector<8x128xf32>
    %285 = arith.divf %283, %284 : vector<8x128xf32>
    %286 = vector.extract_strided_slice %275 {offsets = [0, 128], sizes = [8, 128], strides = [1, 1]} : vector<8x384xf32> to vector<8x128xf32>
    %287 = vector.extract_strided_slice %277 {offsets = [0, 128], sizes = [8, 128], strides = [1, 1]} : vector<8x384xf32> to vector<8x128xf32>
    %288 = arith.addf %286, %287 : vector<8x128xf32>
    %289 = arith.negf %288 : vector<8x128xf32>
    %290 = math.exp %289 : vector<8x128xf32>
    %cst_67 = arith.constant 1.000000e+00 : f32
    %291 = vector.broadcast %cst_67 : f32 to vector<8x128xf32>
    %292 = arith.addf %291, %290 : vector<8x128xf32>
    %293 = arith.divf %291, %292 : vector<8x128xf32>
    %294 = vector.extract_strided_slice %275 {offsets = [0, 256], sizes = [8, 128], strides = [1, 1]} : vector<8x384xf32> to vector<8x128xf32>
    %295 = vector.extract_strided_slice %277 {offsets = [0, 256], sizes = [8, 128], strides = [1, 1]} : vector<8x384xf32> to vector<8x128xf32>
    %296 = arith.addf %295, %7 : vector<8x128xf32>
    %297 = arith.mulf %285, %296 : vector<8x128xf32>
    %298 = arith.addf %294, %297 : vector<8x128xf32>
    %299 = math.tanh %298 : vector<8x128xf32>
    %cst_68 = arith.constant 1.000000e+00 : f32
    %300 = vector.broadcast %cst_68 : f32 to vector<8x128xf32>
    %301 = arith.subf %300, %293 : vector<8x128xf32>
    %302 = arith.mulf %301, %299 : vector<8x128xf32>
    %303 = arith.mulf %293, %272 : vector<8x128xf32>
    %304 = arith.addf %302, %303 : vector<8x128xf32>
    %c8_i32_69 = arith.constant 8 : i32
    %305 = arith.muli %arg1, %c8_i32_69 : i32
    %c6_i32 = arith.constant 6 : i32
    %306 = arith.addi %305, %c6_i32 : i32
    %307 = vector.broadcast %306 : i32 to vector<8x1xi32>
    %308 = arith.cmpi slt, %307, %3 : vector<8x1xi32>
    %cst_70 = arith.constant 0.000000e+00 : f32
    %309 = vector.shape_cast %308 : vector<8x1xi1> to vector<8x1xi1>
    %310 = vector.broadcast %309 : vector<8x1xi1> to vector<8x128xi1>
    %311 = vector.broadcast %cst_70 : f32 to vector<8x128xf32>
    %312 = arith.select %310, %304, %311 : vector<8x128xi1>, vector<8x128xf32>
    %c0_71 = arith.constant 0 : index
    %c768 = arith.constant 768 : index
    %313 = vector.load %arg6[%c0_71, %c768] : memref<8x1024xf32, #tpu.memory_space<vmem>>, vector<8x128xf32>
    tpu.vector_store %arg6[%c0_71, %c768], %312 {strides = array<i32>} : memref<8x1024xf32, #tpu.memory_space<vmem>>, vector<8x128xf32>,
    %314 = vector.shape_cast %308 : vector<8x1xi1> to vector<8x1xi1>
    %315 = vector.broadcast %314 : vector<8x1xi1> to vector<8x128xi1>
    %316 = arith.select %315, %304, %272 : vector<8x128xi1>, vector<8x128xf32>
    %c0_72 = arith.constant 0 : index
    %c7 = arith.constant 7 : index
    %c0_73 = arith.constant 0 : index
    %317 = vector.load %arg2[%c0_72, %c7, %c0_73] : memref<8x8x384xbf16, #tpu.memory_space<vmem>>, vector<8x1x384xbf16>
    %318 = vector.shape_cast %317 : vector<8x1x384xbf16> to vector<8x384xbf16>
    %319 = arith.extf %318 : vector<8x384xbf16> to vector<8x384xf32>
    %320 = arith.truncf %316 : vector<8x128xf32> to vector<8x128xbf16>
    %cst_74 = arith.constant dense<0.000000e+00> : vector<8x384xf32>
    %321 = tpu.matmul %320, %4, %cst_74 {dimension_numbers = #tpu.dot_dimension_numbers<[1], [0], [0], [1], [0, 0, 1, 1], [], []>} : vector<8x128xbf16>, vector<128x384xbf16>, vector<8x384xf32> -> vector<8x384xf32>
    %322 = vector.extract_strided_slice %319 {offsets = [0, 0], sizes = [8, 128], strides = [1, 1]} : vector<8x384xf32> to vector<8x128xf32>
    %323 = vector.extract_strided_slice %321 {offsets = [0, 0], sizes = [8, 128], strides = [1, 1]} : vector<8x384xf32> to vector<8x128xf32>
    %324 = arith.addf %322, %323 : vector<8x128xf32>
    %325 = arith.negf %324 : vector<8x128xf32>
    %326 = math.exp %325 : vector<8x128xf32>
    %cst_75 = arith.constant 1.000000e+00 : f32
    %327 = vector.broadcast %cst_75 : f32 to vector<8x128xf32>
    %328 = arith.addf %327, %326 : vector<8x128xf32>
    %329 = arith.divf %327, %328 : vector<8x128xf32>
    %330 = vector.extract_strided_slice %319 {offsets = [0, 128], sizes = [8, 128], strides = [1, 1]} : vector<8x384xf32> to vector<8x128xf32>
    %331 = vector.extract_strided_slice %321 {offsets = [0, 128], sizes = [8, 128], strides = [1, 1]} : vector<8x384xf32> to vector<8x128xf32>
    %332 = arith.addf %330, %331 : vector<8x128xf32>
    %333 = arith.negf %332 : vector<8x128xf32>
    %334 = math.exp %333 : vector<8x128xf32>
    %cst_76 = arith.constant 1.000000e+00 : f32
    %335 = vector.broadcast %cst_76 : f32 to vector<8x128xf32>
    %336 = arith.addf %335, %334 : vector<8x128xf32>
    %337 = arith.divf %335, %336 : vector<8x128xf32>
    %338 = vector.extract_strided_slice %319 {offsets = [0, 256], sizes = [8, 128], strides = [1, 1]} : vector<8x384xf32> to vector<8x128xf32>
    %339 = vector.extract_strided_slice %321 {offsets = [0, 256], sizes = [8, 128], strides = [1, 1]} : vector<8x384xf32> to vector<8x128xf32>
    %340 = arith.addf %339, %7 : vector<8x128xf32>
    %341 = arith.mulf %329, %340 : vector<8x128xf32>
    %342 = arith.addf %338, %341 : vector<8x128xf32>
    %343 = math.tanh %342 : vector<8x128xf32>
    %cst_77 = arith.constant 1.000000e+00 : f32
    %344 = vector.broadcast %cst_77 : f32 to vector<8x128xf32>
    %345 = arith.subf %344, %337 : vector<8x128xf32>
    %346 = arith.mulf %345, %343 : vector<8x128xf32>
    %347 = arith.mulf %337, %316 : vector<8x128xf32>
    %348 = arith.addf %346, %347 : vector<8x128xf32>
    %c8_i32_78 = arith.constant 8 : i32
    %349 = arith.muli %arg1, %c8_i32_78 : i32
    %c7_i32 = arith.constant 7 : i32
    %350 = arith.addi %349, %c7_i32 : i32
    %351 = vector.broadcast %350 : i32 to vector<8x1xi32>
    %352 = arith.cmpi slt, %351, %3 : vector<8x1xi32>
    %cst_79 = arith.constant 0.000000e+00 : f32
    %353 = vector.shape_cast %352 : vector<8x1xi1> to vector<8x1xi1>
    %354 = vector.broadcast %353 : vector<8x1xi1> to vector<8x128xi1>
    %355 = vector.broadcast %cst_79 : f32 to vector<8x128xf32>
    %356 = arith.select %354, %348, %355 : vector<8x128xi1>, vector<8x128xf32>
    %c0_80 = arith.constant 0 : index
    %c896 = arith.constant 896 : index
    %357 = vector.load %arg6[%c0_80, %c896] : memref<8x1024xf32, #tpu.memory_space<vmem>>, vector<8x128xf32>
    tpu.vector_store %arg6[%c0_80, %c896], %356 {strides = array<i32>} : memref<8x1024xf32, #tpu.memory_space<vmem>>, vector<8x128xf32>,
    %358 = vector.shape_cast %352 : vector<8x1xi1> to vector<8x1xi1>
    %359 = vector.broadcast %358 : vector<8x1xi1> to vector<8x128xi1>
    %360 = arith.select %359, %348, %316 : vector<8x128xi1>, vector<8x128xf32>
    %c0_81 = arith.constant 0 : index
    %c0_82 = arith.constant 0 : index
    %361 = vector.load %arg8[%c0_81, %c0_82] : memref<8x128xf32, #tpu.memory_space<vmem>>, vector<8x128xf32>
    tpu.vector_store %arg8[%c0_81, %c0_82], %360 {strides = array<i32>} : memref<8x128xf32, #tpu.memory_space<vmem>>, vector<8x128xf32>,
    %c0_i32_83 = arith.constant 0 : i32
    %362 = arith.cmpi eq, %arg1, %c0_i32_83 : i32
    %363 = arith.extui %362 : i1 to i32
    %c0_i32_84 = arith.constant 0 : i32
    %364 = arith.cmpi ne, %363, %c0_i32_84 : i32
    scf.if %364 {
      %c0_85 = arith.constant 0 : index
      %c0_86 = arith.constant 0 : index
      %365 = vector.load %arg7[%c0_85, %c0_86] : memref<8x128xf32, #tpu.memory_space<vmem>>, vector<8x128xf32>
      tpu.vector_store %arg7[%c0_85, %c0_86], %360 {strides = array<i32>} : memref<8x128xf32, #tpu.memory_space<vmem>>, vector<8x128xf32>,
    } else {
    }
    return
  }
  func.func @transform_0(%arg0: i32, %arg1: i32) -> (i32, i32, i32) {
    %c0_i32 = arith.constant 0 : i32
    %c0_i32_0 = arith.constant 0 : i32
    return %arg0, %arg1, %c0_i32 : i32, i32, i32
  }
  func.func @transform_1(%arg0: i32, %arg1: i32) -> (i32, i32) {
    %c0_i32 = arith.constant 0 : i32
    %c0_i32_0 = arith.constant 0 : i32
    return %arg0, %c0_i32 : i32, i32
  }
  func.func @transform_2(%arg0: i32, %arg1: i32) -> (i32, i32) {
    %c0_i32 = arith.constant 0 : i32
    %c0_i32_0 = arith.constant 0 : i32
    %c0_i32_1 = arith.constant 0 : i32
    return %c0_i32, %c0_i32_0 : i32, i32
  }
  func.func @transform_3(%arg0: i32, %arg1: i32) -> (i32, i32) {
    %c0_i32 = arith.constant 0 : i32
    %c0_i32_0 = arith.constant 0 : i32
    %c0_i32_1 = arith.constant 0 : i32
    return %c0_i32, %c0_i32_0 : i32, i32
  }
  func.func @transform_4(%arg0: i32, %arg1: i32) -> (i32, i32) {
    %c0_i32 = arith.constant 0 : i32
    return %arg0, %arg1 : i32, i32
  }
  func.func @transform_5(%arg0: i32, %arg1: i32) -> (i32, i32) {
    %c0_i32 = arith.constant 0 : i32
    %c0_i32_0 = arith.constant 0 : i32
    return %arg0, %c0_i32 : i32, i32
  }
}

</mosaic_0001>

<llo_original>
// kernel: kb_encoder_forward.1
$region0: #{kb_encoder_forward.1}
  #allocation0 [shape = 'u32[]', space=smem, size = 0x4, offset = 0x4, fixed_abs, tag = 'smem constant byte address 0x4 - core index']
  #allocation1 [shape = 'u32[144,128]{1,0:T(1,128)}', space=vmem, size = 0x12000, scoped, tag = 'internal scratch']
  #allocation2 [shape = 'f32[8,128]{1,0:T(8,128)}', space=vmem, size = 0x1000, scoped, tag = 'scratch operand']
  %s0 = inlined_call_operand.vmem [shape: bf16[8,8,384], index: 0, kind: input, shape index: {}]
  %s1 = inlined_call_operand.vmem [shape: s32[8,1], index: 1, kind: input, shape index: {}]
  %s2 = inlined_call_operand.vmem [shape: bf16[128,384], index: 2, kind: input, shape index: {}]
  %s3 = inlined_call_operand.vmem [shape: f32[1,128], index: 3, kind: input, shape index: {}]
  %s4 = inlined_call_operand.vmem [shape: f32[8,1024], index: 4, kind: output, shape index: {0}]
  %s5 = inlined_call_operand.vmem [shape: f32[8,128], index: 5, kind: output, shape index: {1}]
  %6 = xla_tuple %s4, %s5
  %s7 = sld [smem:[#allocation0]]
  $region42: #{kb_encoder_forward.1} parent=0
    _
  %s9 = ssub.s32 1, %s7
  %s10 = scalar_select 0, %s9, %s7
  // Predicated region
  $region2: #{kb_encoder_forward.1} parent=0 // pred_check
    _
  $region3: #{kb_encoder_forward.1} parent=0 // pred_check_branch
    %12 = sbr.rel (0) target = $region5
  $region4: #{kb_encoder_forward.1} parent=0 // pred_region
    _
  $region5: #{kb_encoder_forward.1} parent=0 // pred_fallthru
    _
  // Predicated region
  $region6: #{kb_encoder_forward.1} parent=0 // pred_check
    _
  $region7: #{kb_encoder_forward.1} parent=0 // pred_check_branch
    %14 = sbr.rel (0) target = $region9
  $region8: #{kb_encoder_forward.1} parent=0 // pred_region
    _
  $region9: #{kb_encoder_forward.1} parent=0 // pred_fallthru
    _
  // Predicated region
  $region10: #{kb_encoder_forward.1} parent=0 // pred_check
    _
  $region11: #{kb_encoder_forward.1} parent=0 // pred_check_branch
    %16 = sbr.rel (0) target = $region13
  $region12: #{kb_encoder_forward.1} parent=0 // pred_region
    _
  $region13: #{kb_encoder_forward.1} parent=0 // pred_fallthru
    _
  // Predicated region
  $region14: #{kb_encoder_forward.1} parent=0 // pred_check
    _
  $region15: #{kb_encoder_forward.1} parent=0 // pred_check_branch
    %18 = sbr.rel (0) target = $region17
  $region16: #{kb_encoder_forward.1} parent=0 // pred_region
    _
  $region17: #{kb_encoder_forward.1} parent=0 // pred_fallthru
    _
  %p20 = scmp.eq.s32.totalorder 0, 0
  // Predicated region
  $region18: #{kb_encoder_forward.1} parent=0 // pred_check
    %p21 = pneg %p20
  $region19: #{kb_encoder_forward.1} parent=0 // pred_check_branch
    %23 = sbr.rel (%p21) target = $region21
  $region20: #{kb_encoder_forward.1} parent=0 // pred_region
    %24 = vst [vmem:[#allocation2] sm:$0xff] 0.0
  $region21: #{kb_encoder_forward.1} parent=0 // pred_fallthru
    _
  %v25 = vld [vmem:[%s1] sm:$0xff]
  %v26 = vld [vmem:[%s2] sm:$0xff]
  %v27 = vld [vmem:[%s2 + $0x8] sm:$0xf]
  %v28 = vld [vmem:[%s2 + $0xc] sm:$0xff]
  %v29 = vld [vmem:[%s2 + $0x14] sm:$0xf]
  %v30 = vld [vmem:[%s2 + $0x18] sm:$0xff]
  %v31 = vld [vmem:[%s2 + $0x20] sm:$0xf]
  %v32 = vld [vmem:[%s2 + $0x24] sm:$0xff]
  %v33 = vld [vmem:[%s2 + $0x2c] sm:$0xf]
  %v34 = vld [vmem:[%s2 + $0x30] sm:$0xff]
  %v35 = vld [vmem:[%s2 + $0x38] sm:$0xf]
  %v36 = vld [vmem:[%s2 + $0x3c] sm:$0xff]
  %v37 = vld [vmem:[%s2 + $0x44] sm:$0xf]
  %v38 = vld [vmem:[%s2 + $0x48] sm:$0xff]
  %v39 = vld [vmem:[%s2 + $0x50] sm:$0xf]
  %v40 = vld [vmem:[%s2 + $0x54] sm:$0xff]
  %v41 = vld [vmem:[%s2 + $0x5c] sm:$0xf]
  %v42 = vld [vmem:[%s2 + $0x60] sm:$0xff]
  %v43 = vld [vmem:[%s2 + $0x68] sm:$0xf]
  %v44 = vld [vmem:[%s2 + $0x6c] sm:$0xff]
  %v45 = vld [vmem:[%s2 + $0x74] sm:$0xf]
  %v46 = vld [vmem:[%s2 + $0x78] sm:$0xff]
  %v47 = vld [vmem:[%s2 + $0x80] sm:$0xf]
  %v48 = vld [vmem:[%s2 + $0x84] sm:$0xff]
  %v49 = vld [vmem:[%s2 + $0x8c] sm:$0xf]
  %v50 = vld [vmem:[%s2 + $0x90] sm:$0xff]
  %v51 = vld [vmem:[%s2 + $0x98] sm:$0xf]
  %v52 = vld [vmem:[%s2 + $0x9c] sm:$0xff]
  %v53 = vld [vmem:[%s2 + $0xa4] sm:$0xf]
  %v54 = vld [vmem:[%s2 + $0xa8] sm:$0xff]
  %v55 = vld [vmem:[%s2 + $0xb0] sm:$0xf]
  %v56 = vld [vmem:[%s2 + $0xb4] sm:$0xff]
  %v57 = vld [vmem:[%s2 + $0xbc] sm:$0xf]
  %v58 = vld [vmem:[%s3] sm:$0x1]
  %v60 = vlaneseq
  %v61 = vshrl.u32 %v60, 7
  %v62 = vsub.s32 0, %v61
  %v63 = vrot.slane %v58, %v62
  %v65 = vld [vmem:[#allocation2] sm:$0xff]
  %v66 = vld [vmem:[%s0] sm:$0x11]
  %v67 = vld [vmem:[%s0 + $0x8] sm:$0x1]
  %v68 = vld [vmem:[%s0 + $0xc] sm:$0x11]
  %v69 = vld [vmem:[%s0 + $0x14] sm:$0x1]
  %v70 = vld [vmem:[%s0 + $0x18] sm:$0x11]
  %v71 = vld [vmem:[%s0 + $0x20] sm:$0x1]
  %v72 = vld [vmem:[%s0 + $0x24] sm:$0x11]
  %v73 = vld [vmem:[%s0 + $0x2c] sm:$0x1]
  %v74 = vld [vmem:[%s0 + $0x30] sm:$0x11]
  %v75 = vld [vmem:[%s0 + $0x38] sm:$0x1]
  %v76 = vld [vmem:[%s0 + $0x3c] sm:$0x11]
  %v77 = vld [vmem:[%s0 + $0x44] sm:$0x1]
  %v78 = vld [vmem:[%s0 + $0x48] sm:$0x11]
  %v79 = vld [vmem:[%s0 + $0x50] sm:$0x1]
  %v80 = vld [vmem:[%s0 + $0x54] sm:$0x11]
  %v81 = vld [vmem:[%s0 + $0x5c] sm:$0x1]
  %v82 = vunpack.c.l.bf16 %v66
  %v83 = vunpack.c.h.bf16 %v66
  %v84 = vunpack.c.l.bf16 %v67
  %v85 = vunpack.c.l.bf16 %v68
  %v86 = vunpack.c.h.bf16 %v68
  %v87 = vunpack.c.l.bf16 %v69
  %v88 = vunpack.c.l.bf16 %v70
  %v89 = vunpack.c.h.bf16 %v70
  %v90 = vunpack.c.l.bf16 %v71
  %v91 = vunpack.c.l.bf16 %v72
  %v92 = vunpack.c.h.bf16 %v72
  %v93 = vunpack.c.l.bf16 %v73
  %v94 = vunpack.c.l.bf16 %v74
  %v95 = vunpack.c.h.bf16 %v74
  %v96 = vunpack.c.l.bf16 %v75
  %v97 = vunpack.c.l.bf16 %v76
  %v98 = vunpack.c.h.bf16 %v76
  %v99 = vunpack.c.l.bf16 %v77
  %v100 = vunpack.c.l.bf16 %v78
  %v101 = vunpack.c.h.bf16 %v78
  %v102 = vunpack.c.l.bf16 %v79
  %v103 = vunpack.c.l.bf16 %v80
  %v104 = vunpack.c.h.bf16 %v80
  %v105 = vunpack.c.l.bf16 %v81
  %v106 = vpack.c.bf16 %v65, %v65
  %v139 = vunpack.c.l.b16 %v26
  %v140 = vunpack.c.h.b16 %v26
  %v141 = vunpack.c.l.b16 %v27
  %v142 = vunpack.c.l.b16 %v28
  %v143 = vunpack.c.h.b16 %v28
  %v144 = vunpack.c.l.b16 %v29
  %v145 = vunpack.c.l.b16 %v30
  %v146 = vunpack.c.h.b16 %v30
  %v147 = vunpack.c.l.b16 %v31
  %v148 = vunpack.c.l.b16 %v32
  %v149 = vunpack.c.h.b16 %v32
  %v150 = vunpack.c.l.b16 %v33
  %v151 = vunpack.c.l.b16 %v34
  %v152 = vunpack.c.h.b16 %v34
  %v153 = vunpack.c.l.b16 %v35
  %v154 = vunpack.c.l.b16 %v36
  %v155 = vunpack.c.h.b16 %v36
  %v156 = vunpack.c.l.b16 %v37
  %v157 = vunpack.c.l.b16 %v38
  %v158 = vunpack.c.h.b16 %v38
  %v159 = vunpack.c.l.b16 %v39
  %v160 = vunpack.c.l.b16 %v40
  %v161 = vunpack.c.h.b16 %v40
  %v162 = vunpack.c.l.b16 %v41
  %v163 = vunpack.c.l.b16 %v42
  %v164 = vunpack.c.h.b16 %v42
  %v165 = vunpack.c.l.b16 %v43
  %v166 = vunpack.c.l.b16 %v44
  %v167 = vunpack.c.h.b16 %v44
  %v168 = vunpack.c.l.b16 %v45
  %v169 = vunpack.c.l.b16 %v46
  %v170 = vunpack.c.h.b16 %v46
  %v171 = vunpack.c.l.b16 %v47
  %v172 = vunpack.c.l.b16 %v48
  %v173 = vunpack.c.h.b16 %v48
  %v174 = vunpack.c.l.b16 %v49
  %v175 = vunpack.c.l.b16 %v50
  %v176 = vunpack.c.h.b16 %v50
  %v177 = vunpack.c.l.b16 %v51
  %v178 = vunpack.c.l.b16 %v52
  %v179 = vunpack.c.h.b16 %v52
  %v180 = vunpack.c.l.b16 %v53
  %v181 = vunpack.c.l.b16 %v54
  %v182 = vunpack.c.h.b16 %v54
  %v183 = vunpack.c.l.b16 %v55
  %v184 = vunpack.c.l.b16 %v56
  %v185 = vunpack.c.h.b16 %v56
  %v186 = vunpack.c.l.b16 %v57
  %v187 = vpack.c.b16 %v142, %v139
  %v188 = vpack.c.b16 %v143, %v140
  %v189 = vpack.c.b16 %v144, %v141
  %v190 = vpack.c.b16 %v148, %v145
  %v191 = vpack.c.b16 %v149, %v146
  %v192 = vpack.c.b16 %v150, %v147
  %v193 = vpack.c.b16 %v154, %v151
  %v194 = vpack.c.b16 %v155, %v152
  %v195 = vpack.c.b16 %v156, %v153
  %v196 = vpack.c.b16 %v160, %v157
  %v197 = vpack.c.b16 %v161, %v158
  %v198 = vpack.c.b16 %v162, %v159
  %v199 = vpack.c.b16 %v166, %v163
  %v200 = vpack.c.b16 %v167, %v164
  %v201 = vpack.c.b16 %v168, %v165
  %v202 = vpack.c.b16 %v172, %v169
  %v203 = vpack.c.b16 %v173, %v170
  %v204 = vpack.c.b16 %v174, %v171
  %v205 = vpack.c.b16 %v178, %v175
  %v206 = vpack.c.b16 %v179, %v176
  %v207 = vpack.c.b16 %v180, %v177
  %v208 = vpack.c.b16 %v184, %v181
  %v209 = vpack.c.b16 %v185, %v182
  %v210 = vpack.c.b16 %v186, %v183
  %235 = vmatprep.subr.bf16.mxu0 %v188
  %236 = vmatpush1.bf16.msra.mxu0 %v187
  %237 = vmatprep.subr.bf16.mxu0 %v191
  %238 = vmatpush1.bf16.msra.mxu0 %v190
  %239 = vmatprep.subr.bf16.mxu0 %v194
  %240 = vmatpush1.bf16.msra.mxu0 %v193
  %241 = vmatprep.subr.bf16.mxu0 %v197
  %242 = vmatpush1.bf16.msra.mxu0 %v196
  %243 = vmatprep.subr.bf16.mxu0 %v200
  %244 = vmatpush1.bf16.msra.mxu0 %v199
  %245 = vmatprep.subr.bf16.mxu0 %v203
  %246 = vmatpush1.bf16.msra.mxu0 %v202
  %247 = vmatprep.subr.bf16.mxu0 %v206
  %248 = vmatpush1.bf16.msra.mxu0 %v205
  %249 = vmatprep.subr.bf16.mxu0 %v209
  %250 = vmatpush1.bf16.msra.mxu0 %v208
  %251 = vmatprep.subr.bf16.mxu0 0
  %252 = vmatpush1.bf16.msra.mxu0 0
  %253 = vmatprep.subr.bf16.mxu0 0
  %254 = vmatpush1.bf16.msra.mxu0 0
  %255 = vmatprep.subr.bf16.mxu0 0
  %256 = vmatpush1.bf16.msra.mxu0 0
  %257 = vmatprep.subr.bf16.mxu0 0
  %258 = vmatpush1.bf16.msra.mxu0 0
  %259 = vmatprep.subr.bf16.mxu0 0
  %260 = vmatpush1.bf16.msra.mxu0 0
  %261 = vmatprep.subr.bf16.mxu0 0
  %262 = vmatpush1.bf16.msra.mxu0 0
  %263 = vmatprep.subr.bf16.mxu0 0
  %264 = vmatpush1.bf16.msra.mxu0 0
  %265 = vmatprep.subr.bf16.mxu0 0
  %266 = vmatpush1.bf16.msra.mxu0 0
  %267 = vmatprep.mubr.bf16.mxu0 0
  %268 = vmatmul.mubr.bf16.gmra.mrb[0].mxu0 %v106
  %v269 = vpop.f32.mrb[0].mxu0
  %v270 = vadd.f32 0.0, %v269
  %v271 = vpop.f32.mrb[0].mxu0
  %v272 = vadd.f32 0.0, %v271
  %v273 = vpop.f32.mrb[0].mxu0
  %v274 = vpop.f32.mrb[0].mxu0
  %275 = vdwg.mxu0
  %276 = vmatprep.subr.bf16.mxu0 0
  %277 = vmatpush1.bf16.msra.mxu0 %v189
  %278 = vmatprep.subr.bf16.mxu0 0
  %279 = vmatpush1.bf16.msra.mxu0 %v192
  %280 = vmatprep.subr.bf16.mxu0 0
  %281 = vmatpush1.bf16.msra.mxu0 %v195
  %282 = vmatprep.subr.bf16.mxu0 0
  %283 = vmatpush1.bf16.msra.mxu0 %v198
  %284 = vmatprep.subr.bf16.mxu0 0
  %285 = vmatpush1.bf16.msra.mxu0 %v201
  %286 = vmatprep.subr.bf16.mxu0 0
  %287 = vmatpush1.bf16.msra.mxu0 %v204
  %288 = vmatprep.subr.bf16.mxu0 0
  %289 = vmatpush1.bf16.msra.mxu0 %v207
  %290 = vmatprep.subr.bf16.mxu0 0
  %291 = vmatpush1.bf16.msra.mxu0 %v210
  %292 = vmatprep.subr.bf16.mxu0 0
  %293 = vmatpush1.bf16.msra.mxu0 0
  %294 = vmatprep.subr.bf16.mxu0 0
  %295 = vmatpush1.bf16.msra.mxu0 0
  %296 = vmatprep.subr.bf16.mxu0 0
  %297 = vmatpush1.bf16.msra.mxu0 0
  %298 = vmatprep.subr.bf16.mxu0 0
  %299 = vmatpush1.bf16.msra.mxu0 0
  %300 = vmatprep.subr.bf16.mxu0 0
  %301 = vmatpush1.bf16.msra.mxu0 0
  %302 = vmatprep.subr.bf16.mxu0 0
  %303 = vmatpush1.bf16.msra.mxu0 0
  %304 = vmatprep.subr.bf16.mxu0 0
  %305 = vmatpush1.bf16.msra.mxu0 0
  %306 = vmatprep.subr.bf16.mxu0 0
  %307 = vmatpush1.bf16.msra.mxu0 0
  %308 = vmatprep.mubr.bf16.mxu0 0
  %309 = vmatmul.mubr.bf16.gmra.mrb[0].mxu0 %v106
  %v310 = vpop.f32.mrb[0].mxu0
  %v311 = vadd.f32 0.0, %v310
  %v312 = vpop.f32.mrb[0].mxu0
  %v313 = vpop.f32.mrb[0].mxu0
  %v314 = vpop.f32.mrb[0].mxu0
  %315 = vdwg.mxu0
  %v317 = vrot.slane %v270, 1
  %v318 = vrot.slane %v270, 2
  %v319 = vrot.slane %v270, 3
  %v320 = vrot.slane %v270, 4
  %v321 = vrot.slane %v270, 5
  %v322 = vrot.slane %v270, 6
  %v323 = vrot.slane %v270, 7
  %v332 = vadd.f32 %v82, %v270
  %v333 = vadd.f32 %v85, %v317
  %v334 = vadd.f32 %v88, %v318
  %v335 = vadd.f32 %v91, %v319
  %v336 = vadd.f32 %v94, %v320
  %v337 = vadd.f32 %v97, %v321
  %v338 = vadd.f32 %v100, %v322
  %v339 = vadd.f32 %v103, %v323
  %v340 = vxor.u32 %v332, 2147483648
  %v341 = vxor.u32 %v333, 2147483648
  %v342 = vxor.u32 %v334, 2147483648
  %v343 = vxor.u32 %v335, 2147483648
  %v344 = vxor.u32 %v336, 2147483648
  %v345 = vxor.u32 %v337, 2147483648
  %v346 = vxor.u32 %v338, 2147483648
  %v347 = vxor.u32 %v339, 2147483648
  %v348 = vmul.f32 %v340, 1.442695
  %v349 = vpow.pop %v348
  %v350 = vmul.f32 %v341, 1.442695
  %v351 = vpow.pop %v350
  %v352 = vmul.f32 %v342, 1.442695
  %v353 = vpow.pop %v352
  %v354 = vmul.f32 %v343, 1.442695
  %v355 = vpow.pop %v354
  %v356 = vmul.f32 %v344, 1.442695
  %v357 = vpow.pop %v356
  %v358 = vmul.f32 %v345, 1.442695
  %v359 = vpow.pop %v358
  %v360 = vmul.f32 %v346, 1.442695
  %v361 = vpow.pop %v360
  %v362 = vmul.f32 %v347, 1.442695
  %v363 = vpow.pop %v362
  %v364 = vadd.f32 %v349, 1.0
  %v365 = vadd.f32 %v351, 1.0
  %v366 = vadd.f32 %v353, 1.0
  %v367 = vadd.f32 %v355, 1.0
  %v368 = vadd.f32 %v357, 1.0
  %v369 = vadd.f32 %v359, 1.0
  %v370 = vadd.f32 %v361, 1.0
  %v371 = vadd.f32 %v363, 1.0
  %v372 = vrcp.pop %v364
  %v373 = vmul.f32 1.0, %v372
  %v374 = vrcp.pop %v365
  %v375 = vmul.f32 1.0, %v374
  %v376 = vrcp.pop %v366
  %v377 = vmul.f32 1.0, %v376
  %v378 = vrcp.pop %v367
  %v379 = vmul.f32 1.0, %v378
  %v380 = vrcp.pop %v368
  %v381 = vmul.f32 1.0, %v380
  %v382 = vrcp.pop %v369
  %v383 = vmul.f32 1.0, %v382
  %v384 = vrcp.pop %v370
  %v385 = vmul.f32 1.0, %v384
  %v386 = vrcp.pop %v371
  %v387 = vmul.f32 1.0, %v386
  %v389 = vrot.slane %v272, 1
  %v390 = vrot.slane %v272, 2
  %v391 = vrot.slane %v272, 3
  %v392 = vrot.slane %v272, 4
  %v393 = vrot.slane %v272, 5
  %v394 = vrot.slane %v272, 6
  %v395 = vrot.slane %v272, 7
  %v404 = vadd.f32 %v83, %v272
  %v405 = vadd.f32 %v86, %v389
  %v406 = vadd.f32 %v89, %v390
  %v407 = vadd.f32 %v92, %v391
  %v408 = vadd.f32 %v95, %v392
  %v409 = vadd.f32 %v98, %v393
  %v410 = vadd.f32 %v101, %v394
  %v411 = vadd.f32 %v104, %v395
  %v412 = vxor.u32 %v404, 2147483648
  %v413 = vxor.u32 %v405, 2147483648
  %v414 = vxor.u32 %v406, 2147483648
  %v415 = vxor.u32 %v407, 2147483648
  %v416 = vxor.u32 %v408, 2147483648
  %v417 = vxor.u32 %v409, 2147483648
  %v418 = vxor.u32 %v410, 2147483648
  %v419 = vxor.u32 %v411, 2147483648
  %v420 = vmul.f32 %v412, 1.442695
  %v421 = vpow.pop %v420
  %v422 = vmul.f32 %v413, 1.442695
  %v423 = vpow.pop %v422
  %v424 = vmul.f32 %v414, 1.442695
  %v425 = vpow.pop %v424
  %v426 = vmul.f32 %v415, 1.442695
  %v427 = vpow.pop %v426
  %v428 = vmul.f32 %v416, 1.442695
  %v429 = vpow.pop %v428
  %v430 = vmul.f32 %v417, 1.442695
  %v431 = vpow.pop %v430
  %v432 = vmul.f32 %v418, 1.442695
  %v433 = vpow.pop %v432
  %v434 = vmul.f32 %v419, 1.442695
  %v435 = vpow.pop %v434
  %v436 = vadd.f32 %v421, 1.0
  %v437 = vadd.f32 %v423, 1.0
  %v438 = vadd.f32 %v425, 1.0
  %v439 = vadd.f32 %v427, 1.0
  %v440 = vadd.f32 %v429, 1.0
  %v441 = vadd.f32 %v431, 1.0
  %v442 = vadd.f32 %v433, 1.0
  %v443 = vadd.f32 %v435, 1.0
  %v444 = vrcp.pop %v436
  %v445 = vmul.f32 1.0, %v444
  %v446 = vrcp.pop %v437
  %v447 = vmul.f32 1.0, %v446
  %v448 = vrcp.pop %v438
  %v449 = vmul.f32 1.0, %v448
  %v450 = vrcp.pop %v439
  %v451 = vmul.f32 1.0, %v450
  %v452 = vrcp.pop %v440
  %v453 = vmul.f32 1.0, %v452
  %v454 = vrcp.pop %v441
  %v455 = vmul.f32 1.0, %v454
  %v456 = vrcp.pop %v442
  %v457 = vmul.f32 1.0, %v456
  %v458 = vrcp.pop %v443
  %v459 = vmul.f32 1.0, %v458
  %v460 = vadd.f32 %v311, %v63
  %v462 = vrot.slane %v460, 1
  %v463 = vrot.slane %v460, 2
  %v464 = vrot.slane %v460, 3
  %v465 = vrot.slane %v460, 4
  %v466 = vrot.slane %v460, 5
  %v467 = vrot.slane %v460, 6
  %v468 = vrot.slane %v460, 7
  %v477 = vmul.f32 %v373, %v460
  %v478 = vmul.f32 %v375, %v462
  %v479 = vmul.f32 %v377, %v463
  %v480 = vmul.f32 %v379, %v464
  %v481 = vmul.f32 %v381, %v465
  %v482 = vmul.f32 %v383, %v466
  %v483 = vmul.f32 %v385, %v467
  %v484 = vmul.f32 %v387, %v468
  %v485 = vadd.f32 %v84, %v477
  %v486 = vadd.f32 %v87, %v478
  %v487 = vadd.f32 %v90, %v479
  %v488 = vadd.f32 %v93, %v480
  %v489 = vadd.f32 %v96, %v481
  %v490 = vadd.f32 %v99, %v482
  %v491 = vadd.f32 %v102, %v483
  %v492 = vadd.f32 %v105, %v484
  %v493 = vtanh.pop %v485
  %v494 = vtanh.pop %v486
  %v495 = vtanh.pop %v487
  %v496 = vtanh.pop %v488
  %v497 = vtanh.pop %v489
  %v498 = vtanh.pop %v490
  %v499 = vtanh.pop %v491
  %v500 = vtanh.pop %v492
  %v501 = vsub.f32 1.0, %v445
  %v502 = vsub.f32 1.0, %v447
  %v503 = vsub.f32 1.0, %v449
  %v504 = vsub.f32 1.0, %v451
  %v505 = vsub.f32 1.0, %v453
  %v506 = vsub.f32 1.0, %v455
  %v507 = vsub.f32 1.0, %v457
  %v508 = vsub.f32 1.0, %v459
  %v509 = vmul.f32 %v501, %v493
  %v510 = vmul.f32 %v502, %v494
  %v511 = vmul.f32 %v503, %v495
  %v512 = vmul.f32 %v504, %v496
  %v513 = vmul.f32 %v505, %v497
  %v514 = vmul.f32 %v506, %v498
  %v515 = vmul.f32 %v507, %v499
  %v516 = vmul.f32 %v508, %v500
  %v518 = vrot.slane %v65, 1
  %v519 = vrot.slane %v65, 2
  %v520 = vrot.slane %v65, 3
  %v521 = vrot.slane %v65, 4
  %v522 = vrot.slane %v65, 5
  %v523 = vrot.slane %v65, 6
  %v524 = vrot.slane %v65, 7
  %v533 = vmul.f32 %v445, %v65
  %v534 = vmul.f32 %v447, %v518
  %v535 = vmul.f32 %v449, %v519
  %v536 = vmul.f32 %v451, %v520
  %v537 = vmul.f32 %v453, %v521
  %v538 = vmul.f32 %v455, %v522
  %v539 = vmul.f32 %v457, %v523
  %v540 = vmul.f32 %v459, %v524
  %v541 = vadd.f32 %v509, %v533
  %v542 = vadd.f32 %v510, %v534
  %v543 = vadd.f32 %v511, %v535
  %v544 = vadd.f32 %v512, %v536
  %v545 = vadd.f32 %v513, %v537
  %v546 = vadd.f32 %v514, %v538
  %v547 = vadd.f32 %v515, %v539
  %v548 = vadd.f32 %v516, %v540
  %s549 = smul.u32 0, 8
  %v550 = vstv %s549
  %vm551 = vcmp.lt.s32.totalorder %v550, %v25
  %v552 = vsel %vm551, 1, 0
  %553 = vset.pattern.permute.xlu0 0
  %554 = vperm.xlu0 %553, %v552
  %v555 = vpop.permute.xlu0 %554
  %vm556 = vcmp.eq.s32.totalorder %v555, 1
  %v565 = vrot.slane %v542, 7
  %vm566 = vcmask 1041409
  %v567 = vsel %vm566, %v565, %v541
  %v568 = vrot.slane %v543, 6
  %vm569 = vcmask 1042434
  %v570 = vsel %vm569, %v568, %v567
  %v571 = vrot.slane %v544, 5
  %vm572 = vcmask 1043459
  %v573 = vsel %vm572, %v571, %v570
  %v574 = vrot.slane %v545, 4
  %vm575 = vcmask 1044484
  %v576 = vsel %vm575, %v574, %v573
  %v577 = vrot.slane %v546, 3
  %vm578 = vcmask 1045509
  %v579 = vsel %vm578, %v577, %v576
  %v580 = vrot.slane %v547, 2
  %vm581 = vcmask 1046534
  %v582 = vsel %vm581, %v580, %v579
  %v583 = vrot.slane %v548, 1
  %vm584 = vcmask 1047559
  %v585 = vsel %vm584, %v583, %v582
  %v587 = vsel %vm556, %v585, 0.0
  %588 = vst [vmem:[%s4] sm:$0xff] %v587
  %v589 = vsel %vm556, %v585, %v65
  %v590 = vld [vmem:[%s0] sm:$0x11]
  %v591 = vld [vmem:[%s0 + $0x8] sm:$0x1]
  %v592 = vld [vmem:[%s0 + $0xc] sm:$0x11]
  %v593 = vld [vmem:[%s0 + $0x14] sm:$0x1]
  %v594 = vld [vmem:[%s0 + $0x18] sm:$0x11]
  %v595 = vld [vmem:[%s0 + $0x20] sm:$0x1]
  %v596 = vld [vmem:[%s0 + $0x24] sm:$0x11]
  %v597 = vld [vmem:[%s0 + $0x2c] sm:$0x1]
  %v598 = vld [vmem:[%s0 + $0x30] sm:$0x11]
  %v599 = vld [vmem:[%s0 + $0x38] sm:$0x1]
  %v600 = vld [vmem:[%s0 + $0x3c] sm:$0x11]
  %v601 = vld [vmem:[%s0 + $0x44] sm:$0x1]
  %v602 = vld [vmem:[%s0 + $0x48] sm:$0x11]
  %v603 = vld [vmem:[%s0 + $0x50] sm:$0x1]
  %v604 = vld [vmem:[%s0 + $0x54] sm:$0x11]
  %v605 = vld [vmem:[%s0 + $0x5c] sm:$0x1]
  %v606 = vunpack.c.l.bf16 %v590
  %v607 = vunpack.c.h.bf16 %v590
  %v608 = vunpack.c.l.bf16 %v591
  %v609 = vunpack.c.l.bf16 %v592
  %v610 = vunpack.c.h.bf16 %v592
  %v611 = vunpack.c.l.bf16 %v593
  %v612 = vunpack.c.l.bf16 %v594
  %v613 = vunpack.c.h.bf16 %v594
  %v614 = vunpack.c.l.bf16 %v595
  %v615 = vunpack.c.l.bf16 %v596
  %v616 = vunpack.c.h.bf16 %v596
  %v617 = vunpack.c.l.bf16 %v597
  %v618 = vunpack.c.l.bf16 %v598
  %v619 = vunpack.c.h.bf16 %v598
  %v620 = vunpack.c.l.bf16 %v599
  %v621 = vunpack.c.l.bf16 %v600
  %v622 = vunpack.c.h.bf16 %v600
  %v623 = vunpack.c.l.bf16 %v601
  %v624 = vunpack.c.l.bf16 %v602
  %v625 = vunpack.c.h.bf16 %v602
  %v626 = vunpack.c.l.bf16 %v603
  %v627 = vunpack.c.l.bf16 %v604
  %v628 = vunpack.c.h.bf16 %v604
  %v629 = vunpack.c.l.bf16 %v605
  %v630 = vpack.c.bf16 %v589, %v589
  %631 = vmatprep.subr.bf16.mxu0 %v188
  %632 = vmatpush1.bf16.msra.mxu0 %v187
  %633 = vmatprep.subr.bf16.mxu0 %v191
  %634 = vmatpush1.bf16.msra.mxu0 %v190
  %635 = vmatprep.subr.bf16.mxu0 %v194
  %636 = vmatpush1.bf16.msra.mxu0 %v193
  %637 = vmatprep.subr.bf16.mxu0 %v197
  %638 = vmatpush1.bf16.msra.mxu0 %v196
  %639 = vmatprep.subr.bf16.mxu0 %v200
  %640 = vmatpush1.bf16.msra.mxu0 %v199
  %641 = vmatprep.subr.bf16.mxu0 %v203
  %642 = vmatpush1.bf16.msra.mxu0 %v202
  %643 = vmatprep.subr.bf16.mxu0 %v206
  %644 = vmatpush1.bf16.msra.mxu0 %v205
  %645 = vmatprep.subr.bf16.mxu0 %v209
  %646 = vmatpush1.bf16.msra.mxu0 %v208
  %647 = vmatprep.subr.bf16.mxu0 0
  %648 = vmatpush1.bf16.msra.mxu0 0
  %649 = vmatprep.subr.bf16.mxu0 0
  %650 = vmatpush1.bf16.msra.mxu0 0
  %651 = vmatprep.subr.bf16.mxu0 0
  %652 = vmatpush1.bf16.msra.mxu0 0
  %653 = vmatprep.subr.bf16.mxu0 0
  %654 = vmatpush1.bf16.msra.mxu0 0
  %655 = vmatprep.subr.bf16.mxu0 0
  %656 = vmatpush1.bf16.msra.mxu0 0
  %657 = vmatprep.subr.bf16.mxu0 0
  %658 = vmatpush1.bf16.msra.mxu0 0
  %659 = vmatprep.subr.bf16.mxu0 0
  %660 = vmatpush1.bf16.msra.mxu0 0
  %661 = vmatprep.subr.bf16.mxu0 0
  %662 = vmatpush1.bf16.msra.mxu0 0
  %663 = vmatprep.mubr.bf16.mxu0 0
  %664 = vmatmul.mubr.bf16.gmra.mrb[0].mxu0 %v630
  %v665 = vpop.f32.mrb[0].mxu0
  %v666 = vadd.f32 0.0, %v665
  %v667 = vpop.f32.mrb[0].mxu0
  %v668 = vadd.f32 0.0, %v667
  %v669 = vpop.f32.mrb[0].mxu0
  %v670 = vpop.f32.mrb[0].mxu0
  %671 = vdwg.mxu0
  %672 = vmatprep.subr.bf16.mxu0 0
  %673 = vmatpush1.bf16.msra.mxu0 %v189
  %674 = vmatprep.subr.bf16.mxu0 0
  %675 = vmatpush1.bf16.msra.mxu0 %v192
  %676 = vmatprep.subr.bf16.mxu0 0
  %677 = vmatpush1.bf16.msra.mxu0 %v195
  %678 = vmatprep.subr.bf16.mxu0 0
  %679 = vmatpush1.bf16.msra.mxu0 %v198
  %680 = vmatprep.subr.bf16.mxu0 0
  %681 = vmatpush1.bf16.msra.mxu0 %v201
  %682 = vmatprep.subr.bf16.mxu0 0
  %683 = vmatpush1.bf16.msra.mxu0 %v204
  %684 = vmatprep.subr.bf16.mxu0 0
  %685 = vmatpush1.bf16.msra.mxu0 %v207
  %686 = vmatprep.subr.bf16.mxu0 0
  %687 = vmatpush1.bf16.msra.mxu0 %v210
  %688 = vmatprep.subr.bf16.mxu0 0
  %689 = vmatpush1.bf16.msra.mxu0 0
  %690 = vmatprep.subr.bf16.mxu0 0
  %691 = vmatpush1.bf16.msra.mxu0 0
  %692 = vmatprep.subr.bf16.mxu0 0
  %693 = vmatpush1.bf16.msra.mxu0 0
  %694 = vmatprep.subr.bf16.mxu0 0
  %695 = vmatpush1.bf16.msra.mxu0 0
  %696 = vmatprep.subr.bf16.mxu0 0
  %697 = vmatpush1.bf16.msra.mxu0 0
  %698 = vmatprep.subr.bf16.mxu0 0
  %699 = vmatpush1.bf16.msra.mxu0 0
  %700 = vmatprep.subr.bf16.mxu0 0
  %701 = vmatpush1.bf16.msra.mxu0 0
  %702 = vmatprep.subr.bf16.mxu0 0
  %703 = vmatpush1.bf16.msra.mxu0 0
  %704 = vmatprep.mubr.bf16.mxu0 0
  %705 = vmatmul.mubr.bf16.gmra.mrb[0].mxu0 %v630
  %v706 = vpop.f32.mrb[0].mxu0
  %v707 = vadd.f32 0.0, %v706
  %v708 = vpop.f32.mrb[0].mxu0
  %v709 = vpop.f32.mrb[0].mxu0
  %v710 = vpop.f32.mrb[0].mxu0
  %711 = vdwg.mxu0
  %v713 = vrot.slane %v666, 7
  %v714 = vrot.slane %v666, 1
  %v715 = vrot.slane %v666, 2
  %v716 = vrot.slane %v666, 3
  %v717 = vrot.slane %v666, 4
  %v718 = vrot.slane %v666, 5
  %v719 = vrot.slane %v666, 6
  %v728 = vadd.f32 %v606, %v713
  %v729 = vadd.f32 %v609, %v666
  %v730 = vadd.f32 %v612, %v714
  %v731 = vadd.f32 %v615, %v715
  %v732 = vadd.f32 %v618, %v716
  %v733 = vadd.f32 %v621, %v717
  %v734 = vadd.f32 %v624, %v718
  %v735 = vadd.f32 %v627, %v719
  %v736 = vxor.u32 %v728, 2147483648
  %v737 = vxor.u32 %v729, 2147483648
  %v738 = vxor.u32 %v730, 2147483648
  %v739 = vxor.u32 %v731, 2147483648
  %v740 = vxor.u32 %v732, 2147483648
  %v741 = vxor.u32 %v733, 2147483648
  %v742 = vxor.u32 %v734, 2147483648
  %v743 = vxor.u32 %v735, 2147483648
  %v744 = vmul.f32 %v736, 1.442695
  %v745 = vpow.pop %v744
  %v746 = vmul.f32 %v737, 1.442695
  %v747 = vpow.pop %v746
  %v748 = vmul.f32 %v738, 1.442695
  %v749 = vpow.pop %v748
  %v750 = vmul.f32 %v739, 1.442695
  %v751 = vpow.pop %v750
  %v752 = vmul.f32 %v740, 1.442695
  %v753 = vpow.pop %v752
  %v754 = vmul.f32 %v741, 1.442695
  %v755 = vpow.pop %v754
  %v756 = vmul.f32 %v742, 1.442695
  %v757 = vpow.pop %v756
  %v758 = vmul.f32 %v743, 1.442695
  %v759 = vpow.pop %v758
  %v760 = vadd.f32 %v745, 1.0
  %v761 = vadd.f32 %v747, 1.0
  %v762 = vadd.f32 %v749, 1.0
  %v763 = vadd.f32 %v751, 1.0
  %v764 = vadd.f32 %v753, 1.0
  %v765 = vadd.f32 %v755, 1.0
  %v766 = vadd.f32 %v757, 1.0
  %v767 = vadd.f32 %v759, 1.0
  %v768 = vrcp.pop %v760
  %v769 = vmul.f32 1.0, %v768
  %v770 = vrcp.pop %v761
  %v771 = vmul.f32 1.0, %v770
  %v772 = vrcp.pop %v762
  %v773 = vmul.f32 1.0, %v772
  %v774 = vrcp.pop %v763
  %v775 = vmul.f32 1.0, %v774
  %v776 = vrcp.pop %v764
  %v777 = vmul.f32 1.0, %v776
  %v778 = vrcp.pop %v765
  %v779 = vmul.f32 1.0, %v778
  %v780 = vrcp.pop %v766
  %v781 = vmul.f32 1.0, %v780
  %v782 = vrcp.pop %v767
  %v783 = vmul.f32 1.0, %v782
  %v785 = vrot.slane %v668, 7
  %v786 = vrot.slane %v668, 1
  %v787 = vrot.slane %v668, 2
  %v788 = vrot.slane %v668, 3
  %v789 = vrot.slane %v668, 4
  %v790 = vrot.slane %v668, 5
  %v791 = vrot.slane %v668, 6
  %v800 = vadd.f32 %v607, %v785
  %v801 = vadd.f32 %v610, %v668
  %v802 = vadd.f32 %v613, %v786
  %v803 = vadd.f32 %v616, %v787
  %v804 = vadd.f32 %v619, %v788
  %v805 = vadd.f32 %v622, %v789
  %v806 = vadd.f32 %v625, %v790
  %v807 = vadd.f32 %v628, %v791
  %v808 = vxor.u32 %v800, 2147483648
  %v809 = vxor.u32 %v801, 2147483648
  %v810 = vxor.u32 %v802, 2147483648
  %v811 = vxor.u32 %v803, 2147483648
  %v812 = vxor.u32 %v804, 2147483648
  %v813 = vxor.u32 %v805, 2147483648
  %v814 = vxor.u32 %v806, 2147483648
  %v815 = vxor.u32 %v807, 2147483648
  %v816 = vmul.f32 %v808, 1.442695
  %v817 = vpow.pop %v816
  %v818 = vmul.f32 %v809, 1.442695
  %v819 = vpow.pop %v818
  %v820 = vmul.f32 %v810, 1.442695
  %v821 = vpow.pop %v820
  %v822 = vmul.f32 %v811, 1.442695
  %v823 = vpow.pop %v822
  %v824 = vmul.f32 %v812, 1.442695
  %v825 = vpow.pop %v824
  %v826 = vmul.f32 %v813, 1.442695
  %v827 = vpow.pop %v826
  %v828 = vmul.f32 %v814, 1.442695
  %v829 = vpow.pop %v828
  %v830 = vmul.f32 %v815, 1.442695
  %v831 = vpow.pop %v830
  %v832 = vadd.f32 %v817, 1.0
  %v833 = vadd.f32 %v819, 1.0
  %v834 = vadd.f32 %v821, 1.0
  %v835 = vadd.f32 %v823, 1.0
  %v836 = vadd.f32 %v825, 1.0
  %v837 = vadd.f32 %v827, 1.0
  %v838 = vadd.f32 %v829, 1.0
  %v839 = vadd.f32 %v831, 1.0
  %v840 = vrcp.pop %v832
  %v841 = vmul.f32 1.0, %v840
  %v842 = vrcp.pop %v833
  %v843 = vmul.f32 1.0, %v842
  %v844 = vrcp.pop %v834
  %v845 = vmul.f32 1.0, %v844
  %v846 = vrcp.pop %v835
  %v847 = vmul.f32 1.0, %v846
  %v848 = vrcp.pop %v836
  %v849 = vmul.f32 1.0, %v848
  %v850 = vrcp.pop %v837
  %v851 = vmul.f32 1.0, %v850
  %v852 = vrcp.pop %v838
  %v853 = vmul.f32 1.0, %v852
  %v854 = vrcp.pop %v839
  %v855 = vmul.f32 1.0, %v854
  %v856 = vadd.f32 %v707, %v63
  %v858 = vrot.slane %v856, 7
  %v859 = vrot.slane %v856, 1
  %v860 = vrot.slane %v856, 2
  %v861 = vrot.slane %v856, 3
  %v862 = vrot.slane %v856, 4
  %v863 = vrot.slane %v856, 5
  %v864 = vrot.slane %v856, 6
  %v873 = vmul.f32 %v769, %v858
  %v874 = vmul.f32 %v771, %v856
  %v875 = vmul.f32 %v773, %v859
  %v876 = vmul.f32 %v775, %v860
  %v877 = vmul.f32 %v777, %v861
  %v878 = vmul.f32 %v779, %v862
  %v879 = vmul.f32 %v781, %v863
  %v880 = vmul.f32 %v783, %v864
  %v881 = vadd.f32 %v608, %v873
  %v882 = vadd.f32 %v611, %v874
  %v883 = vadd.f32 %v614, %v875
  %v884 = vadd.f32 %v617, %v876
  %v885 = vadd.f32 %v620, %v877
  %v886 = vadd.f32 %v623, %v878
  %v887 = vadd.f32 %v626, %v879
  %v888 = vadd.f32 %v629, %v880
  %v889 = vtanh.pop %v881
  %v890 = vtanh.pop %v882
  %v891 = vtanh.pop %v883
  %v892 = vtanh.pop %v884
  %v893 = vtanh.pop %v885
  %v894 = vtanh.pop %v886
  %v895 = vtanh.pop %v887
  %v896 = vtanh.pop %v888
  %v897 = vsub.f32 1.0, %v841
  %v898 = vsub.f32 1.0, %v843
  %v899 = vsub.f32 1.0, %v845
  %v900 = vsub.f32 1.0, %v847
  %v901 = vsub.f32 1.0, %v849
  %v902 = vsub.f32 1.0, %v851
  %v903 = vsub.f32 1.0, %v853
  %v904 = vsub.f32 1.0, %v855
  %v905 = vmul.f32 %v897, %v889
  %v906 = vmul.f32 %v898, %v890
  %v907 = vmul.f32 %v899, %v891
  %v908 = vmul.f32 %v900, %v892
  %v909 = vmul.f32 %v901, %v893
  %v910 = vmul.f32 %v902, %v894
  %v911 = vmul.f32 %v903, %v895
  %v912 = vmul.f32 %v904, %v896
  %v914 = vrot.slane %v589, 7
  %v915 = vrot.slane %v589, 1
  %v916 = vrot.slane %v589, 2
  %v917 = vrot.slane %v589, 3
  %v918 = vrot.slane %v589, 4
  %v919 = vrot.slane %v589, 5
  %v920 = vrot.slane %v589, 6
  %v929 = vmul.f32 %v841, %v914
  %v930 = vmul.f32 %v843, %v589
  %v931 = vmul.f32 %v845, %v915
  %v932 = vmul.f32 %v847, %v916
  %v933 = vmul.f32 %v849, %v917
  %v934 = vmul.f32 %v851, %v918
  %v935 = vmul.f32 %v853, %v919
  %v936 = vmul.f32 %v855, %v920
  %v937 = vadd.f32 %v905, %v929
  %v938 = vadd.f32 %v906, %v930
  %v939 = vadd.f32 %v907, %v931
  %v940 = vadd.f32 %v908, %v932
  %v941 = vadd.f32 %v909, %v933
  %v942 = vadd.f32 %v910, %v934
  %v943 = vadd.f32 %v911, %v935
  %v944 = vadd.f32 %v912, %v936
  %s945 = sadd.s32 %s549, 1
  %v946 = vstv %s945
  %vm947 = vcmp.lt.s32.totalorder %v946, %v25
  %v948 = vsel %vm947, 1, 0
  %949 = vset.pattern.permute.xlu0 0
  %950 = vperm.xlu0 %949, %v948
  %v951 = vpop.permute.xlu0 %950
  %vm952 = vcmp.eq.s32.totalorder %v951, 1
  %v961 = vrot.slane %v937, 1
  %v962 = vsel %vm566, %v938, %v961
  %v963 = vrot.slane %v939, 7
  %v964 = vsel %vm569, %v963, %v962
  %v965 = vrot.slane %v940, 6
  %v966 = vsel %vm572, %v965, %v964
  %v967 = vrot.slane %v941, 5
  %v968 = vsel %vm575, %v967, %v966
  %v969 = vrot.slane %v942, 4
  %v970 = vsel %vm578, %v969, %v968
  %v971 = vrot.slane %v943, 3
  %v972 = vsel %vm581, %v971, %v970
  %v973 = vrot.slane %v944, 2
  %v974 = vsel %vm584, %v973, %v972
  %v976 = vsel %vm952, %v974, 0.0
  %977 = vst [vmem:[%s4 + $0x8] sm:$0xff] %v976
  %v978 = vsel %vm952, %v974, %v589
  %v979 = vld [vmem:[%s0] sm:$0x22]
  %v980 = vld [vmem:[%s0 + $0x8] sm:$0x2]
  %v981 = vld [vmem:[%s0 + $0xc] sm:$0x22]
  %v982 = vld [vmem:[%s0 + $0x14] sm:$0x2]
  %v983 = vld [vmem:[%s0 + $0x18] sm:$0x22]
  %v984 = vld [vmem:[%s0 + $0x20] sm:$0x2]
  %v985 = vld [vmem:[%s0 + $0x24] sm:$0x22]
  %v986 = vld [vmem:[%s0 + $0x2c] sm:$0x2]
  %v987 = vld [vmem:[%s0 + $0x30] sm:$0x22]
  %v988 = vld [vmem:[%s0 + $0x38] sm:$0x2]
  %v989 = vld [vmem:[%s0 + $0x3c] sm:$0x22]
  %v990 = vld [vmem:[%s0 + $0x44] sm:$0x2]
  %v991 = vld [vmem:[%s0 + $0x48] sm:$0x22]
  %v992 = vld [vmem:[%s0 + $0x50] sm:$0x2]
  %v993 = vld [vmem:[%s0 + $0x54] sm:$0x22]
  %v994 = vld [vmem:[%s0 + $0x5c] sm:$0x2]
  %v995 = vunpack.c.l.bf16 %v979
  %v996 = vunpack.c.h.bf16 %v979
  %v997 = vunpack.c.l.bf16 %v980
  %v998 = vunpack.c.l.bf16 %v981
  %v999 = vunpack.c.h.bf16 %v981
  %v1000 = vunpack.c.l.bf16 %v982
  %v1001 = vunpack.c.l.bf16 %v983
  %v1002 = vunpack.c.h.bf16 %v983
  %v1003 = vunpack.c.l.bf16 %v984
  %v1004 = vunpack.c.l.bf16 %v985
  %v1005 = vunpack.c.h.bf16 %v985
  %v1006 = vunpack.c.l.bf16 %v986
  %v1007 = vunpack.c.l.bf16 %v987
  %v1008 = vunpack.c.h.bf16 %v987
  %v1009 = vunpack.c.l.bf16 %v988
  %v1010 = vunpack.c.l.bf16 %v989
  %v1011 = vunpack.c.h.bf16 %v989
  %v1012 = vunpack.c.l.bf16 %v990
  %v1013 = vunpack.c.l.bf16 %v991
  %v1014 = vunpack.c.h.bf16 %v991
  %v1015 = vunpack.c.l.bf16 %v992
  %v1016 = vunpack.c.l.bf16 %v993
  %v1017 = vunpack.c.h.bf16 %v993
  %v1018 = vunpack.c.l.bf16 %v994
  %v1019 = vpack.c.bf16 %v978, %v978
  %1020 = vmatprep.subr.bf16.mxu0 %v188
  %1021 = vmatpush1.bf16.msra.mxu0 %v187
  %1022 = vmatprep.subr.bf16.mxu0 %v191
  %1023 = vmatpush1.bf16.msra.mxu0 %v190
  %1024 = vmatprep.subr.bf16.mxu0 %v194
  %1025 = vmatpush1.bf16.msra.mxu0 %v193
  %1026 = vmatprep.subr.bf16.mxu0 %v197
  %1027 = vmatpush1.bf16.msra.mxu0 %v196
  %1028 = vmatprep.subr.bf16.mxu0 %v200
  %1029 = vmatpush1.bf16.msra.mxu0 %v199
  %1030 = vmatprep.subr.bf16.mxu0 %v203
  %1031 = vmatpush1.bf16.msra.mxu0 %v202
  %1032 = vmatprep.subr.bf16.mxu0 %v206
  %1033 = vmatpush1.bf16.msra.mxu0 %v205
  %1034 = vmatprep.subr.bf16.mxu0 %v209
  %1035 = vmatpush1.bf16.msra.mxu0 %v208
  %1036 = vmatprep.subr.bf16.mxu0 0
  %1037 = vmatpush1.bf16.msra.mxu0 0
  %1038 = vmatprep.subr.bf16.mxu0 0
  %1039 = vmatpush1.bf16.msra.mxu0 0
  %1040 = vmatprep.subr.bf16.mxu0 0
  %1041 = vmatpush1.bf16.msra.mxu0 0
  %1042 = vmatprep.subr.bf16.mxu0 0
  %1043 = vmatpush1.bf16.msra.mxu0 0
  %1044 = vmatprep.subr.bf16.mxu0 0
  %1045 = vmatpush1.bf16.msra.mxu0 0
  %1046 = vmatprep.subr.bf16.mxu0 0
  %1047 = vmatpush1.bf16.msra.mxu0 0
  %1048 = vmatprep.subr.bf16.mxu0 0
  %1049 = vmatpush1.bf16.msra.mxu0 0
  %1050 = vmatprep.subr.bf16.mxu0 0
  %1051 = vmatpush1.bf16.msra.mxu0 0
  %1052 = vmatprep.mubr.bf16.mxu0 0
  %1053 = vmatmul.mubr.bf16.gmra.mrb[0].mxu0 %v1019
  %v1054 = vpop.f32.mrb[0].mxu0
  %v1055 = vadd.f32 0.0, %v1054
  %v1056 = vpop.f32.mrb[0].mxu0
  %v1057 = vadd.f32 0.0, %v1056
  %v1058 = vpop.f32.mrb[0].mxu0
  %v1059 = vpop.f32.mrb[0].mxu0
  %1060 = vdwg.mxu0
  %1061 = vmatprep.subr.bf16.mxu0 0
  %1062 = vmatpush1.bf16.msra.mxu0 %v189
  %1063 = vmatprep.subr.bf16.mxu0 0
  %1064 = vmatpush1.bf16.msra.mxu0 %v192
  %1065 = vmatprep.subr.bf16.mxu0 0
  %1066 = vmatpush1.bf16.msra.mxu0 %v195
  %1067 = vmatprep.subr.bf16.mxu0 0
  %1068 = vmatpush1.bf16.msra.mxu0 %v198
  %1069 = vmatprep.subr.bf16.mxu0 0
  %1070 = vmatpush1.bf16.msra.mxu0 %v201
  %1071 = vmatprep.subr.bf16.mxu0 0
  %1072 = vmatpush1.bf16.msra.mxu0 %v204
  %1073 = vmatprep.subr.bf16.mxu0 0
  %1074 = vmatpush1.bf16.msra.mxu0 %v207
  %1075 = vmatprep.subr.bf16.mxu0 0
  %1076 = vmatpush1.bf16.msra.mxu0 %v210
  %1077 = vmatprep.subr.bf16.mxu0 0
  %1078 = vmatpush1.bf16.msra.mxu0 0
  %1079 = vmatprep.subr.bf16.mxu0 0
  %1080 = vmatpush1.bf16.msra.mxu0 0
  %1081 = vmatprep.subr.bf16.mxu0 0
  %1082 = vmatpush1.bf16.msra.mxu0 0
  %1083 = vmatprep.subr.bf16.mxu0 0
  %1084 = vmatpush1.bf16.msra.mxu0 0
  %1085 = vmatprep.subr.bf16.mxu0 0
  %1086 = vmatpush1.bf16.msra.mxu0 0
  %1087 = vmatprep.subr.bf16.mxu0 0
  %1088 = vmatpush1.bf16.msra.mxu0 0
  %1089 = vmatprep.subr.bf16.mxu0 0
  %1090 = vmatpush1.bf16.msra.mxu0 0
  %1091 = vmatprep.subr.bf16.mxu0 0
  %1092 = vmatpush1.bf16.msra.mxu0 0
  %1093 = vmatprep.mubr.bf16.mxu0 0
  %1094 = vmatmul.mubr.bf16.gmra.mrb[0].mxu0 %v1019
  %v1095 = vpop.f32.mrb[0].mxu0
  %v1096 = vadd.f32 0.0, %v1095
  %v1097 = vpop.f32.mrb[0].mxu0
  %v1098 = vpop.f32.mrb[0].mxu0
  %v1099 = vpop.f32.mrb[0].mxu0
  %1100 = vdwg.mxu0
  %v1102 = vrot.slane %v1055, 6
  %v1103 = vrot.slane %v1055, 7
  %v1104 = vrot.slane %v1055, 1
  %v1105 = vrot.slane %v1055, 2
  %v1106 = vrot.slane %v1055, 3
  %v1107 = vrot.slane %v1055, 4
  %v1108 = vrot.slane %v1055, 5
  %v1117 = vadd.f32 %v995, %v1102
  %v1118 = vadd.f32 %v998, %v1103
  %v1119 = vadd.f32 %v1001, %v1055
  %v1120 = vadd.f32 %v1004, %v1104
  %v1121 = vadd.f32 %v1007, %v1105
  %v1122 = vadd.f32 %v1010, %v1106
  %v1123 = vadd.f32 %v1013, %v1107
  %v1124 = vadd.f32 %v1016, %v1108
  %v1125 = vxor.u32 %v1117, 2147483648
  %v1126 = vxor.u32 %v1118, 2147483648
  %v1127 = vxor.u32 %v1119, 2147483648
  %v1128 = vxor.u32 %v1120, 2147483648
  %v1129 = vxor.u32 %v1121, 2147483648
  %v1130 = vxor.u32 %v1122, 2147483648
  %v1131 = vxor.u32 %v1123, 2147483648
  %v1132 = vxor.u32 %v1124, 2147483648
  %v1133 = vmul.f32 %v1125, 1.442695
  %v1134 = vpow.pop %v1133
  %v1135 = vmul.f32 %v1126, 1.442695
  %v1136 = vpow.pop %v1135
  %v1137 = vmul.f32 %v1127, 1.442695
  %v1138 = vpow.pop %v1137
  %v1139 = vmul.f32 %v1128, 1.442695
  %v1140 = vpow.pop %v1139
  %v1141 = vmul.f32 %v1129, 1.442695
  %v1142 = vpow.pop %v1141
  %v1143 = vmul.f32 %v1130, 1.442695
  %v1144 = vpow.pop %v1143
  %v1145 = vmul.f32 %v1131, 1.442695
  %v1146 = vpow.pop %v1145
  %v1147 = vmul.f32 %v1132, 1.442695
  %v1148 = vpow.pop %v1147
  %v1149 = vadd.f32 %v1134, 1.0
  %v1150 = vadd.f32 %v1136, 1.0
  %v1151 = vadd.f32 %v1138, 1.0
  %v1152 = vadd.f32 %v1140, 1.0
  %v1153 = vadd.f32 %v1142, 1.0
  %v1154 = vadd.f32 %v1144, 1.0
  %v1155 = vadd.f32 %v1146, 1.0
  %v1156 = vadd.f32 %v1148, 1.0
  %v1157 = vrcp.pop %v1149
  %v1158 = vmul.f32 1.0, %v1157
  %v1159 = vrcp.pop %v1150
  %v1160 = vmul.f32 1.0, %v1159
  %v1161 = vrcp.pop %v1151
  %v1162 = vmul.f32 1.0, %v1161
  %v1163 = vrcp.pop %v1152
  %v1164 = vmul.f32 1.0, %v1163
  %v1165 = vrcp.pop %v1153
  %v1166 = vmul.f32 1.0, %v1165
  %v1167 = vrcp.pop %v1154
  %v1168 = vmul.f32 1.0, %v1167
  %v1169 = vrcp.pop %v1155
  %v1170 = vmul.f32 1.0, %v1169
  %v1171 = vrcp.pop %v1156
  %v1172 = vmul.f32 1.0, %v1171
  %v1174 = vrot.slane %v1057, 6
  %v1175 = vrot.slane %v1057, 7
  %v1176 = vrot.slane %v1057, 1
  %v1177 = vrot.slane %v1057, 2
  %v1178 = vrot.slane %v1057, 3
  %v1179 = vrot.slane %v1057, 4
  %v1180 = vrot.slane %v1057, 5
  %v1189 = vadd.f32 %v996, %v1174
  %v1190 = vadd.f32 %v999, %v1175
  %v1191 = vadd.f32 %v1002, %v1057
  %v1192 = vadd.f32 %v1005, %v1176
  %v1193 = vadd.f32 %v1008, %v1177
  %v1194 = vadd.f32 %v1011, %v1178
  %v1195 = vadd.f32 %v1014, %v1179
  %v1196 = vadd.f32 %v1017, %v1180
  %v1197 = vxor.u32 %v1189, 2147483648
  %v1198 = vxor.u32 %v1190, 2147483648
  %v1199 = vxor.u32 %v1191, 2147483648
  %v1200 = vxor.u32 %v1192, 2147483648
  %v1201 = vxor.u32 %v1193, 2147483648
  %v1202 = vxor.u32 %v1194, 2147483648
  %v1203 = vxor.u32 %v1195, 2147483648
  %v1204 = vxor.u32 %v1196, 2147483648
  %v1205 = vmul.f32 %v1197, 1.442695
  %v1206 = vpow.pop %v1205
  %v1207 = vmul.f32 %v1198, 1.442695
  %v1208 = vpow.pop %v1207
  %v1209 = vmul.f32 %v1199, 1.442695
  %v1210 = vpow.pop %v1209
  %v1211 = vmul.f32 %v1200, 1.442695
  %v1212 = vpow.pop %v1211
  %v1213 = vmul.f32 %v1201, 1.442695
  %v1214 = vpow.pop %v1213
  %v1215 = vmul.f32 %v1202, 1.442695
  %v1216 = vpow.pop %v1215
  %v1217 = vmul.f32 %v1203, 1.442695
  %v1218 = vpow.pop %v1217
  %v1219 = vmul.f32 %v1204, 1.442695
  %v1220 = vpow.pop %v1219
  %v1221 = vadd.f32 %v1206, 1.0
  %v1222 = vadd.f32 %v1208, 1.0
  %v1223 = vadd.f32 %v1210, 1.0
  %v1224 = vadd.f32 %v1212, 1.0
  %v1225 = vadd.f32 %v1214, 1.0
  %v1226 = vadd.f32 %v1216, 1.0
  %v1227 = vadd.f32 %v1218, 1.0
  %v1228 = vadd.f32 %v1220, 1.0
  %v1229 = vrcp.pop %v1221
  %v1230 = vmul.f32 1.0, %v1229
  %v1231 = vrcp.pop %v1222
  %v1232 = vmul.f32 1.0, %v1231
  %v1233 = vrcp.pop %v1223
  %v1234 = vmul.f32 1.0, %v1233
  %v1235 = vrcp.pop %v1224
  %v1236 = vmul.f32 1.0, %v1235
  %v1237 = vrcp.pop %v1225
  %v1238 = vmul.f32 1.0, %v1237
  %v1239 = vrcp.pop %v1226
  %v1240 = vmul.f32 1.0, %v1239
  %v1241 = vrcp.pop %v1227
  %v1242 = vmul.f32 1.0, %v1241
  %v1243 = vrcp.pop %v1228
  %v1244 = vmul.f32 1.0, %v1243
  %v1245 = vadd.f32 %v1096, %v63
  %v1247 = vrot.slane %v1245, 6
  %v1248 = vrot.slane %v1245, 7
  %v1249 = vrot.slane %v1245, 1
  %v1250 = vrot.slane %v1245, 2
  %v1251 = vrot.slane %v1245, 3
  %v1252 = vrot.slane %v1245, 4
  %v1253 = vrot.slane %v1245, 5
  %v1262 = vmul.f32 %v1158, %v1247
  %v1263 = vmul.f32 %v1160, %v1248
  %v1264 = vmul.f32 %v1162, %v1245
  %v1265 = vmul.f32 %v1164, %v1249
  %v1266 = vmul.f32 %v1166, %v1250
  %v1267 = vmul.f32 %v1168, %v1251
  %v1268 = vmul.f32 %v1170, %v1252
  %v1269 = vmul.f32 %v1172, %v1253
  %v1270 = vadd.f32 %v997, %v1262
  %v1271 = vadd.f32 %v1000, %v1263
  %v1272 = vadd.f32 %v1003, %v1264
  %v1273 = vadd.f32 %v1006, %v1265
  %v1274 = vadd.f32 %v1009, %v1266
  %v1275 = vadd.f32 %v1012, %v1267
  %v1276 = vadd.f32 %v1015, %v1268
  %v1277 = vadd.f32 %v1018, %v1269
  %v1278 = vtanh.pop %v1270
  %v1279 = vtanh.pop %v1271
  %v1280 = vtanh.pop %v1272
  %v1281 = vtanh.pop %v1273
  %v1282 = vtanh.pop %v1274
  %v1283 = vtanh.pop %v1275
  %v1284 = vtanh.pop %v1276
  %v1285 = vtanh.pop %v1277
  %v1286 = vsub.f32 1.0, %v1230
  %v1287 = vsub.f32 1.0, %v1232
  %v1288 = vsub.f32 1.0, %v1234
  %v1289 = vsub.f32 1.0, %v1236
  %v1290 = vsub.f32 1.0, %v1238
  %v1291 = vsub.f32 1.0, %v1240
  %v1292 = vsub.f32 1.0, %v1242
  %v1293 = vsub.f32 1.0, %v1244
  %v1294 = vmul.f32 %v1286, %v1278
  %v1295 = vmul.f32 %v1287, %v1279
  %v1296 = vmul.f32 %v1288, %v1280
  %v1297 = vmul.f32 %v1289, %v1281
  %v1298 = vmul.f32 %v1290, %v1282
  %v1299 = vmul.f32 %v1291, %v1283
  %v1300 = vmul.f32 %v1292, %v1284
  %v1301 = vmul.f32 %v1293, %v1285
  %v1303 = vrot.slane %v978, 6
  %v1304 = vrot.slane %v978, 7
  %v1305 = vrot.slane %v978, 1
  %v1306 = vrot.slane %v978, 2
  %v1307 = vrot.slane %v978, 3
  %v1308 = vrot.slane %v978, 4
  %v1309 = vrot.slane %v978, 5
  %v1318 = vmul.f32 %v1230, %v1303
  %v1319 = vmul.f32 %v1232, %v1304
  %v1320 = vmul.f32 %v1234, %v978
  %v1321 = vmul.f32 %v1236, %v1305
  %v1322 = vmul.f32 %v1238, %v1306
  %v1323 = vmul.f32 %v1240, %v1307
  %v1324 = vmul.f32 %v1242, %v1308
  %v1325 = vmul.f32 %v1244, %v1309
  %v1326 = vadd.f32 %v1294, %v1318
  %v1327 = vadd.f32 %v1295, %v1319
  %v1328 = vadd.f32 %v1296, %v1320
  %v1329 = vadd.f32 %v1297, %v1321
  %v1330 = vadd.f32 %v1298, %v1322
  %v1331 = vadd.f32 %v1299, %v1323
  %v1332 = vadd.f32 %v1300, %v1324
  %v1333 = vadd.f32 %v1301, %v1325
  %s1334 = sadd.s32 %s549, 2
  %v1335 = vstv %s1334
  %vm1336 = vcmp.lt.s32.totalorder %v1335, %v25
  %v1337 = vsel %vm1336, 1, 0
  %1338 = vset.pattern.permute.xlu0 0
  %1339 = vperm.xlu0 %1338, %v1337
  %v1340 = vpop.permute.xlu0 %1339
  %vm1341 = vcmp.eq.s32.totalorder %v1340, 1
  %v1350 = vrot.slane %v1326, 2
  %v1351 = vrot.slane %v1327, 1
  %v1352 = vsel %vm566, %v1351, %v1350
  %v1353 = vsel %vm569, %v1328, %v1352
  %v1354 = vrot.slane %v1329, 7
  %v1355 = vsel %vm572, %v1354, %v1353
  %v1356 = vrot.slane %v1330, 6
  %v1357 = vsel %vm575, %v1356, %v1355
  %v1358 = vrot.slane %v1331, 5
  %v1359 = vsel %vm578, %v1358, %v1357
  %v1360 = vrot.slane %v1332, 4
  %v1361 = vsel %vm581, %v1360, %v1359
  %v1362 = vrot.slane %v1333, 3
  %v1363 = vsel %vm584, %v1362, %v1361
  %v1365 = vsel %vm1341, %v1363, 0.0
  %1366 = vst [vmem:[%s4 + $0x10] sm:$0xff] %v1365
  %v1367 = vsel %vm1341, %v1363, %v978
  %v1368 = vld [vmem:[%s0] sm:$0x22]
  %v1369 = vld [vmem:[%s0 + $0x8] sm:$0x2]
  %v1370 = vld [vmem:[%s0 + $0xc] sm:$0x22]
  %v1371 = vld [vmem:[%s0 + $0x14] sm:$0x2]
  %v1372 = vld [vmem:[%s0 + $0x18] sm:$0x22]
  %v1373 = vld [vmem:[%s0 + $0x20] sm:$0x2]
  %v1374 = vld [vmem:[%s0 + $0x24] sm:$0x22]
  %v1375 = vld [vmem:[%s0 + $0x2c] sm:$0x2]
  %v1376 = vld [vmem:[%s0 + $0x30] sm:$0x22]
  %v1377 = vld [vmem:[%s0 + $0x38] sm:$0x2]
  %v1378 = vld [vmem:[%s0 + $0x3c] sm:$0x22]
  %v1379 = vld [vmem:[%s0 + $0x44] sm:$0x2]
  %v1380 = vld [vmem:[%s0 + $0x48] sm:$0x22]
  %v1381 = vld [vmem:[%s0 + $0x50] sm:$0x2]
  %v1382 = vld [vmem:[%s0 + $0x54] sm:$0x22]
  %v1383 = vld [vmem:[%s0 + $0x5c] sm:$0x2]
  %v1384 = vunpack.c.l.bf16 %v1368
  %v1385 = vunpack.c.h.bf16 %v1368
  %v1386 = vunpack.c.l.bf16 %v1369
  %v1387 = vunpack.c.l.bf16 %v1370
  %v1388 = vunpack.c.h.bf16 %v1370
  %v1389 = vunpack.c.l.bf16 %v1371
  %v1390 = vunpack.c.l.bf16 %v1372
  %v1391 = vunpack.c.h.bf16 %v1372
  %v1392 = vunpack.c.l.bf16 %v1373
  %v1393 = vunpack.c.l.bf16 %v1374
  %v1394 = vunpack.c.h.bf16 %v1374
  %v1395 = vunpack.c.l.bf16 %v1375
  %v1396 = vunpack.c.l.bf16 %v1376
  %v1397 = vunpack.c.h.bf16 %v1376
  %v1398 = vunpack.c.l.bf16 %v1377
  %v1399 = vunpack.c.l.bf16 %v1378
  %v1400 = vunpack.c.h.bf16 %v1378
  %v1401 = vunpack.c.l.bf16 %v1379
  %v1402 = vunpack.c.l.bf16 %v1380
  %v1403 = vunpack.c.h.bf16 %v1380
  %v1404 = vunpack.c.l.bf16 %v1381
  %v1405 = vunpack.c.l.bf16 %v1382
  %v1406 = vunpack.c.h.bf16 %v1382
  %v1407 = vunpack.c.l.bf16 %v1383
  %v1408 = vpack.c.bf16 %v1367, %v1367
  %1409 = vmatprep.subr.bf16.mxu0 %v188
  %1410 = vmatpush1.bf16.msra.mxu0 %v187
  %1411 = vmatprep.subr.bf16.mxu0 %v191
  %1412 = vmatpush1.bf16.msra.mxu0 %v190
  %1413 = vmatprep.subr.bf16.mxu0 %v194
  %1414 = vmatpush1.bf16.msra.mxu0 %v193
  %1415 = vmatprep.subr.bf16.mxu0 %v197
  %1416 = vmatpush1.bf16.msra.mxu0 %v196
  %1417 = vmatprep.subr.bf16.mxu0 %v200
  %1418 = vmatpush1.bf16.msra.mxu0 %v199
  %1419 = vmatprep.subr.bf16.mxu0 %v203
  %1420 = vmatpush1.bf16.msra.mxu0 %v202
  %1421 = vmatprep.subr.bf16.mxu0 %v206
  %1422 = vmatpush1.bf16.msra.mxu0 %v205
  %1423 = vmatprep.subr.bf16.mxu0 %v209
  %1424 = vmatpush1.bf16.msra.mxu0 %v208
  %1425 = vmatprep.subr.bf16.mxu0 0
  %1426 = vmatpush1.bf16.msra.mxu0 0
  %1427 = vmatprep.subr.bf16.mxu0 0
  %1428 = vmatpush1.bf16.msra.mxu0 0
  %1429 = vmatprep.subr.bf16.mxu0 0
  %1430 = vmatpush1.bf16.msra.mxu0 0
  %1431 = vmatprep.subr.bf16.mxu0 0
  %1432 = vmatpush1.bf16.msra.mxu0 0
  %1433 = vmatprep.subr.bf16.mxu0 0
  %1434 = vmatpush1.bf16.msra.mxu0 0
  %1435 = vmatprep.subr.bf16.mxu0 0
  %1436 = vmatpush1.bf16.msra.mxu0 0
  %1437 = vmatprep.subr.bf16.mxu0 0
  %1438 = vmatpush1.bf16.msra.mxu0 0
  %1439 = vmatprep.subr.bf16.mxu0 0
  %1440 = vmatpush1.bf16.msra.mxu0 0
  %1441 = vmatprep.mubr.bf16.mxu0 0
  %1442 = vmatmul.mubr.bf16.gmra.mrb[0].mxu0 %v1408
  %v1443 = vpop.f32.mrb[0].mxu0
  %v1444 = vadd.f32 0.0, %v1443
  %v1445 = vpop.f32.mrb[0].mxu0
  %v1446 = vadd.f32 0.0, %v1445
  %v1447 = vpop.f32.mrb[0].mxu0
  %v1448 = vpop.f32.mrb[0].mxu0
  %1449 = vdwg.mxu0
  %1450 = vmatprep.subr.bf16.mxu0 0
  %1451 = vmatpush1.bf16.msra.mxu0 %v189
  %1452 = vmatprep.subr.bf16.mxu0 0
  %1453 = vmatpush1.bf16.msra.mxu0 %v192
  %1454 = vmatprep.subr.bf16.mxu0 0
  %1455 = vmatpush1.bf16.msra.mxu0 %v195
  %1456 = vmatprep.subr.bf16.mxu0 0
  %1457 = vmatpush1.bf16.msra.mxu0 %v198
  %1458 = vmatprep.subr.bf16.mxu0 0
  %1459 = vmatpush1.bf16.msra.mxu0 %v201
  %1460 = vmatprep.subr.bf16.mxu0 0
  %1461 = vmatpush1.bf16.msra.mxu0 %v204
  %1462 = vmatprep.subr.bf16.mxu0 0
  %1463 = vmatpush1.bf16.msra.mxu0 %v207
  %1464 = vmatprep.subr.bf16.mxu0 0
  %1465 = vmatpush1.bf16.msra.mxu0 %v210
  %1466 = vmatprep.subr.bf16.mxu0 0
  %1467 = vmatpush1.bf16.msra.mxu0 0
  %1468 = vmatprep.subr.bf16.mxu0 0
  %1469 = vmatpush1.bf16.msra.mxu0 0
  %1470 = vmatprep.subr.bf16.mxu0 0
  %1471 = vmatpush1.bf16.msra.mxu0 0
  %1472 = vmatprep.subr.bf16.mxu0 0
  %1473 = vmatpush1.bf16.msra.mxu0 0
  %1474 = vmatprep.subr.bf16.mxu0 0
  %1475 = vmatpush1.bf16.msra.mxu0 0
  %1476 = vmatprep.subr.bf16.mxu0 0
  %1477 = vmatpush1.bf16.msra.mxu0 0
  %1478 = vmatprep.subr.bf16.mxu0 0
  %1479 = vmatpush1.bf16.msra.mxu0 0
  %1480 = vmatprep.subr.bf16.mxu0 0
  %1481 = vmatpush1.bf16.msra.mxu0 0
  %1482 = vmatprep.mubr.bf16.mxu0 0
  %1483 = vmatmul.mubr.bf16.gmra.mrb[0].mxu0 %v1408
  %v1484 = vpop.f32.mrb[0].mxu0
  %v1485 = vadd.f32 0.0, %v1484
  %v1486 = vpop.f32.mrb[0].mxu0
  %v1487 = vpop.f32.mrb[0].mxu0
  %v1488 = vpop.f32.mrb[0].mxu0
  %1489 = vdwg.mxu0
  %v1491 = vrot.slane %v1444, 5
  %v1492 = vrot.slane %v1444, 6
  %v1493 = vrot.slane %v1444, 7
  %v1494 = vrot.slane %v1444, 1
  %v1495 = vrot.slane %v1444, 2
  %v1496 = vrot.slane %v1444, 3
  %v1497 = vrot.slane %v1444, 4
  %v1506 = vadd.f32 %v1384, %v1491
  %v1507 = vadd.f32 %v1387, %v1492
  %v1508 = vadd.f32 %v1390, %v1493
  %v1509 = vadd.f32 %v1393, %v1444
  %v1510 = vadd.f32 %v1396, %v1494
  %v1511 = vadd.f32 %v1399, %v1495
  %v1512 = vadd.f32 %v1402, %v1496
  %v1513 = vadd.f32 %v1405, %v1497
  %v1514 = vxor.u32 %v1506, 2147483648
  %v1515 = vxor.u32 %v1507, 2147483648
  %v1516 = vxor.u32 %v1508, 2147483648
  %v1517 = vxor.u32 %v1509, 2147483648
  %v1518 = vxor.u32 %v1510, 2147483648
  %v1519 = vxor.u32 %v1511, 2147483648
  %v1520 = vxor.u32 %v1512, 2147483648
  %v1521 = vxor.u32 %v1513, 2147483648
  %v1522 = vmul.f32 %v1514, 1.442695
  %v1523 = vpow.pop %v1522
  %v1524 = vmul.f32 %v1515, 1.442695
  %v1525 = vpow.pop %v1524
  %v1526 = vmul.f32 %v1516, 1.442695
  %v1527 = vpow.pop %v1526
  %v1528 = vmul.f32 %v1517, 1.442695
  %v1529 = vpow.pop %v1528
  %v1530 = vmul.f32 %v1518, 1.442695
  %v1531 = vpow.pop %v1530
  %v1532 = vmul.f32 %v1519, 1.442695
  %v1533 = vpow.pop %v1532
  %v1534 = vmul.f32 %v1520, 1.442695
  %v1535 = vpow.pop %v1534
  %v1536 = vmul.f32 %v1521, 1.442695
  %v1537 = vpow.pop %v1536
  %v1538 = vadd.f32 %v1523, 1.0
  %v1539 = vadd.f32 %v1525, 1.0
  %v1540 = vadd.f32 %v1527, 1.0
  %v1541 = vadd.f32 %v1529, 1.0
  %v1542 = vadd.f32 %v1531, 1.0
  %v1543 = vadd.f32 %v1533, 1.0
  %v1544 = vadd.f32 %v1535, 1.0
  %v1545 = vadd.f32 %v1537, 1.0
  %v1546 = vrcp.pop %v1538
  %v1547 = vmul.f32 1.0, %v1546
  %v1548 = vrcp.pop %v1539
  %v1549 = vmul.f32 1.0, %v1548
  %v1550 = vrcp.pop %v1540
  %v1551 = vmul.f32 1.0, %v1550
  %v1552 = vrcp.pop %v1541
  %v1553 = vmul.f32 1.0, %v1552
  %v1554 = vrcp.pop %v1542
  %v1555 = vmul.f32 1.0, %v1554
  %v1556 = vrcp.pop %v1543
  %v1557 = vmul.f32 1.0, %v1556
  %v1558 = vrcp.pop %v1544
  %v1559 = vmul.f32 1.0, %v1558
  %v1560 = vrcp.pop %v1545
  %v1561 = vmul.f32 1.0, %v1560
  %v1563 = vrot.slane %v1446, 5
  %v1564 = vrot.slane %v1446, 6
  %v1565 = vrot.slane %v1446, 7
  %v1566 = vrot.slane %v1446, 1
  %v1567 = vrot.slane %v1446, 2
  %v1568 = vrot.slane %v1446, 3
  %v1569 = vrot.slane %v1446, 4
  %v1578 = vadd.f32 %v1385, %v1563
  %v1579 = vadd.f32 %v1388, %v1564
  %v1580 = vadd.f32 %v1391, %v1565
  %v1581 = vadd.f32 %v1394, %v1446
  %v1582 = vadd.f32 %v1397, %v1566
  %v1583 = vadd.f32 %v1400, %v1567
  %v1584 = vadd.f32 %v1403, %v1568
  %v1585 = vadd.f32 %v1406, %v1569
  %v1586 = vxor.u32 %v1578, 2147483648
  %v1587 = vxor.u32 %v1579, 2147483648
  %v1588 = vxor.u32 %v1580, 2147483648
  %v1589 = vxor.u32 %v1581, 2147483648
  %v1590 = vxor.u32 %v1582, 2147483648
  %v1591 = vxor.u32 %v1583, 2147483648
  %v1592 = vxor.u32 %v1584, 2147483648
  %v1593 = vxor.u32 %v1585, 2147483648
  %v1594 = vmul.f32 %v1586, 1.442695
  %v1595 = vpow.pop %v1594
  %v1596 = vmul.f32 %v1587, 1.442695
  %v1597 = vpow.pop %v1596
  %v1598 = vmul.f32 %v1588, 1.442695
  %v1599 = vpow.pop %v1598
  %v1600 = vmul.f32 %v1589, 1.442695
  %v1601 = vpow.pop %v1600
  %v1602 = vmul.f32 %v1590, 1.442695
  %v1603 = vpow.pop %v1602
  %v1604 = vmul.f32 %v1591, 1.442695
  %v1605 = vpow.pop %v1604
  %v1606 = vmul.f32 %v1592, 1.442695
  %v1607 = vpow.pop %v1606
  %v1608 = vmul.f32 %v1593, 1.442695
  %v1609 = vpow.pop %v1608
  %v1610 = vadd.f32 %v1595, 1.0
  %v1611 = vadd.f32 %v1597, 1.0
  %v1612 = vadd.f32 %v1599, 1.0
  %v1613 = vadd.f32 %v1601, 1.0
  %v1614 = vadd.f32 %v1603, 1.0
  %v1615 = vadd.f32 %v1605, 1.0
  %v1616 = vadd.f32 %v1607, 1.0
  %v1617 = vadd.f32 %v1609, 1.0
  %v1618 = vrcp.pop %v1610
  %v1619 = vmul.f32 1.0, %v1618
  %v1620 = vrcp.pop %v1611
  %v1621 = vmul.f32 1.0, %v1620
  %v1622 = vrcp.pop %v1612
  %v1623 = vmul.f32 1.0, %v1622
  %v1624 = vrcp.pop %v1613
  %v1625 = vmul.f32 1.0, %v1624
  %v1626 = vrcp.pop %v1614
  %v1627 = vmul.f32 1.0, %v1626
  %v1628 = vrcp.pop %v1615
  %v1629 = vmul.f32 1.0, %v1628
  %v1630 = vrcp.pop %v1616
  %v1631 = vmul.f32 1.0, %v1630
  %v1632 = vrcp.pop %v1617
  %v1633 = vmul.f32 1.0, %v1632
  %v1634 = vadd.f32 %v1485, %v63
  %v1636 = vrot.slane %v1634, 5
  %v1637 = vrot.slane %v1634, 6
  %v1638 = vrot.slane %v1634, 7
  %v1639 = vrot.slane %v1634, 1
  %v1640 = vrot.slane %v1634, 2
  %v1641 = vrot.slane %v1634, 3
  %v1642 = vrot.slane %v1634, 4
  %v1651 = vmul.f32 %v1547, %v1636
  %v1652 = vmul.f32 %v1549, %v1637
  %v1653 = vmul.f32 %v1551, %v1638
  %v1654 = vmul.f32 %v1553, %v1634
  %v1655 = vmul.f32 %v1555, %v1639
  %v1656 = vmul.f32 %v1557, %v1640
  %v1657 = vmul.f32 %v1559, %v1641
  %v1658 = vmul.f32 %v1561, %v1642
  %v1659 = vadd.f32 %v1386, %v1651
  %v1660 = vadd.f32 %v1389, %v1652
  %v1661 = vadd.f32 %v1392, %v1653
  %v1662 = vadd.f32 %v1395, %v1654
  %v1663 = vadd.f32 %v1398, %v1655
  %v1664 = vadd.f32 %v1401, %v1656
  %v1665 = vadd.f32 %v1404, %v1657
  %v1666 = vadd.f32 %v1407, %v1658
  %v1667 = vtanh.pop %v1659
  %v1668 = vtanh.pop %v1660
  %v1669 = vtanh.pop %v1661
  %v1670 = vtanh.pop %v1662
  %v1671 = vtanh.pop %v1663
  %v1672 = vtanh.pop %v1664
  %v1673 = vtanh.pop %v1665
  %v1674 = vtanh.pop %v1666
  %v1675 = vsub.f32 1.0, %v1619
  %v1676 = vsub.f32 1.0, %v1621
  %v1677 = vsub.f32 1.0, %v1623
  %v1678 = vsub.f32 1.0, %v1625
  %v1679 = vsub.f32 1.0, %v1627
  %v1680 = vsub.f32 1.0, %v1629
  %v1681 = vsub.f32 1.0, %v1631
  %v1682 = vsub.f32 1.0, %v1633
  %v1683 = vmul.f32 %v1675, %v1667
  %v1684 = vmul.f32 %v1676, %v1668
  %v1685 = vmul.f32 %v1677, %v1669
  %v1686 = vmul.f32 %v1678, %v1670
  %v1687 = vmul.f32 %v1679, %v1671
  %v1688 = vmul.f32 %v1680, %v1672
  %v1689 = vmul.f32 %v1681, %v1673
  %v1690 = vmul.f32 %v1682, %v1674
  %v1692 = vrot.slane %v1367, 5
  %v1693 = vrot.slane %v1367, 6
  %v1694 = vrot.slane %v1367, 7
  %v1695 = vrot.slane %v1367, 1
  %v1696 = vrot.slane %v1367, 2
  %v1697 = vrot.slane %v1367, 3
  %v1698 = vrot.slane %v1367, 4
  %v1707 = vmul.f32 %v1619, %v1692
  %v1708 = vmul.f32 %v1621, %v1693
  %v1709 = vmul.f32 %v1623, %v1694
  %v1710 = vmul.f32 %v1625, %v1367
  %v1711 = vmul.f32 %v1627, %v1695
  %v1712 = vmul.f32 %v1629, %v1696
  %v1713 = vmul.f32 %v1631, %v1697
  %v1714 = vmul.f32 %v1633, %v1698
  %v1715 = vadd.f32 %v1683, %v1707
  %v1716 = vadd.f32 %v1684, %v1708
  %v1717 = vadd.f32 %v1685, %v1709
  %v1718 = vadd.f32 %v1686, %v1710
  %v1719 = vadd.f32 %v1687, %v1711
  %v1720 = vadd.f32 %v1688, %v1712
  %v1721 = vadd.f32 %v1689, %v1713
  %v1722 = vadd.f32 %v1690, %v1714
  %s1723 = sadd.s32 %s549, 3
  %v1724 = vstv %s1723
  %vm1725 = vcmp.lt.s32.totalorder %v1724, %v25
  %v1726 = vsel %vm1725, 1, 0
  %1727 = vset.pattern.permute.xlu0 0
  %1728 = vperm.xlu0 %1727, %v1726
  %v1729 = vpop.permute.xlu0 %1728
  %vm1730 = vcmp.eq.s32.totalorder %v1729, 1
  %v1739 = vrot.slane %v1715, 3
  %v1740 = vrot.slane %v1716, 2
  %v1741 = vsel %vm566, %v1740, %v1739
  %v1742 = vrot.slane %v1717, 1
  %v1743 = vsel %vm569, %v1742, %v1741
  %v1744 = vsel %vm572, %v1718, %v1743
  %v1745 = vrot.slane %v1719, 7
  %v1746 = vsel %vm575, %v1745, %v1744
  %v1747 = vrot.slane %v1720, 6
  %v1748 = vsel %vm578, %v1747, %v1746
  %v1749 = vrot.slane %v1721, 5
  %v1750 = vsel %vm581, %v1749, %v1748
  %v1751 = vrot.slane %v1722, 4
  %v1752 = vsel %vm584, %v1751, %v1750
  %v1754 = vsel %vm1730, %v1752, 0.0
  %1755 = vst [vmem:[%s4 + $0x18] sm:$0xff] %v1754
  %v1756 = vsel %vm1730, %v1752, %v1367
  %v1757 = vld [vmem:[%s0] sm:$0x44]
  %v1758 = vld [vmem:[%s0 + $0x8] sm:$0x4]
  %v1759 = vld [vmem:[%s0 + $0xc] sm:$0x44]
  %v1760 = vld [vmem:[%s0 + $0x14] sm:$0x4]
  %v1761 = vld [vmem:[%s0 + $0x18] sm:$0x44]
  %v1762 = vld [vmem:[%s0 + $0x20] sm:$0x4]
  %v1763 = vld [vmem:[%s0 + $0x24] sm:$0x44]
  %v1764 = vld [vmem:[%s0 + $0x2c] sm:$0x4]
  %v1765 = vld [vmem:[%s0 + $0x30] sm:$0x44]
  %v1766 = vld [vmem:[%s0 + $0x38] sm:$0x4]
  %v1767 = vld [vmem:[%s0 + $0x3c] sm:$0x44]
  %v1768 = vld [vmem:[%s0 + $0x44] sm:$0x4]
  %v1769 = vld [vmem:[%s0 + $0x48] sm:$0x44]
  %v1770 = vld [vmem:[%s0 + $0x50] sm:$0x4]
  %v1771 = vld [vmem:[%s0 + $0x54] sm:$0x44]
  %v1772 = vld [vmem:[%s0 + $0x5c] sm:$0x4]
  %v1773 = vunpack.c.l.bf16 %v1757
  %v1774 = vunpack.c.h.bf16 %v1757
  %v1775 = vunpack.c.l.bf16 %v1758
  %v1776 = vunpack.c.l.bf16 %v1759
  %v1777 = vunpack.c.h.bf16 %v1759
  %v1778 = vunpack.c.l.bf16 %v1760
  %v1779 = vunpack.c.l.bf16 %v1761
  %v1780 = vunpack.c.h.bf16 %v1761
  %v1781 = vunpack.c.l.bf16 %v1762
  %v1782 = vunpack.c.l.bf16 %v1763
  %v1783 = vunpack.c.h.bf16 %v1763
  %v1784 = vunpack.c.l.bf16 %v1764
  %v1785 = vunpack.c.l.bf16 %v1765
  %v1786 = vunpack.c.h.bf16 %v1765
  %v1787 = vunpack.c.l.bf16 %v1766
  %v1788 = vunpack.c.l.bf16 %v1767
  %v1789 = vunpack.c.h.bf16 %v1767
  %v1790 = vunpack.c.l.bf16 %v1768
  %v1791 = vunpack.c.l.bf16 %v1769
  %v1792 = vunpack.c.h.bf16 %v1769
  %v1793 = vunpack.c.l.bf16 %v1770
  %v1794 = vunpack.c.l.bf16 %v1771
  %v1795 = vunpack.c.h.bf16 %v1771
  %v1796 = vunpack.c.l.bf16 %v1772
  %v1797 = vpack.c.bf16 %v1756, %v1756
  %1798 = vmatprep.subr.bf16.mxu0 %v188
  %1799 = vmatpush1.bf16.msra.mxu0 %v187
  %1800 = vmatprep.subr.bf16.mxu0 %v191
  %1801 = vmatpush1.bf16.msra.mxu0 %v190
  %1802 = vmatprep.subr.bf16.mxu0 %v194
  %1803 = vmatpush1.bf16.msra.mxu0 %v193
  %1804 = vmatprep.subr.bf16.mxu0 %v197
  %1805 = vmatpush1.bf16.msra.mxu0 %v196
  %1806 = vmatprep.subr.bf16.mxu0 %v200
  %1807 = vmatpush1.bf16.msra.mxu0 %v199
  %1808 = vmatprep.subr.bf16.mxu0 %v203
  %1809 = vmatpush1.bf16.msra.mxu0 %v202
  %1810 = vmatprep.subr.bf16.mxu0 %v206
  %1811 = vmatpush1.bf16.msra.mxu0 %v205
  %1812 = vmatprep.subr.bf16.mxu0 %v209
  %1813 = vmatpush1.bf16.msra.mxu0 %v208
  %1814 = vmatprep.subr.bf16.mxu0 0
  %1815 = vmatpush1.bf16.msra.mxu0 0
  %1816 = vmatprep.subr.bf16.mxu0 0
  %1817 = vmatpush1.bf16.msra.mxu0 0
  %1818 = vmatprep.subr.bf16.mxu0 0
  %1819 = vmatpush1.bf16.msra.mxu0 0
  %1820 = vmatprep.subr.bf16.mxu0 0
  %1821 = vmatpush1.bf16.msra.mxu0 0
  %1822 = vmatprep.subr.bf16.mxu0 0
  %1823 = vmatpush1.bf16.msra.mxu0 0
  %1824 = vmatprep.subr.bf16.mxu0 0
  %1825 = vmatpush1.bf16.msra.mxu0 0
  %1826 = vmatprep.subr.bf16.mxu0 0
  %1827 = vmatpush1.bf16.msra.mxu0 0
  %1828 = vmatprep.subr.bf16.mxu0 0
  %1829 = vmatpush1.bf16.msra.mxu0 0
  %1830 = vmatprep.mubr.bf16.mxu0 0
  %1831 = vmatmul.mubr.bf16.gmra.mrb[0].mxu0 %v1797
  %v1832 = vpop.f32.mrb[0].mxu0
  %v1833 = vadd.f32 0.0, %v1832
  %v1834 = vpop.f32.mrb[0].mxu0
  %v1835 = vadd.f32 0.0, %v1834
  %v1836 = vpop.f32.mrb[0].mxu0
  %v1837 = vpop.f32.mrb[0].mxu0
  %1838 = vdwg.mxu0
  %1839 = vmatprep.subr.bf16.mxu0 0
  %1840 = vmatpush1.bf16.msra.mxu0 %v189
  %1841 = vmatprep.subr.bf16.mxu0 0
  %1842 = vmatpush1.bf16.msra.mxu0 %v192
  %1843 = vmatprep.subr.bf16.mxu0 0
  %1844 = vmatpush1.bf16.msra.mxu0 %v195
  %1845 = vmatprep.subr.bf16.mxu0 0
  %1846 = vmatpush1.bf16.msra.mxu0 %v198
  %1847 = vmatprep.subr.bf16.mxu0 0
  %1848 = vmatpush1.bf16.msra.mxu0 %v201
  %1849 = vmatprep.subr.bf16.mxu0 0
  %1850 = vmatpush1.bf16.msra.mxu0 %v204
  %1851 = vmatprep.subr.bf16.mxu0 0
  %1852 = vmatpush1.bf16.msra.mxu0 %v207
  %1853 = vmatprep.subr.bf16.mxu0 0
  %1854 = vmatpush1.bf16.msra.mxu0 %v210
  %1855 = vmatprep.subr.bf16.mxu0 0
  %1856 = vmatpush1.bf16.msra.mxu0 0
  %1857 = vmatprep.subr.bf16.mxu0 0
  %1858 = vmatpush1.bf16.msra.mxu0 0
  %1859 = vmatprep.subr.bf16.mxu0 0
  %1860 = vmatpush1.bf16.msra.mxu0 0
  %1861 = vmatprep.subr.bf16.mxu0 0
  %1862 = vmatpush1.bf16.msra.mxu0 0
  %1863 = vmatprep.subr.bf16.mxu0 0
  %1864 = vmatpush1.bf16.msra.mxu0 0
  %1865 = vmatprep.subr.bf16.mxu0 0
  %1866 = vmatpush1.bf16.msra.mxu0 0
  %1867 = vmatprep.subr.bf16.mxu0 0
  %1868 = vmatpush1.bf16.msra.mxu0 0
  %1869 = vmatprep.subr.bf16.mxu0 0
  %1870 = vmatpush1.bf16.msra.mxu0 0
  %1871 = vmatprep.mubr.bf16.mxu0 0
  %1872 = vmatmul.mubr.bf16.gmra.mrb[0].mxu0 %v1797
  %v1873 = vpop.f32.mrb[0].mxu0
  %v1874 = vadd.f32 0.0, %v1873
  %v1875 = vpop.f32.mrb[0].mxu0
  %v1876 = vpop.f32.mrb[0].mxu0
  %v1877 = vpop.f32.mrb[0].mxu0
  %1878 = vdwg.mxu0
  %v1880 = vrot.slane %v1833, 4
  %v1881 = vrot.slane %v1833, 5
  %v1882 = vrot.slane %v1833, 6
  %v1883 = vrot.slane %v1833, 7
  %v1884 = vrot.slane %v1833, 1
  %v1885 = vrot.slane %v1833, 2
  %v1886 = vrot.slane %v1833, 3
  %v1895 = vadd.f32 %v1773, %v1880
  %v1896 = vadd.f32 %v1776, %v1881
  %v1897 = vadd.f32 %v1779, %v1882
  %v1898 = vadd.f32 %v1782, %v1883
  %v1899 = vadd.f32 %v1785, %v1833
  %v1900 = vadd.f32 %v1788, %v1884
  %v1901 = vadd.f32 %v1791, %v1885
  %v1902 = vadd.f32 %v1794, %v1886
  %v1903 = vxor.u32 %v1895, 2147483648
  %v1904 = vxor.u32 %v1896, 2147483648
  %v1905 = vxor.u32 %v1897, 2147483648
  %v1906 = vxor.u32 %v1898, 2147483648
  %v1907 = vxor.u32 %v1899, 2147483648
  %v1908 = vxor.u32 %v1900, 2147483648
  %v1909 = vxor.u32 %v1901, 2147483648
  %v1910 = vxor.u32 %v1902, 2147483648
  %v1911 = vmul.f32 %v1903, 1.442695
  %v1912 = vpow.pop %v1911
  %v1913 = vmul.f32 %v1904, 1.442695
  %v1914 = vpow.pop %v1913
  %v1915 = vmul.f32 %v1905, 1.442695
  %v1916 = vpow.pop %v1915
  %v1917 = vmul.f32 %v1906, 1.442695
  %v1918 = vpow.pop %v1917
  %v1919 = vmul.f32 %v1907, 1.442695
  %v1920 = vpow.pop %v1919
  %v1921 = vmul.f32 %v1908, 1.442695
  %v1922 = vpow.pop %v1921
  %v1923 = vmul.f32 %v1909, 1.442695
  %v1924 = vpow.pop %v1923
  %v1925 = vmul.f32 %v1910, 1.442695
  %v1926 = vpow.pop %v1925
  %v1927 = vadd.f32 %v1912, 1.0
  %v1928 = vadd.f32 %v1914, 1.0
  %v1929 = vadd.f32 %v1916, 1.0
  %v1930 = vadd.f32 %v1918, 1.0
  %v1931 = vadd.f32 %v1920, 1.0
  %v1932 = vadd.f32 %v1922, 1.0
  %v1933 = vadd.f32 %v1924, 1.0
  %v1934 = vadd.f32 %v1926, 1.0
  %v1935 = vrcp.pop %v1927
  %v1936 = vmul.f32 1.0, %v1935
  %v1937 = vrcp.pop %v1928
  %v1938 = vmul.f32 1.0, %v1937
  %v1939 = vrcp.pop %v1929
  %v1940 = vmul.f32 1.0, %v1939
  %v1941 = vrcp.pop %v1930
  %v1942 = vmul.f32 1.0, %v1941
  %v1943 = vrcp.pop %v1931
  %v1944 = vmul.f32 1.0, %v1943
  %v1945 = vrcp.pop %v1932
  %v1946 = vmul.f32 1.0, %v1945
  %v1947 = vrcp.pop %v1933
  %v1948 = vmul.f32 1.0, %v1947
  %v1949 = vrcp.pop %v1934
  %v1950 = vmul.f32 1.0, %v1949
  %v1952 = vrot.slane %v1835, 4
  %v1953 = vrot.slane %v1835, 5
  %v1954 = vrot.slane %v1835, 6
  %v1955 = vrot.slane %v1835, 7
  %v1956 = vrot.slane %v1835, 1
  %v1957 = vrot.slane %v1835, 2
  %v1958 = vrot.slane %v1835, 3
  %v1967 = vadd.f32 %v1774, %v1952
  %v1968 = vadd.f32 %v1777, %v1953
  %v1969 = vadd.f32 %v1780, %v1954
  %v1970 = vadd.f32 %v1783, %v1955
  %v1971 = vadd.f32 %v1786, %v1835
  %v1972 = vadd.f32 %v1789, %v1956
  %v1973 = vadd.f32 %v1792, %v1957
  %v1974 = vadd.f32 %v1795, %v1958
  %v1975 = vxor.u32 %v1967, 2147483648
  %v1976 = vxor.u32 %v1968, 2147483648
  %v1977 = vxor.u32 %v1969, 2147483648
  %v1978 = vxor.u32 %v1970, 2147483648
  %v1979 = vxor.u32 %v1971, 2147483648
  %v1980 = vxor.u32 %v1972, 2147483648
  %v1981 = vxor.u32 %v1973, 2147483648
  %v1982 = vxor.u32 %v1974, 2147483648
  %v1983 = vmul.f32 %v1975, 1.442695
  %v1984 = vpow.pop %v1983
  %v1985 = vmul.f32 %v1976, 1.442695
  %v1986 = vpow.pop %v1985
  %v1987 = vmul.f32 %v1977, 1.442695
  %v1988 = vpow.pop %v1987
  %v1989 = vmul.f32 %v1978, 1.442695
  %v1990 = vpow.pop %v1989
  %v1991 = vmul.f32 %v1979, 1.442695
  %v1992 = vpow.pop %v1991
  %v1993 = vmul.f32 %v1980, 1.442695
  %v1994 = vpow.pop %v1993
  %v1995 = vmul.f32 %v1981, 1.442695
  %v1996 = vpow.pop %v1995
  %v1997 = vmul.f32 %v1982, 1.442695
  %v1998 = vpow.pop %v1997
  %v1999 = vadd.f32 %v1984, 1.0
  %v2000 = vadd.f32 %v1986, 1.0
  %v2001 = vadd.f32 %v1988, 1.0
  %v2002 = vadd.f32 %v1990, 1.0
  %v2003 = vadd.f32 %v1992, 1.0
  %v2004 = vadd.f32 %v1994, 1.0
  %v2005 = vadd.f32 %v1996, 1.0
  %v2006 = vadd.f32 %v1998, 1.0
  %v2007 = vrcp.pop %v1999
  %v2008 = vmul.f32 1.0, %v2007
  %v2009 = vrcp.pop %v2000
  %v2010 = vmul.f32 1.0, %v2009
  %v2011 = vrcp.pop %v2001
  %v2012 = vmul.f32 1.0, %v2011
  %v2013 = vrcp.pop %v2002
  %v2014 = vmul.f32 1.0, %v2013
  %v2015 = vrcp.pop %v2003
  %v2016 = vmul.f32 1.0, %v2015
  %v2017 = vrcp.pop %v2004
  %v2018 = vmul.f32 1.0, %v2017
  %v2019 = vrcp.pop %v2005
  %v2020 = vmul.f32 1.0, %v2019
  %v2021 = vrcp.pop %v2006
  %v2022 = vmul.f32 1.0, %v2021
  %v2023 = vadd.f32 %v1874, %v63
  %v2025 = vrot.slane %v2023, 4
  %v2026 = vrot.slane %v2023, 5
  %v2027 = vrot.slane %v2023, 6
  %v2028 = vrot.slane %v2023, 7
  %v2029 = vrot.slane %v2023, 1
  %v2030 = vrot.slane %v2023, 2
  %v2031 = vrot.slane %v2023, 3
  %v2040 = vmul.f32 %v1936, %v2025
  %v2041 = vmul.f32 %v1938, %v2026
  %v2042 = vmul.f32 %v1940, %v2027
  %v2043 = vmul.f32 %v1942, %v2028
  %v2044 = vmul.f32 %v1944, %v2023
  %v2045 = vmul.f32 %v1946, %v2029
  %v2046 = vmul.f32 %v1948, %v2030
  %v2047 = vmul.f32 %v1950, %v2031
  %v2048 = vadd.f32 %v1775, %v2040
  %v2049 = vadd.f32 %v1778, %v2041
  %v2050 = vadd.f32 %v1781, %v2042
  %v2051 = vadd.f32 %v1784, %v2043
  %v2052 = vadd.f32 %v1787, %v2044
  %v2053 = vadd.f32 %v1790, %v2045
  %v2054 = vadd.f32 %v1793, %v2046
  %v2055 = vadd.f32 %v1796, %v2047
  %v2056 = vtanh.pop %v2048
  %v2057 = vtanh.pop %v2049
  %v2058 = vtanh.pop %v2050
  %v2059 = vtanh.pop %v2051
  %v2060 = vtanh.pop %v2052
  %v2061 = vtanh.pop %v2053
  %v2062 = vtanh.pop %v2054
  %v2063 = vtanh.pop %v2055
  %v2064 = vsub.f32 1.0, %v2008
  %v2065 = vsub.f32 1.0, %v2010
  %v2066 = vsub.f32 1.0, %v2012
  %v2067 = vsub.f32 1.0, %v2014
  %v2068 = vsub.f32 1.0, %v2016
  %v2069 = vsub.f32 1.0, %v2018
  %v2070 = vsub.f32 1.0, %v2020
  %v2071 = vsub.f32 1.0, %v2022
  %v2072 = vmul.f32 %v2064, %v2056
  %v2073 = vmul.f32 %v2065, %v2057
  %v2074 = vmul.f32 %v2066, %v2058
  %v2075 = vmul.f32 %v2067, %v2059
  %v2076 = vmul.f32 %v2068, %v2060
  %v2077 = vmul.f32 %v2069, %v2061
  %v2078 = vmul.f32 %v2070, %v2062
  %v2079 = vmul.f32 %v2071, %v2063
  %v2081 = vrot.slane %v1756, 4
  %v2082 = vrot.slane %v1756, 5
  %v2083 = vrot.slane %v1756, 6
  %v2084 = vrot.slane %v1756, 7
  %v2085 = vrot.slane %v1756, 1
  %v2086 = vrot.slane %v1756, 2
  %v2087 = vrot.slane %v1756, 3
  %v2096 = vmul.f32 %v2008, %v2081
  %v2097 = vmul.f32 %v2010, %v2082
  %v2098 = vmul.f32 %v2012, %v2083
  %v2099 = vmul.f32 %v2014, %v2084
  %v2100 = vmul.f32 %v2016, %v1756
  %v2101 = vmul.f32 %v2018, %v2085
  %v2102 = vmul.f32 %v2020, %v2086
  %v2103 = vmul.f32 %v2022, %v2087
  %v2104 = vadd.f32 %v2072, %v2096
  %v2105 = vadd.f32 %v2073, %v2097
  %v2106 = vadd.f32 %v2074, %v2098
  %v2107 = vadd.f32 %v2075, %v2099
  %v2108 = vadd.f32 %v2076, %v2100
  %v2109 = vadd.f32 %v2077, %v2101
  %v2110 = vadd.f32 %v2078, %v2102
  %v2111 = vadd.f32 %v2079, %v2103
  %s2112 = sadd.s32 %s549, 4
  %v2113 = vstv %s2112
  %vm2114 = vcmp.lt.s32.totalorder %v2113, %v25
  %v2115 = vsel %vm2114, 1, 0
  %2116 = vset.pattern.permute.xlu0 0
  %2117 = vperm.xlu0 %2116, %v2115
  %v2118 = vpop.permute.xlu0 %2117
  %vm2119 = vcmp.eq.s32.totalorder %v2118, 1
  %v2128 = vrot.slane %v2104, 4
  %v2129 = vrot.slane %v2105, 3
  %v2130 = vsel %vm566, %v2129, %v2128
  %v2131 = vrot.slane %v2106, 2
  %v2132 = vsel %vm569, %v2131, %v2130
  %v2133 = vrot.slane %v2107, 1
  %v2134 = vsel %vm572, %v2133, %v2132
  %v2135 = vsel %vm575, %v2108, %v2134
  %v2136 = vrot.slane %v2109, 7
  %v2137 = vsel %vm578, %v2136, %v2135
  %v2138 = vrot.slane %v2110, 6
  %v2139 = vsel %vm581, %v2138, %v2137
  %v2140 = vrot.slane %v2111, 5
  %v2141 = vsel %vm584, %v2140, %v2139
  %v2143 = vsel %vm2119, %v2141, 0.0
  %2144 = vst [vmem:[%s4 + $0x20] sm:$0xff] %v2143
  %v2145 = vsel %vm2119, %v2141, %v1756
  %v2146 = vld [vmem:[%s0] sm:$0x44]
  %v2147 = vld [vmem:[%s0 + $0x8] sm:$0x4]
  %v2148 = vld [vmem:[%s0 + $0xc] sm:$0x44]
  %v2149 = vld [vmem:[%s0 + $0x14] sm:$0x4]
  %v2150 = vld [vmem:[%s0 + $0x18] sm:$0x44]
  %v2151 = vld [vmem:[%s0 + $0x20] sm:$0x4]
  %v2152 = vld [vmem:[%s0 + $0x24] sm:$0x44]
  %v2153 = vld [vmem:[%s0 + $0x2c] sm:$0x4]
  %v2154 = vld [vmem:[%s0 + $0x30] sm:$0x44]
  %v2155 = vld [vmem:[%s0 + $0x38] sm:$0x4]
  %v2156 = vld [vmem:[%s0 + $0x3c] sm:$0x44]
  %v2157 = vld [vmem:[%s0 + $0x44] sm:$0x4]
  %v2158 = vld [vmem:[%s0 + $0x48] sm:$0x44]
  %v2159 = vld [vmem:[%s0 + $0x50] sm:$0x4]
  %v2160 = vld [vmem:[%s0 + $0x54] sm:$0x44]
  %v2161 = vld [vmem:[%s0 + $0x5c] sm:$0x4]
  %v2162 = vunpack.c.l.bf16 %v2146
  %v2163 = vunpack.c.h.bf16 %v2146
  %v2164 = vunpack.c.l.bf16 %v2147
  %v2165 = vunpack.c.l.bf16 %v2148
  %v2166 = vunpack.c.h.bf16 %v2148
  %v2167 = vunpack.c.l.bf16 %v2149
  %v2168 = vunpack.c.l.bf16 %v2150
  %v2169 = vunpack.c.h.bf16 %v2150
  %v2170 = vunpack.c.l.bf16 %v2151
  %v2171 = vunpack.c.l.bf16 %v2152
  %v2172 = vunpack.c.h.bf16 %v2152
  %v2173 = vunpack.c.l.bf16 %v2153
  %v2174 = vunpack.c.l.bf16 %v2154
  %v2175 = vunpack.c.h.bf16 %v2154
  %v2176 = vunpack.c.l.bf16 %v2155
  %v2177 = vunpack.c.l.bf16 %v2156
  %v2178 = vunpack.c.h.bf16 %v2156
  %v2179 = vunpack.c.l.bf16 %v2157
  %v2180 = vunpack.c.l.bf16 %v2158
  %v2181 = vunpack.c.h.bf16 %v2158
  %v2182 = vunpack.c.l.bf16 %v2159
  %v2183 = vunpack.c.l.bf16 %v2160
  %v2184 = vunpack.c.h.bf16 %v2160
  %v2185 = vunpack.c.l.bf16 %v2161
  %v2186 = vpack.c.bf16 %v2145, %v2145
  %2187 = vmatprep.subr.bf16.mxu0 %v188
  %2188 = vmatpush1.bf16.msra.mxu0 %v187
  %2189 = vmatprep.subr.bf16.mxu0 %v191
  %2190 = vmatpush1.bf16.msra.mxu0 %v190
  %2191 = vmatprep.subr.bf16.mxu0 %v194
  %2192 = vmatpush1.bf16.msra.mxu0 %v193
  %2193 = vmatprep.subr.bf16.mxu0 %v197
  %2194 = vmatpush1.bf16.msra.mxu0 %v196
  %2195 = vmatprep.subr.bf16.mxu0 %v200
  %2196 = vmatpush1.bf16.msra.mxu0 %v199
  %2197 = vmatprep.subr.bf16.mxu0 %v203
  %2198 = vmatpush1.bf16.msra.mxu0 %v202
  %2199 = vmatprep.subr.bf16.mxu0 %v206
  %2200 = vmatpush1.bf16.msra.mxu0 %v205
  %2201 = vmatprep.subr.bf16.mxu0 %v209
  %2202 = vmatpush1.bf16.msra.mxu0 %v208
  %2203 = vmatprep.subr.bf16.mxu0 0
  %2204 = vmatpush1.bf16.msra.mxu0 0
  %2205 = vmatprep.subr.bf16.mxu0 0
  %2206 = vmatpush1.bf16.msra.mxu0 0
  %2207 = vmatprep.subr.bf16.mxu0 0
  %2208 = vmatpush1.bf16.msra.mxu0 0
  %2209 = vmatprep.subr.bf16.mxu0 0
  %2210 = vmatpush1.bf16.msra.mxu0 0
  %2211 = vmatprep.subr.bf16.mxu0 0
  %2212 = vmatpush1.bf16.msra.mxu0 0
  %2213 = vmatprep.subr.bf16.mxu0 0
  %2214 = vmatpush1.bf16.msra.mxu0 0
  %2215 = vmatprep.subr.bf16.mxu0 0
  %2216 = vmatpush1.bf16.msra.mxu0 0
  %2217 = vmatprep.subr.bf16.mxu0 0
  %2218 = vmatpush1.bf16.msra.mxu0 0
  %2219 = vmatprep.mubr.bf16.mxu0 0
  %2220 = vmatmul.mubr.bf16.gmra.mrb[0].mxu0 %v2186
  %v2221 = vpop.f32.mrb[0].mxu0
  %v2222 = vadd.f32 0.0, %v2221
  %v2223 = vpop.f32.mrb[0].mxu0
  %v2224 = vadd.f32 0.0, %v2223
  %v2225 = vpop.f32.mrb[0].mxu0
  %v2226 = vpop.f32.mrb[0].mxu0
  %2227 = vdwg.mxu0
  %2228 = vmatprep.subr.bf16.mxu0 0
  %2229 = vmatpush1.bf16.msra.mxu0 %v189
  %2230 = vmatprep.subr.bf16.mxu0 0
  %2231 = vmatpush1.bf16.msra.mxu0 %v192
  %2232 = vmatprep.subr.bf16.mxu0 0
  %2233 = vmatpush1.bf16.msra.mxu0 %v195
  %2234 = vmatprep.subr.bf16.mxu0 0
  %2235 = vmatpush1.bf16.msra.mxu0 %v198
  %2236 = vmatprep.subr.bf16.mxu0 0
  %2237 = vmatpush1.bf16.msra.mxu0 %v201
  %2238 = vmatprep.subr.bf16.mxu0 0
  %2239 = vmatpush1.bf16.msra.mxu0 %v204
  %2240 = vmatprep.subr.bf16.mxu0 0
  %2241 = vmatpush1.bf16.msra.mxu0 %v207
  %2242 = vmatprep.subr.bf16.mxu0 0
  %2243 = vmatpush1.bf16.msra.mxu0 %v210
  %2244 = vmatprep.subr.bf16.mxu0 0
  %2245 = vmatpush1.bf16.msra.mxu0 0
  %2246 = vmatprep.subr.bf16.mxu0 0
  %2247 = vmatpush1.bf16.msra.mxu0 0
  %2248 = vmatprep.subr.bf16.mxu0 0
  %2249 = vmatpush1.bf16.msra.mxu0 0
  %2250 = vmatprep.subr.bf16.mxu0 0
  %2251 = vmatpush1.bf16.msra.mxu0 0
  %2252 = vmatprep.subr.bf16.mxu0 0
  %2253 = vmatpush1.bf16.msra.mxu0 0
  %2254 = vmatprep.subr.bf16.mxu0 0
  %2255 = vmatpush1.bf16.msra.mxu0 0
  %2256 = vmatprep.subr.bf16.mxu0 0
  %2257 = vmatpush1.bf16.msra.mxu0 0
  %2258 = vmatprep.subr.bf16.mxu0 0
  %2259 = vmatpush1.bf16.msra.mxu0 0
  %2260 = vmatprep.mubr.bf16.mxu0 0
  %2261 = vmatmul.mubr.bf16.gmra.mrb[0].mxu0 %v2186
  %v2262 = vpop.f32.mrb[0].mxu0
  %v2263 = vadd.f32 0.0, %v2262
  %v2264 = vpop.f32.mrb[0].mxu0
  %v2265 = vpop.f32.mrb[0].mxu0
  %v2266 = vpop.f32.mrb[0].mxu0
  %2267 = vdwg.mxu0
  %v2269 = vrot.slane %v2222, 3
  %v2270 = vrot.slane %v2222, 4
  %v2271 = vrot.slane %v2222, 5
  %v2272 = vrot.slane %v2222, 6
  %v2273 = vrot.slane %v2222, 7
  %v2274 = vrot.slane %v2222, 1
  %v2275 = vrot.slane %v2222, 2
  %v2284 = vadd.f32 %v2162, %v2269
  %v2285 = vadd.f32 %v2165, %v2270
  %v2286 = vadd.f32 %v2168, %v2271
  %v2287 = vadd.f32 %v2171, %v2272
  %v2288 = vadd.f32 %v2174, %v2273
  %v2289 = vadd.f32 %v2177, %v2222
  %v2290 = vadd.f32 %v2180, %v2274
  %v2291 = vadd.f32 %v2183, %v2275
  %v2292 = vxor.u32 %v2284, 2147483648
  %v2293 = vxor.u32 %v2285, 2147483648
  %v2294 = vxor.u32 %v2286, 2147483648
  %v2295 = vxor.u32 %v2287, 2147483648
  %v2296 = vxor.u32 %v2288, 2147483648
  %v2297 = vxor.u32 %v2289, 2147483648
  %v2298 = vxor.u32 %v2290, 2147483648
  %v2299 = vxor.u32 %v2291, 2147483648
  %v2300 = vmul.f32 %v2292, 1.442695
  %v2301 = vpow.pop %v2300
  %v2302 = vmul.f32 %v2293, 1.442695
  %v2303 = vpow.pop %v2302
  %v2304 = vmul.f32 %v2294, 1.442695
  %v2305 = vpow.pop %v2304
  %v2306 = vmul.f32 %v2295, 1.442695
  %v2307 = vpow.pop %v2306
  %v2308 = vmul.f32 %v2296, 1.442695
  %v2309 = vpow.pop %v2308
  %v2310 = vmul.f32 %v2297, 1.442695
  %v2311 = vpow.pop %v2310
  %v2312 = vmul.f32 %v2298, 1.442695
  %v2313 = vpow.pop %v2312
  %v2314 = vmul.f32 %v2299, 1.442695
  %v2315 = vpow.pop %v2314
  %v2316 = vadd.f32 %v2301, 1.0
  %v2317 = vadd.f32 %v2303, 1.0
  %v2318 = vadd.f32 %v2305, 1.0
  %v2319 = vadd.f32 %v2307, 1.0
  %v2320 = vadd.f32 %v2309, 1.0
  %v2321 = vadd.f32 %v2311, 1.0
  %v2322 = vadd.f32 %v2313, 1.0
  %v2323 = vadd.f32 %v2315, 1.0
  %v2324 = vrcp.pop %v2316
  %v2325 = vmul.f32 1.0, %v2324
  %v2326 = vrcp.pop %v2317
  %v2327 = vmul.f32 1.0, %v2326
  %v2328 = vrcp.pop %v2318
  %v2329 = vmul.f32 1.0, %v2328
  %v2330 = vrcp.pop %v2319
  %v2331 = vmul.f32 1.0, %v2330
  %v2332 = vrcp.pop %v2320
  %v2333 = vmul.f32 1.0, %v2332
  %v2334 = vrcp.pop %v2321
  %v2335 = vmul.f32 1.0, %v2334
  %v2336 = vrcp.pop %v2322
  %v2337 = vmul.f32 1.0, %v2336
  %v2338 = vrcp.pop %v2323
  %v2339 = vmul.f32 1.0, %v2338
  %v2341 = vrot.slane %v2224, 3
  %v2342 = vrot.slane %v2224, 4
  %v2343 = vrot.slane %v2224, 5
  %v2344 = vrot.slane %v2224, 6
  %v2345 = vrot.slane %v2224, 7
  %v2346 = vrot.slane %v2224, 1
  %v2347 = vrot.slane %v2224, 2
  %v2356 = vadd.f32 %v2163, %v2341
  %v2357 = vadd.f32 %v2166, %v2342
  %v2358 = vadd.f32 %v2169, %v2343
  %v2359 = vadd.f32 %v2172, %v2344
  %v2360 = vadd.f32 %v2175, %v2345
  %v2361 = vadd.f32 %v2178, %v2224
  %v2362 = vadd.f32 %v2181, %v2346
  %v2363 = vadd.f32 %v2184, %v2347
  %v2364 = vxor.u32 %v2356, 2147483648
  %v2365 = vxor.u32 %v2357, 2147483648
  %v2366 = vxor.u32 %v2358, 2147483648
  %v2367 = vxor.u32 %v2359, 2147483648
  %v2368 = vxor.u32 %v2360, 2147483648
  %v2369 = vxor.u32 %v2361, 2147483648
  %v2370 = vxor.u32 %v2362, 2147483648
  %v2371 = vxor.u32 %v2363, 2147483648
  %v2372 = vmul.f32 %v2364, 1.442695
  %v2373 = vpow.pop %v2372
  %v2374 = vmul.f32 %v2365, 1.442695
  %v2375 = vpow.pop %v2374
  %v2376 = vmul.f32 %v2366, 1.442695
  %v2377 = vpow.pop %v2376
  %v2378 = vmul.f32 %v2367, 1.442695
  %v2379 = vpow.pop %v2378
  %v2380 = vmul.f32 %v2368, 1.442695
  %v2381 = vpow.pop %v2380
  %v2382 = vmul.f32 %v2369, 1.442695
  %v2383 = vpow.pop %v2382
  %v2384 = vmul.f32 %v2370, 1.442695
  %v2385 = vpow.pop %v2384
  %v2386 = vmul.f32 %v2371, 1.442695
  %v2387 = vpow.pop %v2386
  %v2388 = vadd.f32 %v2373, 1.0
  %v2389 = vadd.f32 %v2375, 1.0
  %v2390 = vadd.f32 %v2377, 1.0
  %v2391 = vadd.f32 %v2379, 1.0
  %v2392 = vadd.f32 %v2381, 1.0
  %v2393 = vadd.f32 %v2383, 1.0
  %v2394 = vadd.f32 %v2385, 1.0
  %v2395 = vadd.f32 %v2387, 1.0
  %v2396 = vrcp.pop %v2388
  %v2397 = vmul.f32 1.0, %v2396
  %v2398 = vrcp.pop %v2389
  %v2399 = vmul.f32 1.0, %v2398
  %v2400 = vrcp.pop %v2390
  %v2401 = vmul.f32 1.0, %v2400
  %v2402 = vrcp.pop %v2391
  %v2403 = vmul.f32 1.0, %v2402
  %v2404 = vrcp.pop %v2392
  %v2405 = vmul.f32 1.0, %v2404
  %v2406 = vrcp.pop %v2393
  %v2407 = vmul.f32 1.0, %v2406
  %v2408 = vrcp.pop %v2394
  %v2409 = vmul.f32 1.0, %v2408
  %v2410 = vrcp.pop %v2395
  %v2411 = vmul.f32 1.0, %v2410
  %v2412 = vadd.f32 %v2263, %v63
  %v2414 = vrot.slane %v2412, 3
  %v2415 = vrot.slane %v2412, 4
  %v2416 = vrot.slane %v2412, 5
  %v2417 = vrot.slane %v2412, 6
  %v2418 = vrot.slane %v2412, 7
  %v2419 = vrot.slane %v2412, 1
  %v2420 = vrot.slane %v2412, 2
  %v2429 = vmul.f32 %v2325, %v2414
  %v2430 = vmul.f32 %v2327, %v2415
  %v2431 = vmul.f32 %v2329, %v2416
  %v2432 = vmul.f32 %v2331, %v2417
  %v2433 = vmul.f32 %v2333, %v2418
  %v2434 = vmul.f32 %v2335, %v2412
  %v2435 = vmul.f32 %v2337, %v2419
  %v2436 = vmul.f32 %v2339, %v2420
  %v2437 = vadd.f32 %v2164, %v2429
  %v2438 = vadd.f32 %v2167, %v2430
  %v2439 = vadd.f32 %v2170, %v2431
  %v2440 = vadd.f32 %v2173, %v2432
  %v2441 = vadd.f32 %v2176, %v2433
  %v2442 = vadd.f32 %v2179, %v2434
  %v2443 = vadd.f32 %v2182, %v2435
  %v2444 = vadd.f32 %v2185, %v2436
  %v2445 = vtanh.pop %v2437
  %v2446 = vtanh.pop %v2438
  %v2447 = vtanh.pop %v2439
  %v2448 = vtanh.pop %v2440
  %v2449 = vtanh.pop %v2441
  %v2450 = vtanh.pop %v2442
  %v2451 = vtanh.pop %v2443
  %v2452 = vtanh.pop %v2444
  %v2453 = vsub.f32 1.0, %v2397
  %v2454 = vsub.f32 1.0, %v2399
  %v2455 = vsub.f32 1.0, %v2401
  %v2456 = vsub.f32 1.0, %v2403
  %v2457 = vsub.f32 1.0, %v2405
  %v2458 = vsub.f32 1.0, %v2407
  %v2459 = vsub.f32 1.0, %v2409
  %v2460 = vsub.f32 1.0, %v2411
  %v2461 = vmul.f32 %v2453, %v2445
  %v2462 = vmul.f32 %v2454, %v2446
  %v2463 = vmul.f32 %v2455, %v2447
  %v2464 = vmul.f32 %v2456, %v2448
  %v2465 = vmul.f32 %v2457, %v2449
  %v2466 = vmul.f32 %v2458, %v2450
  %v2467 = vmul.f32 %v2459, %v2451
  %v2468 = vmul.f32 %v2460, %v2452
  %v2470 = vrot.slane %v2145, 3
  %v2471 = vrot.slane %v2145, 4
  %v2472 = vrot.slane %v2145, 5
  %v2473 = vrot.slane %v2145, 6
  %v2474 = vrot.slane %v2145, 7
  %v2475 = vrot.slane %v2145, 1
  %v2476 = vrot.slane %v2145, 2
  %v2485 = vmul.f32 %v2397, %v2470
  %v2486 = vmul.f32 %v2399, %v2471
  %v2487 = vmul.f32 %v2401, %v2472
  %v2488 = vmul.f32 %v2403, %v2473
  %v2489 = vmul.f32 %v2405, %v2474
  %v2490 = vmul.f32 %v2407, %v2145
  %v2491 = vmul.f32 %v2409, %v2475
  %v2492 = vmul.f32 %v2411, %v2476
  %v2493 = vadd.f32 %v2461, %v2485
  %v2494 = vadd.f32 %v2462, %v2486
  %v2495 = vadd.f32 %v2463, %v2487
  %v2496 = vadd.f32 %v2464, %v2488
  %v2497 = vadd.f32 %v2465, %v2489
  %v2498 = vadd.f32 %v2466, %v2490
  %v2499 = vadd.f32 %v2467, %v2491
  %v2500 = vadd.f32 %v2468, %v2492
  %s2501 = sadd.s32 %s549, 5
  %v2502 = vstv %s2501
  %vm2503 = vcmp.lt.s32.totalorder %v2502, %v25
  %v2504 = vsel %vm2503, 1, 0
  %2505 = vset.pattern.permute.xlu0 0
  %2506 = vperm.xlu0 %2505, %v2504
  %v2507 = vpop.permute.xlu0 %2506
  %vm2508 = vcmp.eq.s32.totalorder %v2507, 1
  %v2517 = vrot.slane %v2493, 5
  %v2518 = vrot.slane %v2494, 4
  %v2519 = vsel %vm566, %v2518, %v2517
  %v2520 = vrot.slane %v2495, 3
  %v2521 = vsel %vm569, %v2520, %v2519
  %v2522 = vrot.slane %v2496, 2
  %v2523 = vsel %vm572, %v2522, %v2521
  %v2524 = vrot.slane %v2497, 1
  %v2525 = vsel %vm575, %v2524, %v2523
  %v2526 = vsel %vm578, %v2498, %v2525
  %v2527 = vrot.slane %v2499, 7
  %v2528 = vsel %vm581, %v2527, %v2526
  %v2529 = vrot.slane %v2500, 6
  %v2530 = vsel %vm584, %v2529, %v2528
  %v2532 = vsel %vm2508, %v2530, 0.0
  %2533 = vst [vmem:[%s4 + $0x28] sm:$0xff] %v2532
  %v2534 = vsel %vm2508, %v2530, %v2145
  %v2535 = vld [vmem:[%s0] sm:$0x88]
  %v2536 = vld [vmem:[%s0 + $0x8] sm:$0x8]
  %v2537 = vld [vmem:[%s0 + $0xc] sm:$0x88]
  %v2538 = vld [vmem:[%s0 + $0x14] sm:$0x8]
  %v2539 = vld [vmem:[%s0 + $0x18] sm:$0x88]
  %v2540 = vld [vmem:[%s0 + $0x20] sm:$0x8]
  %v2541 = vld [vmem:[%s0 + $0x24] sm:$0x88]
  %v2542 = vld [vmem:[%s0 + $0x2c] sm:$0x8]
  %v2543 = vld [vmem:[%s0 + $0x30] sm:$0x88]
  %v2544 = vld [vmem:[%s0 + $0x38] sm:$0x8]
  %v2545 = vld [vmem:[%s0 + $0x3c] sm:$0x88]
  %v2546 = vld [vmem:[%s0 + $0x44] sm:$0x8]
  %v2547 = vld [vmem:[%s0 + $0x48] sm:$0x88]
  %v2548 = vld [vmem:[%s0 + $0x50] sm:$0x8]
  %v2549 = vld [vmem:[%s0 + $0x54] sm:$0x88]
  %v2550 = vld [vmem:[%s0 + $0x5c] sm:$0x8]
  %v2551 = vunpack.c.l.bf16 %v2535
  %v2552 = vunpack.c.h.bf16 %v2535
  %v2553 = vunpack.c.l.bf16 %v2536
  %v2554 = vunpack.c.l.bf16 %v2537
  %v2555 = vunpack.c.h.bf16 %v2537
  %v2556 = vunpack.c.l.bf16 %v2538
  %v2557 = vunpack.c.l.bf16 %v2539
  %v2558 = vunpack.c.h.bf16 %v2539
  %v2559 = vunpack.c.l.bf16 %v2540
  %v2560 = vunpack.c.l.bf16 %v2541
  %v2561 = vunpack.c.h.bf16 %v2541
  %v2562 = vunpack.c.l.bf16 %v2542
  %v2563 = vunpack.c.l.bf16 %v2543
  %v2564 = vunpack.c.h.bf16 %v2543
  %v2565 = vunpack.c.l.bf16 %v2544
  %v2566 = vunpack.c.l.bf16 %v2545
  %v2567 = vunpack.c.h.bf16 %v2545
  %v2568 = vunpack.c.l.bf16 %v2546
  %v2569 = vunpack.c.l.bf16 %v2547
  %v2570 = vunpack.c.h.bf16 %v2547
  %v2571 = vunpack.c.l.bf16 %v2548
  %v2572 = vunpack.c.l.bf16 %v2549
  %v2573 = vunpack.c.h.bf16 %v2549
  %v2574 = vunpack.c.l.bf16 %v2550
  %v2575 = vpack.c.bf16 %v2534, %v2534
  %2576 = vmatprep.subr.bf16.mxu0 %v188
  %2577 = vmatpush1.bf16.msra.mxu0 %v187
  %2578 = vmatprep.subr.bf16.mxu0 %v191
  %2579 = vmatpush1.bf16.msra.mxu0 %v190
  %2580 = vmatprep.subr.bf16.mxu0 %v194
  %2581 = vmatpush1.bf16.msra.mxu0 %v193
  %2582 = vmatprep.subr.bf16.mxu0 %v197
  %2583 = vmatpush1.bf16.msra.mxu0 %v196
  %2584 = vmatprep.subr.bf16.mxu0 %v200
  %2585 = vmatpush1.bf16.msra.mxu0 %v199
  %2586 = vmatprep.subr.bf16.mxu0 %v203
  %2587 = vmatpush1.bf16.msra.mxu0 %v202
  %2588 = vmatprep.subr.bf16.mxu0 %v206
  %2589 = vmatpush1.bf16.msra.mxu0 %v205
  %2590 = vmatprep.subr.bf16.mxu0 %v209
  %2591 = vmatpush1.bf16.msra.mxu0 %v208
  %2592 = vmatprep.subr.bf16.mxu0 0
  %2593 = vmatpush1.bf16.msra.mxu0 0
  %2594 = vmatprep.subr.bf16.mxu0 0
  %2595 = vmatpush1.bf16.msra.mxu0 0
  %2596 = vmatprep.subr.bf16.mxu0 0
  %2597 = vmatpush1.bf16.msra.mxu0 0
  %2598 = vmatprep.subr.bf16.mxu0 0
  %2599 = vmatpush1.bf16.msra.mxu0 0
  %2600 = vmatprep.subr.bf16.mxu0 0
  %2601 = vmatpush1.bf16.msra.mxu0 0
  %2602 = vmatprep.subr.bf16.mxu0 0
  %2603 = vmatpush1.bf16.msra.mxu0 0
  %2604 = vmatprep.subr.bf16.mxu0 0
  %2605 = vmatpush1.bf16.msra.mxu0 0
  %2606 = vmatprep.subr.bf16.mxu0 0
  %2607 = vmatpush1.bf16.msra.mxu0 0
  %2608 = vmatprep.mubr.bf16.mxu0 0
  %2609 = vmatmul.mubr.bf16.gmra.mrb[0].mxu0 %v2575
  %v2610 = vpop.f32.mrb[0].mxu0
  %v2611 = vadd.f32 0.0, %v2610
  %v2612 = vpop.f32.mrb[0].mxu0
  %v2613 = vadd.f32 0.0, %v2612
  %v2614 = vpop.f32.mrb[0].mxu0
  %v2615 = vpop.f32.mrb[0].mxu0
  %2616 = vdwg.mxu0
  %2617 = vmatprep.subr.bf16.mxu0 0
  %2618 = vmatpush1.bf16.msra.mxu0 %v189
  %2619 = vmatprep.subr.bf16.mxu0 0
  %2620 = vmatpush1.bf16.msra.mxu0 %v192
  %2621 = vmatprep.subr.bf16.mxu0 0
  %2622 = vmatpush1.bf16.msra.mxu0 %v195
  %2623 = vmatprep.subr.bf16.mxu0 0
  %2624 = vmatpush1.bf16.msra.mxu0 %v198
  %2625 = vmatprep.subr.bf16.mxu0 0
  %2626 = vmatpush1.bf16.msra.mxu0 %v201
  %2627 = vmatprep.subr.bf16.mxu0 0
  %2628 = vmatpush1.bf16.msra.mxu0 %v204
  %2629 = vmatprep.subr.bf16.mxu0 0
  %2630 = vmatpush1.bf16.msra.mxu0 %v207
  %2631 = vmatprep.subr.bf16.mxu0 0
  %2632 = vmatpush1.bf16.msra.mxu0 %v210
  %2633 = vmatprep.subr.bf16.mxu0 0
  %2634 = vmatpush1.bf16.msra.mxu0 0
  %2635 = vmatprep.subr.bf16.mxu0 0
  %2636 = vmatpush1.bf16.msra.mxu0 0
  %2637 = vmatprep.subr.bf16.mxu0 0
  %2638 = vmatpush1.bf16.msra.mxu0 0
  %2639 = vmatprep.subr.bf16.mxu0 0
  %2640 = vmatpush1.bf16.msra.mxu0 0
  %2641 = vmatprep.subr.bf16.mxu0 0
  %2642 = vmatpush1.bf16.msra.mxu0 0
  %2643 = vmatprep.subr.bf16.mxu0 0
  %2644 = vmatpush1.bf16.msra.mxu0 0
  %2645 = vmatprep.subr.bf16.mxu0 0
  %2646 = vmatpush1.bf16.msra.mxu0 0
  %2647 = vmatprep.subr.bf16.mxu0 0
  %2648 = vmatpush1.bf16.msra.mxu0 0
  %2649 = vmatprep.mubr.bf16.mxu0 0
  %2650 = vmatmul.mubr.bf16.gmra.mrb[0].mxu0 %v2575
  %v2651 = vpop.f32.mrb[0].mxu0
  %v2652 = vadd.f32 0.0, %v2651
  %v2653 = vpop.f32.mrb[0].mxu0
  %v2654 = vpop.f32.mrb[0].mxu0
  %v2655 = vpop.f32.mrb[0].mxu0
  %2656 = vdwg.mxu0
  %v2658 = vrot.slane %v2611, 2
  %v2659 = vrot.slane %v2611, 3
  %v2660 = vrot.slane %v2611, 4
  %v2661 = vrot.slane %v2611, 5
  %v2662 = vrot.slane %v2611, 6
  %v2663 = vrot.slane %v2611, 7
  %v2664 = vrot.slane %v2611, 1
  %v2673 = vadd.f32 %v2551, %v2658
  %v2674 = vadd.f32 %v2554, %v2659
  %v2675 = vadd.f32 %v2557, %v2660
  %v2676 = vadd.f32 %v2560, %v2661
  %v2677 = vadd.f32 %v2563, %v2662
  %v2678 = vadd.f32 %v2566, %v2663
  %v2679 = vadd.f32 %v2569, %v2611
  %v2680 = vadd.f32 %v2572, %v2664
  %v2681 = vxor.u32 %v2673, 2147483648
  %v2682 = vxor.u32 %v2674, 2147483648
  %v2683 = vxor.u32 %v2675, 2147483648
  %v2684 = vxor.u32 %v2676, 2147483648
  %v2685 = vxor.u32 %v2677, 2147483648
  %v2686 = vxor.u32 %v2678, 2147483648
  %v2687 = vxor.u32 %v2679, 2147483648
  %v2688 = vxor.u32 %v2680, 2147483648
  %v2689 = vmul.f32 %v2681, 1.442695
  %v2690 = vpow.pop %v2689
  %v2691 = vmul.f32 %v2682, 1.442695
  %v2692 = vpow.pop %v2691
  %v2693 = vmul.f32 %v2683, 1.442695
  %v2694 = vpow.pop %v2693
  %v2695 = vmul.f32 %v2684, 1.442695
  %v2696 = vpow.pop %v2695
  %v2697 = vmul.f32 %v2685, 1.442695
  %v2698 = vpow.pop %v2697
  %v2699 = vmul.f32 %v2686, 1.442695
  %v2700 = vpow.pop %v2699
  %v2701 = vmul.f32 %v2687, 1.442695
  %v2702 = vpow.pop %v2701
  %v2703 = vmul.f32 %v2688, 1.442695
  %v2704 = vpow.pop %v2703
  %v2705 = vadd.f32 %v2690, 1.0
  %v2706 = vadd.f32 %v2692, 1.0
  %v2707 = vadd.f32 %v2694, 1.0
  %v2708 = vadd.f32 %v2696, 1.0
  %v2709 = vadd.f32 %v2698, 1.0
  %v2710 = vadd.f32 %v2700, 1.0
  %v2711 = vadd.f32 %v2702, 1.0
  %v2712 = vadd.f32 %v2704, 1.0
  %v2713 = vrcp.pop %v2705
  %v2714 = vmul.f32 1.0, %v2713
  %v2715 = vrcp.pop %v2706
  %v2716 = vmul.f32 1.0, %v2715
  %v2717 = vrcp.pop %v2707
  %v2718 = vmul.f32 1.0, %v2717
  %v2719 = vrcp.pop %v2708
  %v2720 = vmul.f32 1.0, %v2719
  %v2721 = vrcp.pop %v2709
  %v2722 = vmul.f32 1.0, %v2721
  %v2723 = vrcp.pop %v2710
  %v2724 = vmul.f32 1.0, %v2723
  %v2725 = vrcp.pop %v2711
  %v2726 = vmul.f32 1.0, %v2725
  %v2727 = vrcp.pop %v2712
  %v2728 = vmul.f32 1.0, %v2727
  %v2730 = vrot.slane %v2613, 2
  %v2731 = vrot.slane %v2613, 3
  %v2732 = vrot.slane %v2613, 4
  %v2733 = vrot.slane %v2613, 5
  %v2734 = vrot.slane %v2613, 6
  %v2735 = vrot.slane %v2613, 7
  %v2736 = vrot.slane %v2613, 1
  %v2745 = vadd.f32 %v2552, %v2730
  %v2746 = vadd.f32 %v2555, %v2731
  %v2747 = vadd.f32 %v2558, %v2732
  %v2748 = vadd.f32 %v2561, %v2733
  %v2749 = vadd.f32 %v2564, %v2734
  %v2750 = vadd.f32 %v2567, %v2735
  %v2751 = vadd.f32 %v2570, %v2613
  %v2752 = vadd.f32 %v2573, %v2736
  %v2753 = vxor.u32 %v2745, 2147483648
  %v2754 = vxor.u32 %v2746, 2147483648
  %v2755 = vxor.u32 %v2747, 2147483648
  %v2756 = vxor.u32 %v2748, 2147483648
  %v2757 = vxor.u32 %v2749, 2147483648
  %v2758 = vxor.u32 %v2750, 2147483648
  %v2759 = vxor.u32 %v2751, 2147483648
  %v2760 = vxor.u32 %v2752, 2147483648
  %v2761 = vmul.f32 %v2753, 1.442695
  %v2762 = vpow.pop %v2761
  %v2763 = vmul.f32 %v2754, 1.442695
  %v2764 = vpow.pop %v2763
  %v2765 = vmul.f32 %v2755, 1.442695
  %v2766 = vpow.pop %v2765
  %v2767 = vmul.f32 %v2756, 1.442695
  %v2768 = vpow.pop %v2767
  %v2769 = vmul.f32 %v2757, 1.442695
  %v2770 = vpow.pop %v2769
  %v2771 = vmul.f32 %v2758, 1.442695
  %v2772 = vpow.pop %v2771
  %v2773 = vmul.f32 %v2759, 1.442695
  %v2774 = vpow.pop %v2773
  %v2775 = vmul.f32 %v2760, 1.442695
  %v2776 = vpow.pop %v2775
  %v2777 = vadd.f32 %v2762, 1.0
  %v2778 = vadd.f32 %v2764, 1.0
  %v2779 = vadd.f32 %v2766, 1.0
  %v2780 = vadd.f32 %v2768, 1.0
  %v2781 = vadd.f32 %v2770, 1.0
  %v2782 = vadd.f32 %v2772, 1.0
  %v2783 = vadd.f32 %v2774, 1.0
  %v2784 = vadd.f32 %v2776, 1.0
  %v2785 = vrcp.pop %v2777
  %v2786 = vmul.f32 1.0, %v2785
  %v2787 = vrcp.pop %v2778
  %v2788 = vmul.f32 1.0, %v2787
  %v2789 = vrcp.pop %v2779
  %v2790 = vmul.f32 1.0, %v2789
  %v2791 = vrcp.pop %v2780
  %v2792 = vmul.f32 1.0, %v2791
  %v2793 = vrcp.pop %v2781
  %v2794 = vmul.f32 1.0, %v2793
  %v2795 = vrcp.pop %v2782
  %v2796 = vmul.f32 1.0, %v2795
  %v2797 = vrcp.pop %v2783
  %v2798 = vmul.f32 1.0, %v2797
  %v2799 = vrcp.pop %v2784
  %v2800 = vmul.f32 1.0, %v2799
  %v2801 = vadd.f32 %v2652, %v63
  %v2803 = vrot.slane %v2801, 2
  %v2804 = vrot.slane %v2801, 3
  %v2805 = vrot.slane %v2801, 4
  %v2806 = vrot.slane %v2801, 5
  %v2807 = vrot.slane %v2801, 6
  %v2808 = vrot.slane %v2801, 7
  %v2809 = vrot.slane %v2801, 1
  %v2818 = vmul.f32 %v2714, %v2803
  %v2819 = vmul.f32 %v2716, %v2804
  %v2820 = vmul.f32 %v2718, %v2805
  %v2821 = vmul.f32 %v2720, %v2806
  %v2822 = vmul.f32 %v2722, %v2807
  %v2823 = vmul.f32 %v2724, %v2808
  %v2824 = vmul.f32 %v2726, %v2801
  %v2825 = vmul.f32 %v2728, %v2809
  %v2826 = vadd.f32 %v2553, %v2818
  %v2827 = vadd.f32 %v2556, %v2819
  %v2828 = vadd.f32 %v2559, %v2820
  %v2829 = vadd.f32 %v2562, %v2821
  %v2830 = vadd.f32 %v2565, %v2822
  %v2831 = vadd.f32 %v2568, %v2823
  %v2832 = vadd.f32 %v2571, %v2824
  %v2833 = vadd.f32 %v2574, %v2825
  %v2834 = vtanh.pop %v2826
  %v2835 = vtanh.pop %v2827
  %v2836 = vtanh.pop %v2828
  %v2837 = vtanh.pop %v2829
  %v2838 = vtanh.pop %v2830
  %v2839 = vtanh.pop %v2831
  %v2840 = vtanh.pop %v2832
  %v2841 = vtanh.pop %v2833
  %v2842 = vsub.f32 1.0, %v2786
  %v2843 = vsub.f32 1.0, %v2788
  %v2844 = vsub.f32 1.0, %v2790
  %v2845 = vsub.f32 1.0, %v2792
  %v2846 = vsub.f32 1.0, %v2794
  %v2847 = vsub.f32 1.0, %v2796
  %v2848 = vsub.f32 1.0, %v2798
  %v2849 = vsub.f32 1.0, %v2800
  %v2850 = vmul.f32 %v2842, %v2834
  %v2851 = vmul.f32 %v2843, %v2835
  %v2852 = vmul.f32 %v2844, %v2836
  %v2853 = vmul.f32 %v2845, %v2837
  %v2854 = vmul.f32 %v2846, %v2838
  %v2855 = vmul.f32 %v2847, %v2839
  %v2856 = vmul.f32 %v2848, %v2840
  %v2857 = vmul.f32 %v2849, %v2841
  %v2859 = vrot.slane %v2534, 2
  %v2860 = vrot.slane %v2534, 3
  %v2861 = vrot.slane %v2534, 4
  %v2862 = vrot.slane %v2534, 5
  %v2863 = vrot.slane %v2534, 6
  %v2864 = vrot.slane %v2534, 7
  %v2865 = vrot.slane %v2534, 1
  %v2874 = vmul.f32 %v2786, %v2859
  %v2875 = vmul.f32 %v2788, %v2860
  %v2876 = vmul.f32 %v2790, %v2861
  %v2877 = vmul.f32 %v2792, %v2862
  %v2878 = vmul.f32 %v2794, %v2863
  %v2879 = vmul.f32 %v2796, %v2864
  %v2880 = vmul.f32 %v2798, %v2534
  %v2881 = vmul.f32 %v2800, %v2865
  %v2882 = vadd.f32 %v2850, %v2874
  %v2883 = vadd.f32 %v2851, %v2875
  %v2884 = vadd.f32 %v2852, %v2876
  %v2885 = vadd.f32 %v2853, %v2877
  %v2886 = vadd.f32 %v2854, %v2878
  %v2887 = vadd.f32 %v2855, %v2879
  %v2888 = vadd.f32 %v2856, %v2880
  %v2889 = vadd.f32 %v2857, %v2881
  %s2890 = sadd.s32 %s549, 6
  %v2891 = vstv %s2890
  %vm2892 = vcmp.lt.s32.totalorder %v2891, %v25
  %v2893 = vsel %vm2892, 1, 0
  %2894 = vset.pattern.permute.xlu0 0
  %2895 = vperm.xlu0 %2894, %v2893
  %v2896 = vpop.permute.xlu0 %2895
  %vm2897 = vcmp.eq.s32.totalorder %v2896, 1
  %v2906 = vrot.slane %v2882, 6
  %v2907 = vrot.slane %v2883, 5
  %v2908 = vsel %vm566, %v2907, %v2906
  %v2909 = vrot.slane %v2884, 4
  %v2910 = vsel %vm569, %v2909, %v2908
  %v2911 = vrot.slane %v2885, 3
  %v2912 = vsel %vm572, %v2911, %v2910
  %v2913 = vrot.slane %v2886, 2
  %v2914 = vsel %vm575, %v2913, %v2912
  %v2915 = vrot.slane %v2887, 1
  %v2916 = vsel %vm578, %v2915, %v2914
  %v2917 = vsel %vm581, %v2888, %v2916
  %v2918 = vrot.slane %v2889, 7
  %v2919 = vsel %vm584, %v2918, %v2917
  %v2921 = vsel %vm2897, %v2919, 0.0
  %2922 = vst [vmem:[%s4 + $0x30] sm:$0xff] %v2921
  %v2923 = vsel %vm2897, %v2919, %v2534
  %v2924 = vld [vmem:[%s0] sm:$0x88]
  %v2925 = vld [vmem:[%s0 + $0x8] sm:$0x8]
  %v2926 = vld [vmem:[%s0 + $0xc] sm:$0x88]
  %v2927 = vld [vmem:[%s0 + $0x14] sm:$0x8]
  %v2928 = vld [vmem:[%s0 + $0x18] sm:$0x88]
  %v2929 = vld [vmem:[%s0 + $0x20] sm:$0x8]
  %v2930 = vld [vmem:[%s0 + $0x24] sm:$0x88]
  %v2931 = vld [vmem:[%s0 + $0x2c] sm:$0x8]
  %v2932 = vld [vmem:[%s0 + $0x30] sm:$0x88]
  %v2933 = vld [vmem:[%s0 + $0x38] sm:$0x8]
  %v2934 = vld [vmem:[%s0 + $0x3c] sm:$0x88]
  %v2935 = vld [vmem:[%s0 + $0x44] sm:$0x8]
  %v2936 = vld [vmem:[%s0 + $0x48] sm:$0x88]
  %v2937 = vld [vmem:[%s0 + $0x50] sm:$0x8]
  %v2938 = vld [vmem:[%s0 + $0x54] sm:$0x88]
  %v2939 = vld [vmem:[%s0 + $0x5c] sm:$0x8]
  %v2940 = vunpack.c.l.bf16 %v2924
  %v2941 = vunpack.c.h.bf16 %v2924
  %v2942 = vunpack.c.l.bf16 %v2925
  %v2943 = vunpack.c.l.bf16 %v2926
  %v2944 = vunpack.c.h.bf16 %v2926
  %v2945 = vunpack.c.l.bf16 %v2927
  %v2946 = vunpack.c.l.bf16 %v2928
  %v2947 = vunpack.c.h.bf16 %v2928
  %v2948 = vunpack.c.l.bf16 %v2929
  %v2949 = vunpack.c.l.bf16 %v2930
  %v2950 = vunpack.c.h.bf16 %v2930
  %v2951 = vunpack.c.l.bf16 %v2931
  %v2952 = vunpack.c.l.bf16 %v2932
  %v2953 = vunpack.c.h.bf16 %v2932
  %v2954 = vunpack.c.l.bf16 %v2933
  %v2955 = vunpack.c.l.bf16 %v2934
  %v2956 = vunpack.c.h.bf16 %v2934
  %v2957 = vunpack.c.l.bf16 %v2935
  %v2958 = vunpack.c.l.bf16 %v2936
  %v2959 = vunpack.c.h.bf16 %v2936
  %v2960 = vunpack.c.l.bf16 %v2937
  %v2961 = vunpack.c.l.bf16 %v2938
  %v2962 = vunpack.c.h.bf16 %v2938
  %v2963 = vunpack.c.l.bf16 %v2939
  %v2964 = vpack.c.bf16 %v2923, %v2923
  %2965 = vmatprep.subr.bf16.mxu0 %v188
  %2966 = vmatpush1.bf16.msra.mxu0 %v187
  %2967 = vmatprep.subr.bf16.mxu0 %v191
  %2968 = vmatpush1.bf16.msra.mxu0 %v190
  %2969 = vmatprep.subr.bf16.mxu0 %v194
  %2970 = vmatpush1.bf16.msra.mxu0 %v193
  %2971 = vmatprep.subr.bf16.mxu0 %v197
  %2972 = vmatpush1.bf16.msra.mxu0 %v196
  %2973 = vmatprep.subr.bf16.mxu0 %v200
  %2974 = vmatpush1.bf16.msra.mxu0 %v199
  %2975 = vmatprep.subr.bf16.mxu0 %v203
  %2976 = vmatpush1.bf16.msra.mxu0 %v202
  %2977 = vmatprep.subr.bf16.mxu0 %v206
  %2978 = vmatpush1.bf16.msra.mxu0 %v205
  %2979 = vmatprep.subr.bf16.mxu0 %v209
  %2980 = vmatpush1.bf16.msra.mxu0 %v208
  %2981 = vmatprep.subr.bf16.mxu0 0
  %2982 = vmatpush1.bf16.msra.mxu0 0
  %2983 = vmatprep.subr.bf16.mxu0 0
  %2984 = vmatpush1.bf16.msra.mxu0 0
  %2985 = vmatprep.subr.bf16.mxu0 0
  %2986 = vmatpush1.bf16.msra.mxu0 0
  %2987 = vmatprep.subr.bf16.mxu0 0
  %2988 = vmatpush1.bf16.msra.mxu0 0
  %2989 = vmatprep.subr.bf16.mxu0 0
  %2990 = vmatpush1.bf16.msra.mxu0 0
  %2991 = vmatprep.subr.bf16.mxu0 0
  %2992 = vmatpush1.bf16.msra.mxu0 0
  %2993 = vmatprep.subr.bf16.mxu0 0
  %2994 = vmatpush1.bf16.msra.mxu0 0
  %2995 = vmatprep.subr.bf16.mxu0 0
  %2996 = vmatpush1.bf16.msra.mxu0 0
  %2997 = vmatprep.mubr.bf16.mxu0 0
  %2998 = vmatmul.mubr.bf16.gmra.mrb[0].mxu0 %v2964
  %v2999 = vpop.f32.mrb[0].mxu0
  %v3000 = vadd.f32 0.0, %v2999
  %v3001 = vpop.f32.mrb[0].mxu0
  %v3002 = vadd.f32 0.0, %v3001
  %v3003 = vpop.f32.mrb[0].mxu0
  %v3004 = vpop.f32.mrb[0].mxu0
  %3005 = vdwg.mxu0
  %3006 = vmatprep.subr.bf16.mxu0 0
  %3007 = vmatpush1.bf16.msra.mxu0 %v189
  %3008 = vmatprep.subr.bf16.mxu0 0
  %3009 = vmatpush1.bf16.msra.mxu0 %v192
  %3010 = vmatprep.subr.bf16.mxu0 0
  %3011 = vmatpush1.bf16.msra.mxu0 %v195
  %3012 = vmatprep.subr.bf16.mxu0 0
  %3013 = vmatpush1.bf16.msra.mxu0 %v198
  %3014 = vmatprep.subr.bf16.mxu0 0
  %3015 = vmatpush1.bf16.msra.mxu0 %v201
  %3016 = vmatprep.subr.bf16.mxu0 0
  %3017 = vmatpush1.bf16.msra.mxu0 %v204
  %3018 = vmatprep.subr.bf16.mxu0 0
  %3019 = vmatpush1.bf16.msra.mxu0 %v207
  %3020 = vmatprep.subr.bf16.mxu0 0
  %3021 = vmatpush1.bf16.msra.mxu0 %v210
  %3022 = vmatprep.subr.bf16.mxu0 0
  %3023 = vmatpush1.bf16.msra.mxu0 0
  %3024 = vmatprep.subr.bf16.mxu0 0
  %3025 = vmatpush1.bf16.msra.mxu0 0
  %3026 = vmatprep.subr.bf16.mxu0 0
  %3027 = vmatpush1.bf16.msra.mxu0 0
  %3028 = vmatprep.subr.bf16.mxu0 0
  %3029 = vmatpush1.bf16.msra.mxu0 0
  %3030 = vmatprep.subr.bf16.mxu0 0
  %3031 = vmatpush1.bf16.msra.mxu0 0
  %3032 = vmatprep.subr.bf16.mxu0 0
  %3033 = vmatpush1.bf16.msra.mxu0 0
  %3034 = vmatprep.subr.bf16.mxu0 0
  %3035 = vmatpush1.bf16.msra.mxu0 0
  %3036 = vmatprep.subr.bf16.mxu0 0
  %3037 = vmatpush1.bf16.msra.mxu0 0
  %3038 = vmatprep.mubr.bf16.mxu0 0
  %3039 = vmatmul.mubr.bf16.gmra.mrb[0].mxu0 %v2964
  %v3040 = vpop.f32.mrb[0].mxu0
  %v3041 = vadd.f32 0.0, %v3040
  %v3042 = vpop.f32.mrb[0].mxu0
  %v3043 = vpop.f32.mrb[0].mxu0
  %v3044 = vpop.f32.mrb[0].mxu0
  %3045 = vdwg.mxu0
  %v3047 = vrot.slane %v3000, 1
  %v3048 = vrot.slane %v3000, 2
  %v3049 = vrot.slane %v3000, 3
  %v3050 = vrot.slane %v3000, 4
  %v3051 = vrot.slane %v3000, 5
  %v3052 = vrot.slane %v3000, 6
  %v3053 = vrot.slane %v3000, 7
  %v3062 = vadd.f32 %v2940, %v3047
  %v3063 = vadd.f32 %v2943, %v3048
  %v3064 = vadd.f32 %v2946, %v3049
  %v3065 = vadd.f32 %v2949, %v3050
  %v3066 = vadd.f32 %v2952, %v3051
  %v3067 = vadd.f32 %v2955, %v3052
  %v3068 = vadd.f32 %v2958, %v3053
  %v3069 = vadd.f32 %v2961, %v3000
  %v3070 = vxor.u32 %v3062, 2147483648
  %v3071 = vxor.u32 %v3063, 2147483648
  %v3072 = vxor.u32 %v3064, 2147483648
  %v3073 = vxor.u32 %v3065, 2147483648
  %v3074 = vxor.u32 %v3066, 2147483648
  %v3075 = vxor.u32 %v3067, 2147483648
  %v3076 = vxor.u32 %v3068, 2147483648
  %v3077 = vxor.u32 %v3069, 2147483648
  %v3078 = vmul.f32 %v3070, 1.442695
  %v3079 = vpow.pop %v3078
  %v3080 = vmul.f32 %v3071, 1.442695
  %v3081 = vpow.pop %v3080
  %v3082 = vmul.f32 %v3072, 1.442695
  %v3083 = vpow.pop %v3082
  %v3084 = vmul.f32 %v3073, 1.442695
  %v3085 = vpow.pop %v3084
  %v3086 = vmul.f32 %v3074, 1.442695
  %v3087 = vpow.pop %v3086
  %v3088 = vmul.f32 %v3075, 1.442695
  %v3089 = vpow.pop %v3088
  %v3090 = vmul.f32 %v3076, 1.442695
  %v3091 = vpow.pop %v3090
  %v3092 = vmul.f32 %v3077, 1.442695
  %v3093 = vpow.pop %v3092
  %v3094 = vadd.f32 %v3079, 1.0
  %v3095 = vadd.f32 %v3081, 1.0
  %v3096 = vadd.f32 %v3083, 1.0
  %v3097 = vadd.f32 %v3085, 1.0
  %v3098 = vadd.f32 %v3087, 1.0
  %v3099 = vadd.f32 %v3089, 1.0
  %v3100 = vadd.f32 %v3091, 1.0
  %v3101 = vadd.f32 %v3093, 1.0
  %v3102 = vrcp.pop %v3094
  %v3103 = vmul.f32 1.0, %v3102
  %v3104 = vrcp.pop %v3095
  %v3105 = vmul.f32 1.0, %v3104
  %v3106 = vrcp.pop %v3096
  %v3107 = vmul.f32 1.0, %v3106
  %v3108 = vrcp.pop %v3097
  %v3109 = vmul.f32 1.0, %v3108
  %v3110 = vrcp.pop %v3098
  %v3111 = vmul.f32 1.0, %v3110
  %v3112 = vrcp.pop %v3099
  %v3113 = vmul.f32 1.0, %v3112
  %v3114 = vrcp.pop %v3100
  %v3115 = vmul.f32 1.0, %v3114
  %v3116 = vrcp.pop %v3101
  %v3117 = vmul.f32 1.0, %v3116
  %v3119 = vrot.slane %v3002, 1
  %v3120 = vrot.slane %v3002, 2
  %v3121 = vrot.slane %v3002, 3
  %v3122 = vrot.slane %v3002, 4
  %v3123 = vrot.slane %v3002, 5
  %v3124 = vrot.slane %v3002, 6
  %v3125 = vrot.slane %v3002, 7
  %v3134 = vadd.f32 %v2941, %v3119
  %v3135 = vadd.f32 %v2944, %v3120
  %v3136 = vadd.f32 %v2947, %v3121
  %v3137 = vadd.f32 %v2950, %v3122
  %v3138 = vadd.f32 %v2953, %v3123
  %v3139 = vadd.f32 %v2956, %v3124
  %v3140 = vadd.f32 %v2959, %v3125
  %v3141 = vadd.f32 %v2962, %v3002
  %v3142 = vxor.u32 %v3134, 2147483648
  %v3143 = vxor.u32 %v3135, 2147483648
  %v3144 = vxor.u32 %v3136, 2147483648
  %v3145 = vxor.u32 %v3137, 2147483648
  %v3146 = vxor.u32 %v3138, 2147483648
  %v3147 = vxor.u32 %v3139, 2147483648
  %v3148 = vxor.u32 %v3140, 2147483648
  %v3149 = vxor.u32 %v3141, 2147483648
  %v3150 = vmul.f32 %v3142, 1.442695
  %v3151 = vpow.pop %v3150
  %v3152 = vmul.f32 %v3143, 1.442695
  %v3153 = vpow.pop %v3152
  %v3154 = vmul.f32 %v3144, 1.442695
  %v3155 = vpow.pop %v3154
  %v3156 = vmul.f32 %v3145, 1.442695
  %v3157 = vpow.pop %v3156
  %v3158 = vmul.f32 %v3146, 1.442695
  %v3159 = vpow.pop %v3158
  %v3160 = vmul.f32 %v3147, 1.442695
  %v3161 = vpow.pop %v3160
  %v3162 = vmul.f32 %v3148, 1.442695
  %v3163 = vpow.pop %v3162
  %v3164 = vmul.f32 %v3149, 1.442695
  %v3165 = vpow.pop %v3164
  %v3166 = vadd.f32 %v3151, 1.0
  %v3167 = vadd.f32 %v3153, 1.0
  %v3168 = vadd.f32 %v3155, 1.0
  %v3169 = vadd.f32 %v3157, 1.0
  %v3170 = vadd.f32 %v3159, 1.0
  %v3171 = vadd.f32 %v3161, 1.0
  %v3172 = vadd.f32 %v3163, 1.0
  %v3173 = vadd.f32 %v3165, 1.0
  %v3174 = vrcp.pop %v3166
  %v3175 = vmul.f32 1.0, %v3174
  %v3176 = vrcp.pop %v3167
  %v3177 = vmul.f32 1.0, %v3176
  %v3178 = vrcp.pop %v3168
  %v3179 = vmul.f32 1.0, %v3178
  %v3180 = vrcp.pop %v3169
  %v3181 = vmul.f32 1.0, %v3180
  %v3182 = vrcp.pop %v3170
  %v3183 = vmul.f32 1.0, %v3182
  %v3184 = vrcp.pop %v3171
  %v3185 = vmul.f32 1.0, %v3184
  %v3186 = vrcp.pop %v3172
  %v3187 = vmul.f32 1.0, %v3186
  %v3188 = vrcp.pop %v3173
  %v3189 = vmul.f32 1.0, %v3188
  %v3190 = vadd.f32 %v3041, %v63
  %v3192 = vrot.slane %v3190, 1
  %v3193 = vrot.slane %v3190, 2
  %v3194 = vrot.slane %v3190, 3
  %v3195 = vrot.slane %v3190, 4
  %v3196 = vrot.slane %v3190, 5
  %v3197 = vrot.slane %v3190, 6
  %v3198 = vrot.slane %v3190, 7
  %v3207 = vmul.f32 %v3103, %v3192
  %v3208 = vmul.f32 %v3105, %v3193
  %v3209 = vmul.f32 %v3107, %v3194
  %v3210 = vmul.f32 %v3109, %v3195
  %v3211 = vmul.f32 %v3111, %v3196
  %v3212 = vmul.f32 %v3113, %v3197
  %v3213 = vmul.f32 %v3115, %v3198
  %v3214 = vmul.f32 %v3117, %v3190
  %v3215 = vadd.f32 %v2942, %v3207
  %v3216 = vadd.f32 %v2945, %v3208
  %v3217 = vadd.f32 %v2948, %v3209
  %v3218 = vadd.f32 %v2951, %v3210
  %v3219 = vadd.f32 %v2954, %v3211
  %v3220 = vadd.f32 %v2957, %v3212
  %v3221 = vadd.f32 %v2960, %v3213
  %v3222 = vadd.f32 %v2963, %v3214
  %v3223 = vtanh.pop %v3215
  %v3224 = vtanh.pop %v3216
  %v3225 = vtanh.pop %v3217
  %v3226 = vtanh.pop %v3218
  %v3227 = vtanh.pop %v3219
  %v3228 = vtanh.pop %v3220
  %v3229 = vtanh.pop %v3221
  %v3230 = vtanh.pop %v3222
  %v3231 = vsub.f32 1.0, %v3175
  %v3232 = vsub.f32 1.0, %v3177
  %v3233 = vsub.f32 1.0, %v3179
  %v3234 = vsub.f32 1.0, %v3181
  %v3235 = vsub.f32 1.0, %v3183
  %v3236 = vsub.f32 1.0, %v3185
  %v3237 = vsub.f32 1.0, %v3187
  %v3238 = vsub.f32 1.0, %v3189
  %v3239 = vmul.f32 %v3231, %v3223
  %v3240 = vmul.f32 %v3232, %v3224
  %v3241 = vmul.f32 %v3233, %v3225
  %v3242 = vmul.f32 %v3234, %v3226
  %v3243 = vmul.f32 %v3235, %v3227
  %v3244 = vmul.f32 %v3236, %v3228
  %v3245 = vmul.f32 %v3237, %v3229
  %v3246 = vmul.f32 %v3238, %v3230
  %v3248 = vrot.slane %v2923, 1
  %v3249 = vrot.slane %v2923, 2
  %v3250 = vrot.slane %v2923, 3
  %v3251 = vrot.slane %v2923, 4
  %v3252 = vrot.slane %v2923, 5
  %v3253 = vrot.slane %v2923, 6
  %v3254 = vrot.slane %v2923, 7
  %v3263 = vmul.f32 %v3175, %v3248
  %v3264 = vmul.f32 %v3177, %v3249
  %v3265 = vmul.f32 %v3179, %v3250
  %v3266 = vmul.f32 %v3181, %v3251
  %v3267 = vmul.f32 %v3183, %v3252
  %v3268 = vmul.f32 %v3185, %v3253
  %v3269 = vmul.f32 %v3187, %v3254
  %v3270 = vmul.f32 %v3189, %v2923
  %v3271 = vadd.f32 %v3239, %v3263
  %v3272 = vadd.f32 %v3240, %v3264
  %v3273 = vadd.f32 %v3241, %v3265
  %v3274 = vadd.f32 %v3242, %v3266
  %v3275 = vadd.f32 %v3243, %v3267
  %v3276 = vadd.f32 %v3244, %v3268
  %v3277 = vadd.f32 %v3245, %v3269
  %v3278 = vadd.f32 %v3246, %v3270
  %s3279 = sadd.s32 %s549, 7
  %v3280 = vstv %s3279
  %vm3281 = vcmp.lt.s32.totalorder %v3280, %v25
  %v3282 = vsel %vm3281, 1, 0
  %3283 = vset.pattern.permute.xlu0 0
  %3284 = vperm.xlu0 %3283, %v3282
  %v3285 = vpop.permute.xlu0 %3284
  %vm3286 = vcmp.eq.s32.totalorder %v3285, 1
  %v3295 = vrot.slane %v3271, 7
  %v3296 = vrot.slane %v3272, 6
  %v3297 = vsel %vm566, %v3296, %v3295
  %v3298 = vrot.slane %v3273, 5
  %v3299 = vsel %vm569, %v3298, %v3297
  %v3300 = vrot.slane %v3274, 4
  %v3301 = vsel %vm572, %v3300, %v3299
  %v3302 = vrot.slane %v3275, 3
  %v3303 = vsel %vm575, %v3302, %v3301
  %v3304 = vrot.slane %v3276, 2
  %v3305 = vsel %vm578, %v3304, %v3303
  %v3306 = vrot.slane %v3277, 1
  %v3307 = vsel %vm581, %v3306, %v3305
  %v3308 = vsel %vm584, %v3278, %v3307
  %v3310 = vsel %vm3286, %v3308, 0.0
  %3311 = vst [vmem:[%s4 + $0x38] sm:$0xff] %v3310
  %v3312 = vsel %vm3286, %v3308, %v2923
  %3313 = vst [vmem:[#allocation2] sm:$0xff] %v3312
  // Predicated region
  $region22: #{kb_encoder_forward.1} parent=0 // pred_check
    %p3314 = pneg %p20
  $region23: #{kb_encoder_forward.1} parent=0 // pred_check_branch
    %3316 = sbr.rel (%p3314) target = $region25
  $region24: #{kb_encoder_forward.1} parent=0 // pred_region
    %3317 = vst [vmem:[%s5] sm:$0xff] %v3312
  $region25: #{kb_encoder_forward.1} parent=0 // pred_fallthru
    _
  // Predicated region
  $region26: #{kb_encoder_forward.1} parent=0 // pred_check
    _
  $region27: #{kb_encoder_forward.1} parent=0 // pred_check_branch
    %3319 = sbr.rel (0) target = $region29
  $region28: #{kb_encoder_forward.1} parent=0 // pred_region
    _
  $region29: #{kb_encoder_forward.1} parent=0 // pred_fallthru
    _
  // Predicated region
  $region30: #{kb_encoder_forward.1} parent=0 // pred_check
    _
  $region31: #{kb_encoder_forward.1} parent=0 // pred_check_branch
    %3321 = sbr.rel (0) target = $region33
  $region32: #{kb_encoder_forward.1} parent=0 // pred_region
    _
  $region33: #{kb_encoder_forward.1} parent=0 // pred_fallthru
    _
  // Predicated region
  $region34: #{kb_encoder_forward.1} parent=0 // pred_check
    _
  $region35: #{kb_encoder_forward.1} parent=0 // pred_check_branch
    %3323 = sbr.rel (0) target = $region37
  $region36: #{kb_encoder_forward.1} parent=0 // pred_region
    _
  $region37: #{kb_encoder_forward.1} parent=0 // pred_fallthru
    _
  // Predicated region
  $region38: #{kb_encoder_forward.1} parent=0 // pred_check
    _
  $region39: #{kb_encoder_forward.1} parent=0 // pred_check_branch
    %3325 = sbr.rel (0) target = $region41
  $region40: #{kb_encoder_forward.1} parent=0 // pred_region
    _
  $region41: #{kb_encoder_forward.1} parent=0 // pred_fallthru
    _

</llo_original>
